<compile_context>
chip_gen: v7x
topology: tpu7x:2x2x1
jax: 0.10.0
libtpu: 0.0.40
codegen_flags: <defaults>
</compile_context>

<pallas_src>
import math

import jax
import jax.numpy as jnp
from jax import lax
from jax.experimental import pallas as pl
from jax.experimental.pallas import tpu as pltpu


# ----------------------------- model config ---------------------------------
B = 2          # batch size
S = 8          # sequence length
D = 32         # ninp (embedding size)
H = 2          # nhead
DH = D // H    # head dim
F = 64         # nhid (FFN hidden size)
L = 2          # nlayers
V = 50         # len(vocab.discharge)
C = 6          # len(vocab.icd)  (num_output_classes)
CPAD = 128     # lane-dense padded logits width
PAD = 0        # vocab.discharge.pad_token
LN_EPS = 1e-5
BS = B * S


def _layer_norm(x, g, b, eps=LN_EPS):
    mu = jnp.mean(x, axis=-1, keepdims=True)
    xc = x - mu
    var = jnp.mean(xc * xc, axis=-1, keepdims=True)
    return xc * lax.rsqrt(var + eps) * g + b


# ------------------------------ Pallas kernel --------------------------------
def _transformer_kernel(x_ref, pe_ref, bias_ref,
                        wqkv_ref,   # (L, 3, H, D+1, DH): rows 0:D weight, row D bias
                        wo_ref,     # (L, H, DH, D)
                        w1_ref,     # (L, D+1, F): rows 0:D w1, row D bf1
                        w2v_ref,    # (L, F+6, D): rows 0:F w2, then bo,bf2,g1,be1,g2,be2
                        hslab_ref,  # (D+3, D): wpre, gf, bef, bpre
                        cls_ref,    # (D+1, CPAD): wcls (padded), bcls (padded)
                        out_ref):   # (B, CPAD)
    emb_scale = math.sqrt(D)
    inv_sqrt_dh = 1.0 / math.sqrt(DH)

    # src = encoder(src) * sqrt(ninp); src = pos_encoder(src)   (dropout = id)
    x = x_ref[...] * emb_scale + pe_ref[...]          # (BS, D)

    # key-padding + cross-batch mask as an additive bias, hoisted out of the loops
    bias = bias_ref[...]                              # (BS, BS)

    for l in range(L):
        w2v = w2v_ref[l]                              # (F+6, D)
        w2 = w2v[0:F]
        bo = w2v[F:F + 1]
        bf2 = w2v[F + 1:F + 2]
        g1 = w2v[F + 2:F + 3]
        be1 = w2v[F + 3:F + 4]
        g2 = w2v[F + 4:F + 5]
        be2 = w2v[F + 5:F + 6]

        w1a = w1_ref[l]                               # (D+1, F)
        w1 = w1a[0:D]
        bf1 = w1a[D:D + 1]

        # --- multi-head self attention over all B*S rows at once (post-norm) ---
        head_outs = []
        for h in range(H):
            wq_a = wqkv_ref[l, 0, h]                  # (D+1, DH)
            wk_a = wqkv_ref[l, 1, h]
            wv_a = wqkv_ref[l, 2, h]
            q = jnp.dot(x, wq_a[0:D], preferred_element_type=jnp.float32) + wq_a[D:D + 1]
            k = jnp.dot(x, wk_a[0:D], preferred_element_type=jnp.float32) + wk_a[D:D + 1]
            v = jnp.dot(x, wv_a[0:D], preferred_element_type=jnp.float32) + wv_a[D:D + 1]

            s = lax.dot_general(q, k, (((1,), (1,)), ((), ())),
                                preferred_element_type=jnp.float32)      # (BS, BS)
            s = s * inv_sqrt_dh + bias
            s = s - jnp.max(s, axis=-1, keepdims=True)
            p = jnp.exp(s)
            p = p * pl.reciprocal(jnp.sum(p, axis=-1, keepdims=True), approx=True)

            ctx = jnp.dot(p, v, preferred_element_type=jnp.float32)      # (BS, DH)
            # fold the head concat into the output projection (per-head row slab of wo)
            head_outs.append(jnp.dot(ctx, wo_ref[l, h],
                                     preferred_element_type=jnp.float32))

        attn = head_outs[0]
        for t in head_outs[1:]:
            attn = attn + t
        attn = attn + bo

        x = _layer_norm(x + attn, g1, be1)

        # --- feed-forward ---
        ff = jnp.dot(x, w1, preferred_element_type=jnp.float32) + bf1
        ff = jnp.maximum(ff, 0.0)
        ff = jnp.dot(ff, w2, preferred_element_type=jnp.float32) + bf2
        x = _layer_norm(x + ff, g2, be2)

    # --- pooling + final encoder LayerNorm + classifier head (B rows only) ---
    hs = hslab_ref[...]                               # (D+3, D)
    wpre = hs[0:D]
    gf = hs[D:D + 1]
    bef = hs[D + 1:D + 2]
    bpre = hs[D + 2:D + 3]
    cls = cls_ref[...]                                # (D+1, CPAD)
    wcls = cls[0:D]
    bcls = cls[D:D + 1]

    # hidden_state[0, :, :] in the (S, B, D) PyTorch layout == row b*S of our (BS, D)
    pooled = jnp.concatenate([x[b * S:b * S + 1, :] for b in range(B)], axis=0)  # (B, D)
    pooled = _layer_norm(pooled, gf, bef)             # LN is per-row: pool-then-LN ok

    pre = jnp.dot(pooled, wpre, preferred_element_type=jnp.float32) + bpre
    pre = jnp.maximum(pre, 0.0)                       # ReLU (dropout = id)
    out_ref[...] = jnp.dot(pre, wcls, preferred_element_type=jnp.float32) + bcls  # (B, CPAD)


# ------------------------------ parameters -----------------------------------
def init_params(key):
    ks = jax.random.split(key, 16)

    def n(k, shape, s=0.1):
        return s * jax.random.normal(k, shape, jnp.float32)

    p = {}
    # nn.Embedding init_weights: uniform(-0.1, 0.1)
    p["emb"] = jax.random.uniform(ks[0], (V, D), jnp.float32, -0.1, 0.1)
    # per-layer transformer weights (stored pre-transposed: y = x @ W + b)
    p["wq"] = n(ks[1], (L, D, D)); p["bq"] = n(ks[2], (L, D), 0.02)
    p["wk"] = n(ks[3], (L, D, D)); p["bk"] = n(ks[4], (L, D), 0.02)
    p["wv"] = n(ks[5], (L, D, D)); p["bv"] = n(ks[6], (L, D), 0.02)
    p["wo"] = n(ks[7], (L, D, D)); p["bo"] = n(ks[8], (L, D), 0.02)
    p["g1"] = jnp.ones((L, D), jnp.float32); p["be1"] = jnp.zeros((L, D), jnp.float32)
    p["w1"] = n(ks[9], (L, D, F)); p["bf1"] = n(ks[10], (L, F), 0.02)
    p["w2"] = n(ks[11], (L, F, D)); p["bf2"] = n(ks[12], (L, D), 0.02)
    p["g2"] = jnp.ones((L, D), jnp.float32); p["be2"] = jnp.zeros((L, D), jnp.float32)
    # final encoder norm
    p["gf"] = jnp.ones((D,), jnp.float32); p["bef"] = jnp.zeros((D,), jnp.float32)
    # heads
    p["wpre"] = n(ks[13], (D, D)); p["bpre"] = n(ks[14], (D,), 0.02)
    p["wcls"] = n(ks[15], (D, C)); p["bcls"] = jnp.zeros((C,), jnp.float32)
    return p


def pack_params(p):
    """Pack the many tiny parameter tensors into a few kernel operands."""
    def heads_cols(w):   # (L, D, D) -> (L, H, D, DH): per-head column slabs
        return w.reshape(L, D, H, DH).transpose(0, 2, 1, 3)

    def heads_bias(b):   # (L, D) -> (L, H, 1, DH)
        return b.reshape(L, H, DH)[:, :, None, :]

    wqkv = jnp.stack(
        [jnp.concatenate([heads_cols(p[w]), heads_bias(p[b])], axis=2)
         for w, b in (("wq", "bq"), ("wk", "bk"), ("wv", "bv"))],
        axis=1)                                                    # (L, 3, H, D+1, DH)

    wo = p["wo"].reshape(L, H, DH, D)                              # per-head row slabs

    w1 = jnp.concatenate([p["w1"], p["bf1"][:, None, :]], axis=1)  # (L, D+1, F)

    w2v = jnp.concatenate(
        [p["w2"]] + [p[k][:, None, :] for k in ("bo", "bf2", "g1", "be1", "g2", "be2")],
        axis=1)                                                    # (L, F+6, D)

    hslab = jnp.concatenate(
        [p["wpre"], p["gf"][None, :], p["bef"][None, :], p["bpre"][None, :]],
        axis=0)                                                    # (D+3, D)

    wcls_pad = jnp.zeros((D, CPAD), jnp.float32).at[:, :C].set(p["wcls"])
    bcls_pad = jnp.zeros((1, CPAD), jnp.float32).at[0, :C].set(p["bcls"])
    cls = jnp.concatenate([wcls_pad, bcls_pad], axis=0)            # (D+1, CPAD)

    return {"emb": p["emb"], "wqkv": wqkv, "wo": wo, "w1": w1,
            "w2v": w2v, "hslab": hslab, "cls": cls}


def sinusoidal_pe(seq_len, d_model):
    pos = jnp.arange(seq_len, dtype=jnp.float32)[:, None]
    div = jnp.exp(jnp.arange(0, d_model, 2, dtype=jnp.float32)
                  * (-math.log(10000.0) / d_model))
    pe = jnp.zeros((seq_len, d_model), jnp.float32)
    pe = pe.at[:, 0::2].set(jnp.sin(pos * div))
    pe = pe.at[:, 1::2].set(jnp.cos(pos * div))
    return pe


# ------------------------------- wrapper --------------------------------------
@jax.jit
def transformer_classifier_forward(src, packed):
    # glue: embedding gather, PE table (tiled over batch), additive attention bias
    emb = jnp.take(packed["emb"], src.reshape(-1), axis=0)         # (BS, D)
    pe = jnp.tile(sinusoidal_pe(S, D), (B, 1))                     # (BS, D)

    key_pad = (src == PAD).reshape(BS)                             # (BS,)
    bid = jnp.repeat(jnp.arange(B, dtype=jnp.int32), S)            # (BS,)
    valid = (bid[:, None] == bid[None, :]) & (~key_pad)[None, :]
    attn_bias = jnp.where(valid, 0.0, -1e30).astype(jnp.float32)   # (BS, BS)

    logits_pad = pl.pallas_call(
        _transformer_kernel,
        out_shape=jax.ShapeDtypeStruct((B, CPAD), jnp.float32),
        in_specs=[pl.BlockSpec(memory_space=pltpu.MemorySpace.VMEM)] * 9,
        out_specs=pl.BlockSpec(memory_space=pltpu.MemorySpace.VMEM),
    )(emb, pe, attn_bias,
      packed["wqkv"], packed["wo"], packed["w1"], packed["w2v"],
      packed["hslab"], packed["cls"])

    return logits_pad[:, :C]                                       # (B, C) logits


# --------------------------------- main ----------------------------------------
if __name__ == "__main__":
    key = jax.random.PRNGKey(0)
    pkey, dkey = jax.random.split(key)

    params = init_params(pkey)
    packed = pack_params(params)

    # deterministic token ids; a couple of trailing PAD positions exercise the mask
    src = jax.random.randint(dkey, (B, S), 1, V, dtype=jnp.int32)
    src = src.at[0, -2:].set(PAD)
    src = src.at[1, -1:].set(PAD)

    logits = transformer_classifier_forward(src, packed)
    logits = jax.block_until_ready(logits)

    assert logits.shape == (B, C)
    assert bool(jnp.all(jnp.isfinite(logits)))
    print("KERNEL_OK")
</pallas_src>

<mosaic_0001>
module attributes {stable_mosaic.version = 11 : i64} {
  func.func @_transformer_kernel(%arg0: memref<16x32xf32, #tpu.memory_space<vmem>>, %arg1: memref<16x32xf32, #tpu.memory_space<vmem>>, %arg2: memref<16x16xf32, #tpu.memory_space<vmem>>, %arg3: memref<2x3x2x33x16xf32, #tpu.memory_space<vmem>>, %arg4: memref<2x2x16x32xf32, #tpu.memory_space<vmem>>, %arg5: memref<2x33x64xf32, #tpu.memory_space<vmem>>, %arg6: memref<2x70x32xf32, #tpu.memory_space<vmem>>, %arg7: memref<35x32xf32, #tpu.memory_space<vmem>>, %arg8: memref<33x128xf32, #tpu.memory_space<vmem>>, %arg9: memref<2x128xf32, #tpu.memory_space<vmem>>) attributes {dimension_semantics = [], scalar_prefetch = 0 : i64, scratch_operands = 0 : i64, tpu.core_type = #tpu.core_type<tc>} {
    %c0 = arith.constant 0 : index
    %c0_0 = arith.constant 0 : index
    %0 = vector.load %arg0[%c0, %c0_0] : memref<16x32xf32, #tpu.memory_space<vmem>>, vector<16x32xf32>
    %cst = arith.constant 5.65685415 : f32
    %1 = vector.broadcast %cst : f32 to vector<16x32xf32>
    %2 = arith.mulf %0, %1 : vector<16x32xf32>
    %c0_1 = arith.constant 0 : index
    %c0_2 = arith.constant 0 : index
    %3 = vector.load %arg1[%c0_1, %c0_2] : memref<16x32xf32, #tpu.memory_space<vmem>>, vector<16x32xf32>
    %4 = arith.addf %2, %3 : vector<16x32xf32>
    %c0_3 = arith.constant 0 : index
    %c0_4 = arith.constant 0 : index
    %5 = vector.load %arg2[%c0_3, %c0_4] : memref<16x16xf32, #tpu.memory_space<vmem>>, vector<16x16xf32>
    %c0_5 = arith.constant 0 : index
    %c0_6 = arith.constant 0 : index
    %c0_7 = arith.constant 0 : index
    %6 = vector.load %arg6[%c0_5, %c0_6, %c0_7] : memref<2x70x32xf32, #tpu.memory_space<vmem>>, vector<1x70x32xf32>
    %7 = vector.shape_cast %6 : vector<1x70x32xf32> to vector<70x32xf32>
    %8 = vector.extract_strided_slice %7 {offsets = [0, 0], sizes = [64, 32], strides = [1, 1]} : vector<70x32xf32> to vector<64x32xf32>
    %9 = vector.extract_strided_slice %7 {offsets = [64, 0], sizes = [1, 32], strides = [1, 1]} : vector<70x32xf32> to vector<1x32xf32>
    %10 = vector.extract_strided_slice %7 {offsets = [65, 0], sizes = [1, 32], strides = [1, 1]} : vector<70x32xf32> to vector<1x32xf32>
    %11 = vector.extract_strided_slice %7 {offsets = [66, 0], sizes = [1, 32], strides = [1, 1]} : vector<70x32xf32> to vector<1x32xf32>
    %12 = vector.extract_strided_slice %7 {offsets = [67, 0], sizes = [1, 32], strides = [1, 1]} : vector<70x32xf32> to vector<1x32xf32>
    %13 = vector.extract_strided_slice %7 {offsets = [68, 0], sizes = [1, 32], strides = [1, 1]} : vector<70x32xf32> to vector<1x32xf32>
    %14 = vector.extract_strided_slice %7 {offsets = [69, 0], sizes = [1, 32], strides = [1, 1]} : vector<70x32xf32> to vector<1x32xf32>
    %c0_8 = arith.constant 0 : index
    %c0_9 = arith.constant 0 : index
    %c0_10 = arith.constant 0 : index
    %15 = vector.load %arg5[%c0_8, %c0_9, %c0_10] : memref<2x33x64xf32, #tpu.memory_space<vmem>>, vector<1x33x64xf32>
    %16 = vector.shape_cast %15 : vector<1x33x64xf32> to vector<33x64xf32>
    %17 = vector.extract_strided_slice %16 {offsets = [0, 0], sizes = [32, 64], strides = [1, 1]} : vector<33x64xf32> to vector<32x64xf32>
    %18 = vector.extract_strided_slice %16 {offsets = [32, 0], sizes = [1, 64], strides = [1, 1]} : vector<33x64xf32> to vector<1x64xf32>
    %c0_11 = arith.constant 0 : index
    %c0_12 = arith.constant 0 : index
    %c0_13 = arith.constant 0 : index
    %c0_14 = arith.constant 0 : index
    %c0_15 = arith.constant 0 : index
    %19 = vector.load %arg3[%c0_11, %c0_12, %c0_13, %c0_14, %c0_15] : memref<2x3x2x33x16xf32, #tpu.memory_space<vmem>>, vector<1x1x1x33x16xf32>
    %20 = vector.shape_cast %19 : vector<1x1x1x33x16xf32> to vector<33x16xf32>
    %c0_16 = arith.constant 0 : index
    %c1 = arith.constant 1 : index
    %c0_17 = arith.constant 0 : index
    %c0_18 = arith.constant 0 : index
    %c0_19 = arith.constant 0 : index
    %21 = vector.load %arg3[%c0_16, %c1, %c0_17, %c0_18, %c0_19] : memref<2x3x2x33x16xf32, #tpu.memory_space<vmem>>, vector<1x1x1x33x16xf32>
    %22 = vector.shape_cast %21 : vector<1x1x1x33x16xf32> to vector<33x16xf32>
    %c0_20 = arith.constant 0 : index
    %c2 = arith.constant 2 : index
    %c0_21 = arith.constant 0 : index
    %c0_22 = arith.constant 0 : index
    %c0_23 = arith.constant 0 : index
    %23 = vector.load %arg3[%c0_20, %c2, %c0_21, %c0_22, %c0_23] : memref<2x3x2x33x16xf32, #tpu.memory_space<vmem>>, vector<1x1x1x33x16xf32>
    %24 = vector.shape_cast %23 : vector<1x1x1x33x16xf32> to vector<33x16xf32>
    %25 = vector.extract_strided_slice %20 {offsets = [0, 0], sizes = [32, 16], strides = [1, 1]} : vector<33x16xf32> to vector<32x16xf32>
    %cst_24 = arith.constant dense<0.000000e+00> : vector<16x16xf32>
    %26 = tpu.matmul %4, %25, %cst_24 {dimension_numbers = #tpu.dot_dimension_numbers<[1], [0], [0], [1], [0, 0, 1, 1], [], []>} : vector<16x32xf32>, vector<32x16xf32>, vector<16x16xf32> -> vector<16x16xf32>
    %27 = vector.extract_strided_slice %20 {offsets = [32, 0], sizes = [1, 16], strides = [1, 1]} : vector<33x16xf32> to vector<1x16xf32>
    %28 = vector.broadcast %27 : vector<1x16xf32> to vector<16x16xf32>
    %29 = arith.addf %26, %28 : vector<16x16xf32>
    %30 = vector.extract_strided_slice %22 {offsets = [0, 0], sizes = [32, 16], strides = [1, 1]} : vector<33x16xf32> to vector<32x16xf32>
    %cst_25 = arith.constant dense<0.000000e+00> : vector<16x16xf32>
    %31 = tpu.matmul %4, %30, %cst_25 {dimension_numbers = #tpu.dot_dimension_numbers<[1], [0], [0], [1], [0, 0, 1, 1], [], []>} : vector<16x32xf32>, vector<32x16xf32>, vector<16x16xf32> -> vector<16x16xf32>
    %32 = vector.extract_strided_slice %22 {offsets = [32, 0], sizes = [1, 16], strides = [1, 1]} : vector<33x16xf32> to vector<1x16xf32>
    %33 = vector.broadcast %32 : vector<1x16xf32> to vector<16x16xf32>
    %34 = arith.addf %31, %33 : vector<16x16xf32>
    %35 = vector.extract_strided_slice %24 {offsets = [0, 0], sizes = [32, 16], strides = [1, 1]} : vector<33x16xf32> to vector<32x16xf32>
    %cst_26 = arith.constant dense<0.000000e+00> : vector<16x16xf32>
    %36 = tpu.matmul %4, %35, %cst_26 {dimension_numbers = #tpu.dot_dimension_numbers<[1], [0], [0], [1], [0, 0, 1, 1], [], []>} : vector<16x32xf32>, vector<32x16xf32>, vector<16x16xf32> -> vector<16x16xf32>
    %37 = vector.extract_strided_slice %24 {offsets = [32, 0], sizes = [1, 16], strides = [1, 1]} : vector<33x16xf32> to vector<1x16xf32>
    %38 = vector.broadcast %37 : vector<1x16xf32> to vector<16x16xf32>
    %39 = arith.addf %36, %38 : vector<16x16xf32>
    %cst_27 = arith.constant dense<0.000000e+00> : vector<16x16xf32>
    %40 = tpu.matmul %29, %34, %cst_27 {dimension_numbers = #tpu.dot_dimension_numbers<[1], [1], [0], [0], [0, 0, 1, 0], [], []>} : vector<16x16xf32>, vector<16x16xf32>, vector<16x16xf32> -> vector<16x16xf32>
    %cst_28 = arith.constant 2.500000e-01 : f32
    %41 = vector.broadcast %cst_28 : f32 to vector<16x16xf32>
    %42 = arith.mulf %40, %41 : vector<16x16xf32>
    %43 = arith.addf %42, %5 : vector<16x16xf32>
    %cst_29 = arith.constant dense<0xFF800000> : vector<16xf32>
    %44 = vector.multi_reduction <maximumf>, %43, %cst_29 [1] : vector<16x16xf32> to vector<16xf32>
    %45 = vector.shape_cast %44 : vector<16xf32> to vector<16x1xf32>
    %46 = vector.broadcast %45 : vector<16x1xf32> to vector<16x16xf32>
    %47 = arith.subf %43, %46 : vector<16x16xf32>
    %48 = math.exp %47 : vector<16x16xf32>
    %cst_30 = arith.constant dense<0.000000e+00> : vector<16xf32>
    %49 = vector.multi_reduction <add>, %48, %cst_30 [1] : vector<16x16xf32> to vector<16xf32>
    %50 = vector.shape_cast %49 : vector<16xf32> to vector<16x1xf32>
    %51 = tpu.reciprocal %50 {approx = true} : vector<16x1xf32> -> vector<16x1xf32>
    %52 = vector.broadcast %51 : vector<16x1xf32> to vector<16x16xf32>
    %53 = arith.mulf %48, %52 : vector<16x16xf32>
    %cst_31 = arith.constant dense<0.000000e+00> : vector<16x16xf32>
    %54 = tpu.matmul %53, %39, %cst_31 {dimension_numbers = #tpu.dot_dimension_numbers<[1], [0], [0], [1], [0, 0, 1, 1], [], []>} : vector<16x16xf32>, vector<16x16xf32>, vector<16x16xf32> -> vector<16x16xf32>
    %c0_32 = arith.constant 0 : index
    %c0_33 = arith.constant 0 : index
    %c0_34 = arith.constant 0 : index
    %c0_35 = arith.constant 0 : index
    %55 = vector.load %arg4[%c0_32, %c0_33, %c0_34, %c0_35] : memref<2x2x16x32xf32, #tpu.memory_space<vmem>>, vector<1x1x16x32xf32>
    %56 = vector.shape_cast %55 : vector<1x1x16x32xf32> to vector<16x32xf32>
    %cst_36 = arith.constant dense<0.000000e+00> : vector<16x32xf32>
    %57 = tpu.matmul %54, %56, %cst_36 {dimension_numbers = #tpu.dot_dimension_numbers<[1], [0], [0], [1], [0, 0, 1, 1], [], []>} : vector<16x16xf32>, vector<16x32xf32>, vector<16x32xf32> -> vector<16x32xf32>
    %c0_37 = arith.constant 0 : index
    %c0_38 = arith.constant 0 : index
    %c1_39 = arith.constant 1 : index
    %c0_40 = arith.constant 0 : index
    %c0_41 = arith.constant 0 : index
    %58 = vector.load %arg3[%c0_37, %c0_38, %c1_39, %c0_40, %c0_41] : memref<2x3x2x33x16xf32, #tpu.memory_space<vmem>>, vector<1x1x1x33x16xf32>
    %59 = vector.shape_cast %58 : vector<1x1x1x33x16xf32> to vector<33x16xf32>
    %c0_42 = arith.constant 0 : index
    %c1_43 = arith.constant 1 : index
    %c1_44 = arith.constant 1 : index
    %c0_45 = arith.constant 0 : index
    %c0_46 = arith.constant 0 : index
    %60 = vector.load %arg3[%c0_42, %c1_43, %c1_44, %c0_45, %c0_46] : memref<2x3x2x33x16xf32, #tpu.memory_space<vmem>>, vector<1x1x1x33x16xf32>
    %61 = vector.shape_cast %60 : vector<1x1x1x33x16xf32> to vector<33x16xf32>
    %c0_47 = arith.constant 0 : index
    %c2_48 = arith.constant 2 : index
    %c1_49 = arith.constant 1 : index
    %c0_50 = arith.constant 0 : index
    %c0_51 = arith.constant 0 : index
    %62 = vector.load %arg3[%c0_47, %c2_48, %c1_49, %c0_50, %c0_51] : memref<2x3x2x33x16xf32, #tpu.memory_space<vmem>>, vector<1x1x1x33x16xf32>
    %63 = vector.shape_cast %62 : vector<1x1x1x33x16xf32> to vector<33x16xf32>
    %64 = vector.extract_strided_slice %59 {offsets = [0, 0], sizes = [32, 16], strides = [1, 1]} : vector<33x16xf32> to vector<32x16xf32>
    %cst_52 = arith.constant dense<0.000000e+00> : vector<16x16xf32>
    %65 = tpu.matmul %4, %64, %cst_52 {dimension_numbers = #tpu.dot_dimension_numbers<[1], [0], [0], [1], [0, 0, 1, 1], [], []>} : vector<16x32xf32>, vector<32x16xf32>, vector<16x16xf32> -> vector<16x16xf32>
    %66 = vector.extract_strided_slice %59 {offsets = [32, 0], sizes = [1, 16], strides = [1, 1]} : vector<33x16xf32> to vector<1x16xf32>
    %67 = vector.broadcast %66 : vector<1x16xf32> to vector<16x16xf32>
    %68 = arith.addf %65, %67 : vector<16x16xf32>
    %69 = vector.extract_strided_slice %61 {offsets = [0, 0], sizes = [32, 16], strides = [1, 1]} : vector<33x16xf32> to vector<32x16xf32>
    %cst_53 = arith.constant dense<0.000000e+00> : vector<16x16xf32>
    %70 = tpu.matmul %4, %69, %cst_53 {dimension_numbers = #tpu.dot_dimension_numbers<[1], [0], [0], [1], [0, 0, 1, 1], [], []>} : vector<16x32xf32>, vector<32x16xf32>, vector<16x16xf32> -> vector<16x16xf32>
    %71 = vector.extract_strided_slice %61 {offsets = [32, 0], sizes = [1, 16], strides = [1, 1]} : vector<33x16xf32> to vector<1x16xf32>
    %72 = vector.broadcast %71 : vector<1x16xf32> to vector<16x16xf32>
    %73 = arith.addf %70, %72 : vector<16x16xf32>
    %74 = vector.extract_strided_slice %63 {offsets = [0, 0], sizes = [32, 16], strides = [1, 1]} : vector<33x16xf32> to vector<32x16xf32>
    %cst_54 = arith.constant dense<0.000000e+00> : vector<16x16xf32>
    %75 = tpu.matmul %4, %74, %cst_54 {dimension_numbers = #tpu.dot_dimension_numbers<[1], [0], [0], [1], [0, 0, 1, 1], [], []>} : vector<16x32xf32>, vector<32x16xf32>, vector<16x16xf32> -> vector<16x16xf32>
    %76 = vector.extract_strided_slice %63 {offsets = [32, 0], sizes = [1, 16], strides = [1, 1]} : vector<33x16xf32> to vector<1x16xf32>
    %77 = vector.broadcast %76 : vector<1x16xf32> to vector<16x16xf32>
    %78 = arith.addf %75, %77 : vector<16x16xf32>
    %cst_55 = arith.constant dense<0.000000e+00> : vector<16x16xf32>
    %79 = tpu.matmul %68, %73, %cst_55 {dimension_numbers = #tpu.dot_dimension_numbers<[1], [1], [0], [0], [0, 0, 1, 0], [], []>} : vector<16x16xf32>, vector<16x16xf32>, vector<16x16xf32> -> vector<16x16xf32>
    %cst_56 = arith.constant 2.500000e-01 : f32
    %80 = vector.broadcast %cst_56 : f32 to vector<16x16xf32>
    %81 = arith.mulf %79, %80 : vector<16x16xf32>
    %82 = arith.addf %81, %5 : vector<16x16xf32>
    %cst_57 = arith.constant dense<0xFF800000> : vector<16xf32>
    %83 = vector.multi_reduction <maximumf>, %82, %cst_57 [1] : vector<16x16xf32> to vector<16xf32>
    %84 = vector.shape_cast %83 : vector<16xf32> to vector<16x1xf32>
    %85 = vector.broadcast %84 : vector<16x1xf32> to vector<16x16xf32>
    %86 = arith.subf %82, %85 : vector<16x16xf32>
    %87 = math.exp %86 : vector<16x16xf32>
    %cst_58 = arith.constant dense<0.000000e+00> : vector<16xf32>
    %88 = vector.multi_reduction <add>, %87, %cst_58 [1] : vector<16x16xf32> to vector<16xf32>
    %89 = vector.shape_cast %88 : vector<16xf32> to vector<16x1xf32>
    %90 = tpu.reciprocal %89 {approx = true} : vector<16x1xf32> -> vector<16x1xf32>
    %91 = vector.broadcast %90 : vector<16x1xf32> to vector<16x16xf32>
    %92 = arith.mulf %87, %91 : vector<16x16xf32>
    %cst_59 = arith.constant dense<0.000000e+00> : vector<16x16xf32>
    %93 = tpu.matmul %92, %78, %cst_59 {dimension_numbers = #tpu.dot_dimension_numbers<[1], [0], [0], [1], [0, 0, 1, 1], [], []>} : vector<16x16xf32>, vector<16x16xf32>, vector<16x16xf32> -> vector<16x16xf32>
    %c0_60 = arith.constant 0 : index
    %c1_61 = arith.constant 1 : index
    %c0_62 = arith.constant 0 : index
    %c0_63 = arith.constant 0 : index
    %94 = vector.load %arg4[%c0_60, %c1_61, %c0_62, %c0_63] : memref<2x2x16x32xf32, #tpu.memory_space<vmem>>, vector<1x1x16x32xf32>
    %95 = vector.shape_cast %94 : vector<1x1x16x32xf32> to vector<16x32xf32>
    %cst_64 = arith.constant dense<0.000000e+00> : vector<16x32xf32>
    %96 = tpu.matmul %93, %95, %cst_64 {dimension_numbers = #tpu.dot_dimension_numbers<[1], [0], [0], [1], [0, 0, 1, 1], [], []>} : vector<16x16xf32>, vector<16x32xf32>, vector<16x32xf32> -> vector<16x32xf32>
    %97 = arith.addf %57, %96 : vector<16x32xf32>
    %98 = vector.broadcast %9 : vector<1x32xf32> to vector<16x32xf32>
    %99 = arith.addf %97, %98 : vector<16x32xf32>
    %100 = arith.addf %4, %99 : vector<16x32xf32>
    %cst_65 = arith.constant dense<0.000000e+00> : vector<16xf32>
    %101 = vector.multi_reduction <add>, %100, %cst_65 [1] : vector<16x32xf32> to vector<16xf32>
    %102 = vector.shape_cast %101 : vector<16xf32> to vector<16x1xf32>
    %cst_66 = arith.constant 3.200000e+01 : f32
    %103 = vector.broadcast %cst_66 : f32 to vector<16x1xf32>
    %104 = arith.divf %102, %103 : vector<16x1xf32>
    %105 = vector.broadcast %104 : vector<16x1xf32> to vector<16x32xf32>
    %106 = arith.subf %100, %105 : vector<16x32xf32>
    %107 = arith.mulf %106, %106 : vector<16x32xf32>
    %cst_67 = arith.constant dense<0.000000e+00> : vector<16xf32>
    %108 = vector.multi_reduction <add>, %107, %cst_67 [1] : vector<16x32xf32> to vector<16xf32>
    %109 = vector.shape_cast %108 : vector<16xf32> to vector<16x1xf32>
    %cst_68 = arith.constant 3.200000e+01 : f32
    %110 = vector.broadcast %cst_68 : f32 to vector<16x1xf32>
    %111 = arith.divf %109, %110 : vector<16x1xf32>
    %cst_69 = arith.constant 9.99999974E-6 : f32
    %112 = vector.broadcast %cst_69 : f32 to vector<16x1xf32>
    %113 = arith.addf %111, %112 : vector<16x1xf32>
    %114 = math.rsqrt %113 : vector<16x1xf32>
    %115 = vector.broadcast %114 : vector<16x1xf32> to vector<16x32xf32>
    %116 = arith.mulf %106, %115 : vector<16x32xf32>
    %117 = vector.broadcast %11 : vector<1x32xf32> to vector<16x32xf32>
    %118 = arith.mulf %116, %117 : vector<16x32xf32>
    %119 = vector.broadcast %12 : vector<1x32xf32> to vector<16x32xf32>
    %120 = arith.addf %118, %119 : vector<16x32xf32>
    %cst_70 = arith.constant dense<0.000000e+00> : vector<16x64xf32>
    %121 = tpu.matmul %120, %17, %cst_70 {dimension_numbers = #tpu.dot_dimension_numbers<[1], [0], [0], [1], [0, 0, 1, 1], [], []>} : vector<16x32xf32>, vector<32x64xf32>, vector<16x64xf32> -> vector<16x64xf32>
    %122 = vector.broadcast %18 : vector<1x64xf32> to vector<16x64xf32>
    %123 = arith.addf %121, %122 : vector<16x64xf32>
    %cst_71 = arith.constant 0.000000e+00 : f32
    %124 = vector.broadcast %cst_71 : f32 to vector<16x64xf32>
    %125 = arith.maximumf %123, %124 : vector<16x64xf32>
    %cst_72 = arith.constant dense<0.000000e+00> : vector<16x32xf32>
    %126 = tpu.matmul %125, %8, %cst_72 {dimension_numbers = #tpu.dot_dimension_numbers<[1], [0], [0], [1], [0, 0, 1, 1], [], []>} : vector<16x64xf32>, vector<64x32xf32>, vector<16x32xf32> -> vector<16x32xf32>
    %127 = vector.broadcast %10 : vector<1x32xf32> to vector<16x32xf32>
    %128 = arith.addf %126, %127 : vector<16x32xf32>
    %129 = arith.addf %120, %128 : vector<16x32xf32>
    %cst_73 = arith.constant dense<0.000000e+00> : vector<16xf32>
    %130 = vector.multi_reduction <add>, %129, %cst_73 [1] : vector<16x32xf32> to vector<16xf32>
    %131 = vector.shape_cast %130 : vector<16xf32> to vector<16x1xf32>
    %cst_74 = arith.constant 3.200000e+01 : f32
    %132 = vector.broadcast %cst_74 : f32 to vector<16x1xf32>
    %133 = arith.divf %131, %132 : vector<16x1xf32>
    %134 = vector.broadcast %133 : vector<16x1xf32> to vector<16x32xf32>
    %135 = arith.subf %129, %134 : vector<16x32xf32>
    %136 = arith.mulf %135, %135 : vector<16x32xf32>
    %cst_75 = arith.constant dense<0.000000e+00> : vector<16xf32>
    %137 = vector.multi_reduction <add>, %136, %cst_75 [1] : vector<16x32xf32> to vector<16xf32>
    %138 = vector.shape_cast %137 : vector<16xf32> to vector<16x1xf32>
    %cst_76 = arith.constant 3.200000e+01 : f32
    %139 = vector.broadcast %cst_76 : f32 to vector<16x1xf32>
    %140 = arith.divf %138, %139 : vector<16x1xf32>
    %cst_77 = arith.constant 9.99999974E-6 : f32
    %141 = vector.broadcast %cst_77 : f32 to vector<16x1xf32>
    %142 = arith.addf %140, %141 : vector<16x1xf32>
    %143 = math.rsqrt %142 : vector<16x1xf32>
    %144 = vector.broadcast %143 : vector<16x1xf32> to vector<16x32xf32>
    %145 = arith.mulf %135, %144 : vector<16x32xf32>
    %146 = vector.broadcast %13 : vector<1x32xf32> to vector<16x32xf32>
    %147 = arith.mulf %145, %146 : vector<16x32xf32>
    %148 = vector.broadcast %14 : vector<1x32xf32> to vector<16x32xf32>
    %149 = arith.addf %147, %148 : vector<16x32xf32>
    %c1_78 = arith.constant 1 : index
    %c0_79 = arith.constant 0 : index
    %c0_80 = arith.constant 0 : index
    %150 = vector.load %arg6[%c1_78, %c0_79, %c0_80] : memref<2x70x32xf32, #tpu.memory_space<vmem>>, vector<1x70x32xf32>
    %151 = vector.shape_cast %150 : vector<1x70x32xf32> to vector<70x32xf32>
    %152 = vector.extract_strided_slice %151 {offsets = [0, 0], sizes = [64, 32], strides = [1, 1]} : vector<70x32xf32> to vector<64x32xf32>
    %153 = vector.extract_strided_slice %151 {offsets = [64, 0], sizes = [1, 32], strides = [1, 1]} : vector<70x32xf32> to vector<1x32xf32>
    %154 = vector.extract_strided_slice %151 {offsets = [65, 0], sizes = [1, 32], strides = [1, 1]} : vector<70x32xf32> to vector<1x32xf32>
    %155 = vector.extract_strided_slice %151 {offsets = [66, 0], sizes = [1, 32], strides = [1, 1]} : vector<70x32xf32> to vector<1x32xf32>
    %156 = vector.extract_strided_slice %151 {offsets = [67, 0], sizes = [1, 32], strides = [1, 1]} : vector<70x32xf32> to vector<1x32xf32>
    %157 = vector.extract_strided_slice %151 {offsets = [68, 0], sizes = [1, 32], strides = [1, 1]} : vector<70x32xf32> to vector<1x32xf32>
    %158 = vector.extract_strided_slice %151 {offsets = [69, 0], sizes = [1, 32], strides = [1, 1]} : vector<70x32xf32> to vector<1x32xf32>
    %c1_81 = arith.constant 1 : index
    %c0_82 = arith.constant 0 : index
    %c0_83 = arith.constant 0 : index
    %159 = vector.load %arg5[%c1_81, %c0_82, %c0_83] : memref<2x33x64xf32, #tpu.memory_space<vmem>>, vector<1x33x64xf32>
    %160 = vector.shape_cast %159 : vector<1x33x64xf32> to vector<33x64xf32>
    %161 = vector.extract_strided_slice %160 {offsets = [0, 0], sizes = [32, 64], strides = [1, 1]} : vector<33x64xf32> to vector<32x64xf32>
    %162 = vector.extract_strided_slice %160 {offsets = [32, 0], sizes = [1, 64], strides = [1, 1]} : vector<33x64xf32> to vector<1x64xf32>
    %c1_84 = arith.constant 1 : index
    %c0_85 = arith.constant 0 : index
    %c0_86 = arith.constant 0 : index
    %c0_87 = arith.constant 0 : index
    %c0_88 = arith.constant 0 : index
    %163 = vector.load %arg3[%c1_84, %c0_85, %c0_86, %c0_87, %c0_88] : memref<2x3x2x33x16xf32, #tpu.memory_space<vmem>>, vector<1x1x1x33x16xf32>
    %164 = vector.shape_cast %163 : vector<1x1x1x33x16xf32> to vector<33x16xf32>
    %c1_89 = arith.constant 1 : index
    %c1_90 = arith.constant 1 : index
    %c0_91 = arith.constant 0 : index
    %c0_92 = arith.constant 0 : index
    %c0_93 = arith.constant 0 : index
    %165 = vector.load %arg3[%c1_89, %c1_90, %c0_91, %c0_92, %c0_93] : memref<2x3x2x33x16xf32, #tpu.memory_space<vmem>>, vector<1x1x1x33x16xf32>
    %166 = vector.shape_cast %165 : vector<1x1x1x33x16xf32> to vector<33x16xf32>
    %c1_94 = arith.constant 1 : index
    %c2_95 = arith.constant 2 : index
    %c0_96 = arith.constant 0 : index
    %c0_97 = arith.constant 0 : index
    %c0_98 = arith.constant 0 : index
    %167 = vector.load %arg3[%c1_94, %c2_95, %c0_96, %c0_97, %c0_98] : memref<2x3x2x33x16xf32, #tpu.memory_space<vmem>>, vector<1x1x1x33x16xf32>
    %168 = vector.shape_cast %167 : vector<1x1x1x33x16xf32> to vector<33x16xf32>
    %169 = vector.extract_strided_slice %164 {offsets = [0, 0], sizes = [32, 16], strides = [1, 1]} : vector<33x16xf32> to vector<32x16xf32>
    %cst_99 = arith.constant dense<0.000000e+00> : vector<16x16xf32>
    %170 = tpu.matmul %149, %169, %cst_99 {dimension_numbers = #tpu.dot_dimension_numbers<[1], [0], [0], [1], [0, 0, 1, 1], [], []>} : vector<16x32xf32>, vector<32x16xf32>, vector<16x16xf32> -> vector<16x16xf32>
    %171 = vector.extract_strided_slice %164 {offsets = [32, 0], sizes = [1, 16], strides = [1, 1]} : vector<33x16xf32> to vector<1x16xf32>
    %172 = vector.broadcast %171 : vector<1x16xf32> to vector<16x16xf32>
    %173 = arith.addf %170, %172 : vector<16x16xf32>
    %174 = vector.extract_strided_slice %166 {offsets = [0, 0], sizes = [32, 16], strides = [1, 1]} : vector<33x16xf32> to vector<32x16xf32>
    %cst_100 = arith.constant dense<0.000000e+00> : vector<16x16xf32>
    %175 = tpu.matmul %149, %174, %cst_100 {dimension_numbers = #tpu.dot_dimension_numbers<[1], [0], [0], [1], [0, 0, 1, 1], [], []>} : vector<16x32xf32>, vector<32x16xf32>, vector<16x16xf32> -> vector<16x16xf32>
    %176 = vector.extract_strided_slice %166 {offsets = [32, 0], sizes = [1, 16], strides = [1, 1]} : vector<33x16xf32> to vector<1x16xf32>
    %177 = vector.broadcast %176 : vector<1x16xf32> to vector<16x16xf32>
    %178 = arith.addf %175, %177 : vector<16x16xf32>
    %179 = vector.extract_strided_slice %168 {offsets = [0, 0], sizes = [32, 16], strides = [1, 1]} : vector<33x16xf32> to vector<32x16xf32>
    %cst_101 = arith.constant dense<0.000000e+00> : vector<16x16xf32>
    %180 = tpu.matmul %149, %179, %cst_101 {dimension_numbers = #tpu.dot_dimension_numbers<[1], [0], [0], [1], [0, 0, 1, 1], [], []>} : vector<16x32xf32>, vector<32x16xf32>, vector<16x16xf32> -> vector<16x16xf32>
    %181 = vector.extract_strided_slice %168 {offsets = [32, 0], sizes = [1, 16], strides = [1, 1]} : vector<33x16xf32> to vector<1x16xf32>
    %182 = vector.broadcast %181 : vector<1x16xf32> to vector<16x16xf32>
    %183 = arith.addf %180, %182 : vector<16x16xf32>
    %cst_102 = arith.constant dense<0.000000e+00> : vector<16x16xf32>
    %184 = tpu.matmul %173, %178, %cst_102 {dimension_numbers = #tpu.dot_dimension_numbers<[1], [1], [0], [0], [0, 0, 1, 0], [], []>} : vector<16x16xf32>, vector<16x16xf32>, vector<16x16xf32> -> vector<16x16xf32>
    %cst_103 = arith.constant 2.500000e-01 : f32
    %185 = vector.broadcast %cst_103 : f32 to vector<16x16xf32>
    %186 = arith.mulf %184, %185 : vector<16x16xf32>
    %187 = arith.addf %186, %5 : vector<16x16xf32>
    %cst_104 = arith.constant dense<0xFF800000> : vector<16xf32>
    %188 = vector.multi_reduction <maximumf>, %187, %cst_104 [1] : vector<16x16xf32> to vector<16xf32>
    %189 = vector.shape_cast %188 : vector<16xf32> to vector<16x1xf32>
    %190 = vector.broadcast %189 : vector<16x1xf32> to vector<16x16xf32>
    %191 = arith.subf %187, %190 : vector<16x16xf32>
    %192 = math.exp %191 : vector<16x16xf32>
    %cst_105 = arith.constant dense<0.000000e+00> : vector<16xf32>
    %193 = vector.multi_reduction <add>, %192, %cst_105 [1] : vector<16x16xf32> to vector<16xf32>
    %194 = vector.shape_cast %193 : vector<16xf32> to vector<16x1xf32>
    %195 = tpu.reciprocal %194 {approx = true} : vector<16x1xf32> -> vector<16x1xf32>
    %196 = vector.broadcast %195 : vector<16x1xf32> to vector<16x16xf32>
    %197 = arith.mulf %192, %196 : vector<16x16xf32>
    %cst_106 = arith.constant dense<0.000000e+00> : vector<16x16xf32>
    %198 = tpu.matmul %197, %183, %cst_106 {dimension_numbers = #tpu.dot_dimension_numbers<[1], [0], [0], [1], [0, 0, 1, 1], [], []>} : vector<16x16xf32>, vector<16x16xf32>, vector<16x16xf32> -> vector<16x16xf32>
    %c1_107 = arith.constant 1 : index
    %c0_108 = arith.constant 0 : index
    %c0_109 = arith.constant 0 : index
    %c0_110 = arith.constant 0 : index
    %199 = vector.load %arg4[%c1_107, %c0_108, %c0_109, %c0_110] : memref<2x2x16x32xf32, #tpu.memory_space<vmem>>, vector<1x1x16x32xf32>
    %200 = vector.shape_cast %199 : vector<1x1x16x32xf32> to vector<16x32xf32>
    %cst_111 = arith.constant dense<0.000000e+00> : vector<16x32xf32>
    %201 = tpu.matmul %198, %200, %cst_111 {dimension_numbers = #tpu.dot_dimension_numbers<[1], [0], [0], [1], [0, 0, 1, 1], [], []>} : vector<16x16xf32>, vector<16x32xf32>, vector<16x32xf32> -> vector<16x32xf32>
    %c1_112 = arith.constant 1 : index
    %c0_113 = arith.constant 0 : index
    %c1_114 = arith.constant 1 : index
    %c0_115 = arith.constant 0 : index
    %c0_116 = arith.constant 0 : index
    %202 = vector.load %arg3[%c1_112, %c0_113, %c1_114, %c0_115, %c0_116] : memref<2x3x2x33x16xf32, #tpu.memory_space<vmem>>, vector<1x1x1x33x16xf32>
    %203 = vector.shape_cast %202 : vector<1x1x1x33x16xf32> to vector<33x16xf32>
    %c1_117 = arith.constant 1 : index
    %c1_118 = arith.constant 1 : index
    %c1_119 = arith.constant 1 : index
    %c0_120 = arith.constant 0 : index
    %c0_121 = arith.constant 0 : index
    %204 = vector.load %arg3[%c1_117, %c1_118, %c1_119, %c0_120, %c0_121] : memref<2x3x2x33x16xf32, #tpu.memory_space<vmem>>, vector<1x1x1x33x16xf32>
    %205 = vector.shape_cast %204 : vector<1x1x1x33x16xf32> to vector<33x16xf32>
    %c1_122 = arith.constant 1 : index
    %c2_123 = arith.constant 2 : index
    %c1_124 = arith.constant 1 : index
    %c0_125 = arith.constant 0 : index
    %c0_126 = arith.constant 0 : index
    %206 = vector.load %arg3[%c1_122, %c2_123, %c1_124, %c0_125, %c0_126] : memref<2x3x2x33x16xf32, #tpu.memory_space<vmem>>, vector<1x1x1x33x16xf32>
    %207 = vector.shape_cast %206 : vector<1x1x1x33x16xf32> to vector<33x16xf32>
    %208 = vector.extract_strided_slice %203 {offsets = [0, 0], sizes = [32, 16], strides = [1, 1]} : vector<33x16xf32> to vector<32x16xf32>
    %cst_127 = arith.constant dense<0.000000e+00> : vector<16x16xf32>
    %209 = tpu.matmul %149, %208, %cst_127 {dimension_numbers = #tpu.dot_dimension_numbers<[1], [0], [0], [1], [0, 0, 1, 1], [], []>} : vector<16x32xf32>, vector<32x16xf32>, vector<16x16xf32> -> vector<16x16xf32>
    %210 = vector.extract_strided_slice %203 {offsets = [32, 0], sizes = [1, 16], strides = [1, 1]} : vector<33x16xf32> to vector<1x16xf32>
    %211 = vector.broadcast %210 : vector<1x16xf32> to vector<16x16xf32>
    %212 = arith.addf %209, %211 : vector<16x16xf32>
    %213 = vector.extract_strided_slice %205 {offsets = [0, 0], sizes = [32, 16], strides = [1, 1]} : vector<33x16xf32> to vector<32x16xf32>
    %cst_128 = arith.constant dense<0.000000e+00> : vector<16x16xf32>
    %214 = tpu.matmul %149, %213, %cst_128 {dimension_numbers = #tpu.dot_dimension_numbers<[1], [0], [0], [1], [0, 0, 1, 1], [], []>} : vector<16x32xf32>, vector<32x16xf32>, vector<16x16xf32> -> vector<16x16xf32>
    %215 = vector.extract_strided_slice %205 {offsets = [32, 0], sizes = [1, 16], strides = [1, 1]} : vector<33x16xf32> to vector<1x16xf32>
    %216 = vector.broadcast %215 : vector<1x16xf32> to vector<16x16xf32>
    %217 = arith.addf %214, %216 : vector<16x16xf32>
    %218 = vector.extract_strided_slice %207 {offsets = [0, 0], sizes = [32, 16], strides = [1, 1]} : vector<33x16xf32> to vector<32x16xf32>
    %cst_129 = arith.constant dense<0.000000e+00> : vector<16x16xf32>
    %219 = tpu.matmul %149, %218, %cst_129 {dimension_numbers = #tpu.dot_dimension_numbers<[1], [0], [0], [1], [0, 0, 1, 1], [], []>} : vector<16x32xf32>, vector<32x16xf32>, vector<16x16xf32> -> vector<16x16xf32>
    %220 = vector.extract_strided_slice %207 {offsets = [32, 0], sizes = [1, 16], strides = [1, 1]} : vector<33x16xf32> to vector<1x16xf32>
    %221 = vector.broadcast %220 : vector<1x16xf32> to vector<16x16xf32>
    %222 = arith.addf %219, %221 : vector<16x16xf32>
    %cst_130 = arith.constant dense<0.000000e+00> : vector<16x16xf32>
    %223 = tpu.matmul %212, %217, %cst_130 {dimension_numbers = #tpu.dot_dimension_numbers<[1], [1], [0], [0], [0, 0, 1, 0], [], []>} : vector<16x16xf32>, vector<16x16xf32>, vector<16x16xf32> -> vector<16x16xf32>
    %cst_131 = arith.constant 2.500000e-01 : f32
    %224 = vector.broadcast %cst_131 : f32 to vector<16x16xf32>
    %225 = arith.mulf %223, %224 : vector<16x16xf32>
    %226 = arith.addf %225, %5 : vector<16x16xf32>
    %cst_132 = arith.constant dense<0xFF800000> : vector<16xf32>
    %227 = vector.multi_reduction <maximumf>, %226, %cst_132 [1] : vector<16x16xf32> to vector<16xf32>
    %228 = vector.shape_cast %227 : vector<16xf32> to vector<16x1xf32>
    %229 = vector.broadcast %228 : vector<16x1xf32> to vector<16x16xf32>
    %230 = arith.subf %226, %229 : vector<16x16xf32>
    %231 = math.exp %230 : vector<16x16xf32>
    %cst_133 = arith.constant dense<0.000000e+00> : vector<16xf32>
    %232 = vector.multi_reduction <add>, %231, %cst_133 [1] : vector<16x16xf32> to vector<16xf32>
    %233 = vector.shape_cast %232 : vector<16xf32> to vector<16x1xf32>
    %234 = tpu.reciprocal %233 {approx = true} : vector<16x1xf32> -> vector<16x1xf32>
    %235 = vector.broadcast %234 : vector<16x1xf32> to vector<16x16xf32>
    %236 = arith.mulf %231, %235 : vector<16x16xf32>
    %cst_134 = arith.constant dense<0.000000e+00> : vector<16x16xf32>
    %237 = tpu.matmul %236, %222, %cst_134 {dimension_numbers = #tpu.dot_dimension_numbers<[1], [0], [0], [1], [0, 0, 1, 1], [], []>} : vector<16x16xf32>, vector<16x16xf32>, vector<16x16xf32> -> vector<16x16xf32>
    %c1_135 = arith.constant 1 : index
    %c1_136 = arith.constant 1 : index
    %c0_137 = arith.constant 0 : index
    %c0_138 = arith.constant 0 : index
    %238 = vector.load %arg4[%c1_135, %c1_136, %c0_137, %c0_138] : memref<2x2x16x32xf32, #tpu.memory_space<vmem>>, vector<1x1x16x32xf32>
    %239 = vector.shape_cast %238 : vector<1x1x16x32xf32> to vector<16x32xf32>
    %cst_139 = arith.constant dense<0.000000e+00> : vector<16x32xf32>
    %240 = tpu.matmul %237, %239, %cst_139 {dimension_numbers = #tpu.dot_dimension_numbers<[1], [0], [0], [1], [0, 0, 1, 1], [], []>} : vector<16x16xf32>, vector<16x32xf32>, vector<16x32xf32> -> vector<16x32xf32>
    %241 = arith.addf %201, %240 : vector<16x32xf32>
    %242 = vector.broadcast %153 : vector<1x32xf32> to vector<16x32xf32>
    %243 = arith.addf %241, %242 : vector<16x32xf32>
    %244 = arith.addf %149, %243 : vector<16x32xf32>
    %cst_140 = arith.constant dense<0.000000e+00> : vector<16xf32>
    %245 = vector.multi_reduction <add>, %244, %cst_140 [1] : vector<16x32xf32> to vector<16xf32>
    %246 = vector.shape_cast %245 : vector<16xf32> to vector<16x1xf32>
    %cst_141 = arith.constant 3.200000e+01 : f32
    %247 = vector.broadcast %cst_141 : f32 to vector<16x1xf32>
    %248 = arith.divf %246, %247 : vector<16x1xf32>
    %249 = vector.broadcast %248 : vector<16x1xf32> to vector<16x32xf32>
    %250 = arith.subf %244, %249 : vector<16x32xf32>
    %251 = arith.mulf %250, %250 : vector<16x32xf32>
    %cst_142 = arith.constant dense<0.000000e+00> : vector<16xf32>
    %252 = vector.multi_reduction <add>, %251, %cst_142 [1] : vector<16x32xf32> to vector<16xf32>
    %253 = vector.shape_cast %252 : vector<16xf32> to vector<16x1xf32>
    %cst_143 = arith.constant 3.200000e+01 : f32
    %254 = vector.broadcast %cst_143 : f32 to vector<16x1xf32>
    %255 = arith.divf %253, %254 : vector<16x1xf32>
    %cst_144 = arith.constant 9.99999974E-6 : f32
    %256 = vector.broadcast %cst_144 : f32 to vector<16x1xf32>
    %257 = arith.addf %255, %256 : vector<16x1xf32>
    %258 = math.rsqrt %257 : vector<16x1xf32>
    %259 = vector.broadcast %258 : vector<16x1xf32> to vector<16x32xf32>
    %260 = arith.mulf %250, %259 : vector<16x32xf32>
    %261 = vector.broadcast %155 : vector<1x32xf32> to vector<16x32xf32>
    %262 = arith.mulf %260, %261 : vector<16x32xf32>
    %263 = vector.broadcast %156 : vector<1x32xf32> to vector<16x32xf32>
    %264 = arith.addf %262, %263 : vector<16x32xf32>
    %cst_145 = arith.constant dense<0.000000e+00> : vector<16x64xf32>
    %265 = tpu.matmul %264, %161, %cst_145 {dimension_numbers = #tpu.dot_dimension_numbers<[1], [0], [0], [1], [0, 0, 1, 1], [], []>} : vector<16x32xf32>, vector<32x64xf32>, vector<16x64xf32> -> vector<16x64xf32>
    %266 = vector.broadcast %162 : vector<1x64xf32> to vector<16x64xf32>
    %267 = arith.addf %265, %266 : vector<16x64xf32>
    %cst_146 = arith.constant 0.000000e+00 : f32
    %268 = vector.broadcast %cst_146 : f32 to vector<16x64xf32>
    %269 = arith.maximumf %267, %268 : vector<16x64xf32>
    %cst_147 = arith.constant dense<0.000000e+00> : vector<16x32xf32>
    %270 = tpu.matmul %269, %152, %cst_147 {dimension_numbers = #tpu.dot_dimension_numbers<[1], [0], [0], [1], [0, 0, 1, 1], [], []>} : vector<16x64xf32>, vector<64x32xf32>, vector<16x32xf32> -> vector<16x32xf32>
    %271 = vector.broadcast %154 : vector<1x32xf32> to vector<16x32xf32>
    %272 = arith.addf %270, %271 : vector<16x32xf32>
    %273 = arith.addf %264, %272 : vector<16x32xf32>
    %cst_148 = arith.constant dense<0.000000e+00> : vector<16xf32>
    %274 = vector.multi_reduction <add>, %273, %cst_148 [1] : vector<16x32xf32> to vector<16xf32>
    %275 = vector.shape_cast %274 : vector<16xf32> to vector<16x1xf32>
    %cst_149 = arith.constant 3.200000e+01 : f32
    %276 = vector.broadcast %cst_149 : f32 to vector<16x1xf32>
    %277 = arith.divf %275, %276 : vector<16x1xf32>
    %278 = vector.broadcast %277 : vector<16x1xf32> to vector<16x32xf32>
    %279 = arith.subf %273, %278 : vector<16x32xf32>
    %280 = arith.mulf %279, %279 : vector<16x32xf32>
    %cst_150 = arith.constant dense<0.000000e+00> : vector<16xf32>
    %281 = vector.multi_reduction <add>, %280, %cst_150 [1] : vector<16x32xf32> to vector<16xf32>
    %282 = vector.shape_cast %281 : vector<16xf32> to vector<16x1xf32>
    %cst_151 = arith.constant 3.200000e+01 : f32
    %283 = vector.broadcast %cst_151 : f32 to vector<16x1xf32>
    %284 = arith.divf %282, %283 : vector<16x1xf32>
    %cst_152 = arith.constant 9.99999974E-6 : f32
    %285 = vector.broadcast %cst_152 : f32 to vector<16x1xf32>
    %286 = arith.addf %284, %285 : vector<16x1xf32>
    %287 = math.rsqrt %286 : vector<16x1xf32>
    %288 = vector.broadcast %287 : vector<16x1xf32> to vector<16x32xf32>
    %289 = arith.mulf %279, %288 : vector<16x32xf32>
    %290 = vector.broadcast %157 : vector<1x32xf32> to vector<16x32xf32>
    %291 = arith.mulf %289, %290 : vector<16x32xf32>
    %292 = vector.broadcast %158 : vector<1x32xf32> to vector<16x32xf32>
    %293 = arith.addf %291, %292 : vector<16x32xf32>
    %c0_153 = arith.constant 0 : index
    %c0_154 = arith.constant 0 : index
    %294 = vector.load %arg7[%c0_153, %c0_154] : memref<35x32xf32, #tpu.memory_space<vmem>>, vector<35x32xf32>
    %295 = vector.extract_strided_slice %294 {offsets = [0, 0], sizes = [32, 32], strides = [1, 1]} : vector<35x32xf32> to vector<32x32xf32>
    %296 = vector.extract_strided_slice %294 {offsets = [32, 0], sizes = [1, 32], strides = [1, 1]} : vector<35x32xf32> to vector<1x32xf32>
    %297 = vector.extract_strided_slice %294 {offsets = [33, 0], sizes = [1, 32], strides = [1, 1]} : vector<35x32xf32> to vector<1x32xf32>
    %298 = vector.extract_strided_slice %294 {offsets = [34, 0], sizes = [1, 32], strides = [1, 1]} : vector<35x32xf32> to vector<1x32xf32>
    %c0_155 = arith.constant 0 : index
    %c0_156 = arith.constant 0 : index
    %299 = vector.load %arg8[%c0_155, %c0_156] : memref<33x128xf32, #tpu.memory_space<vmem>>, vector<33x128xf32>
    %300 = vector.extract_strided_slice %299 {offsets = [0, 0], sizes = [32, 128], strides = [1, 1]} : vector<33x128xf32> to vector<32x128xf32>
    %301 = vector.extract_strided_slice %299 {offsets = [32, 0], sizes = [1, 128], strides = [1, 1]} : vector<33x128xf32> to vector<1x128xf32>
    %302 = vector.extract_strided_slice %293 {offsets = [0, 0], sizes = [1, 32], strides = [1, 1]} : vector<16x32xf32> to vector<1x32xf32>
    %303 = vector.extract_strided_slice %293 {offsets = [8, 0], sizes = [1, 32], strides = [1, 1]} : vector<16x32xf32> to vector<1x32xf32>
    %304 = tpu.concatenate %302, %303 in 0 : vector<1x32xf32>, vector<1x32xf32> -> vector<2x32xf32>
    %cst_157 = arith.constant dense<0.000000e+00> : vector<2xf32>
    %305 = vector.multi_reduction <add>, %304, %cst_157 [1] : vector<2x32xf32> to vector<2xf32>
    %306 = vector.shape_cast %305 : vector<2xf32> to vector<2x1xf32>
    %cst_158 = arith.constant 3.200000e+01 : f32
    %307 = vector.broadcast %cst_158 : f32 to vector<2x1xf32>
    %308 = arith.divf %306, %307 : vector<2x1xf32>
    %309 = vector.broadcast %308 : vector<2x1xf32> to vector<2x32xf32>
    %310 = arith.subf %304, %309 : vector<2x32xf32>
    %311 = arith.mulf %310, %310 : vector<2x32xf32>
    %cst_159 = arith.constant dense<0.000000e+00> : vector<2xf32>
    %312 = vector.multi_reduction <add>, %311, %cst_159 [1] : vector<2x32xf32> to vector<2xf32>
    %313 = vector.shape_cast %312 : vector<2xf32> to vector<2x1xf32>
    %cst_160 = arith.constant 3.200000e+01 : f32
    %314 = vector.broadcast %cst_160 : f32 to vector<2x1xf32>
    %315 = arith.divf %313, %314 : vector<2x1xf32>
    %cst_161 = arith.constant 9.99999974E-6 : f32
    %316 = vector.broadcast %cst_161 : f32 to vector<2x1xf32>
    %317 = arith.addf %315, %316 : vector<2x1xf32>
    %318 = math.rsqrt %317 : vector<2x1xf32>
    %319 = vector.broadcast %318 : vector<2x1xf32> to vector<2x32xf32>
    %320 = arith.mulf %310, %319 : vector<2x32xf32>
    %321 = vector.broadcast %296 : vector<1x32xf32> to vector<2x32xf32>
    %322 = arith.mulf %320, %321 : vector<2x32xf32>
    %323 = vector.broadcast %297 : vector<1x32xf32> to vector<2x32xf32>
    %324 = arith.addf %322, %323 : vector<2x32xf32>
    %cst_162 = arith.constant dense<0.000000e+00> : vector<2x32xf32>
    %325 = tpu.matmul %324, %295, %cst_162 {dimension_numbers = #tpu.dot_dimension_numbers<[1], [0], [0], [1], [0, 0, 1, 1], [], []>} : vector<2x32xf32>, vector<32x32xf32>, vector<2x32xf32> -> vector<2x32xf32>
    %326 = vector.broadcast %298 : vector<1x32xf32> to vector<2x32xf32>
    %327 = arith.addf %325, %326 : vector<2x32xf32>
    %cst_163 = arith.constant 0.000000e+00 : f32
    %328 = vector.broadcast %cst_163 : f32 to vector<2x32xf32>
    %329 = arith.maximumf %327, %328 : vector<2x32xf32>
    %cst_164 = arith.constant dense<0.000000e+00> : vector<2x128xf32>
    %330 = tpu.matmul %329, %300, %cst_164 {dimension_numbers = #tpu.dot_dimension_numbers<[1], [0], [0], [1], [0, 0, 1, 1], [], []>} : vector<2x32xf32>, vector<32x128xf32>, vector<2x128xf32> -> vector<2x128xf32>
    %331 = vector.broadcast %301 : vector<1x128xf32> to vector<2x128xf32>
    %332 = arith.addf %330, %331 : vector<2x128xf32>
    %c0_165 = arith.constant 0 : index
    %c0_166 = arith.constant 0 : index
    %333 = vector.load %arg9[%c0_165, %c0_166] : memref<2x128xf32, #tpu.memory_space<vmem>>, vector<2x128xf32>
    tpu.vector_store %arg9[%c0_165, %c0_166], %332 {strides = array<i32>} : memref<2x128xf32, #tpu.memory_space<vmem>>, vector<2x128xf32>,
    return
  }
}

</mosaic_0001>

<llo_original>
// kernel: transformer_classifier_forward.1
$region0: #{transformer_classifier_forward.1}
  #allocation0 [shape = 'u32[]', space=smem, size = 0x4, offset = 0x4, fixed_abs, tag = 'smem constant byte address 0x4 - core index']
  #allocation1 [shape = 'u32[144,128]{1,0:T(1,128)}', space=vmem, size = 0x12000, scoped, tag = 'internal scratch']
  %s0 = inlined_call_operand.vmem [shape: f32[16,32], index: 0, kind: input, shape index: {}]
  %s1 = inlined_call_operand.vmem [shape: f32[16,32], index: 1, kind: input, shape index: {}]
  %s2 = inlined_call_operand.vmem [shape: f32[16,16], index: 2, kind: input, shape index: {}]
  %s3 = inlined_call_operand.vmem [shape: f32[2,3,2,33,16], index: 3, kind: input, shape index: {}]
  %s4 = inlined_call_operand.vmem [shape: f32[2,2,16,32], index: 4, kind: input, shape index: {}]
  %s5 = inlined_call_operand.vmem [shape: f32[2,33,64], index: 5, kind: input, shape index: {}]
  %s6 = inlined_call_operand.vmem [shape: f32[2,70,32], index: 6, kind: input, shape index: {}]
  %s7 = inlined_call_operand.vmem [shape: f32[35,32], index: 7, kind: input, shape index: {}]
  %s8 = inlined_call_operand.vmem [shape: f32[33,128], index: 8, kind: input, shape index: {}]
  %s9 = inlined_call_operand.hbm [shape: f32[2,128], index: 9, kind: output, shape index: {}]
  %s10 = sld [smem:[#allocation0]]
  $region46: #{transformer_classifier_forward.1} parent=0
    _
  %s12 = ssub.s32 1, %s10
  %s13 = scalar_select 0, %s12, %s10
  $region1: #{transformer_classifier_forward.1} parent=0
    #allocation2 [shape = 'u8[1024]{0}', space=vmem, size = 0x400, scoped, tag = 'output window, operand 0, single buffered']
    #allocation3 [shape = 's32[1]{0}', space=sflag, size = 0x4, scoped, tag = 'scoped memory for transformer_classifier_forward.1']
    %14 = vsyncpa [#allocation3], 0
    // Predicated region
    $region2: #{transformer_classifier_forward.1} parent=1 // pred_check
      _
    $region3: #{transformer_classifier_forward.1} parent=1 // pred_check_branch
      %16 = sbr.rel (0) target = $region5
    $region4: #{transformer_classifier_forward.1} parent=1 // pred_region
      _
    $region5: #{transformer_classifier_forward.1} parent=1 // pred_fallthru
      _
    // Predicated region
    $region6: #{transformer_classifier_forward.1} parent=1 // pred_check
      _
    $region7: #{transformer_classifier_forward.1} parent=1 // pred_check_branch
      %18 = sbr.rel (0) target = $region9
    $region8: #{transformer_classifier_forward.1} parent=1 // pred_region
      _
    $region9: #{transformer_classifier_forward.1} parent=1 // pred_fallthru
      _
    // Predicated region
    $region10: #{transformer_classifier_forward.1} parent=1 // pred_check
      _
    $region11: #{transformer_classifier_forward.1} parent=1 // pred_check_branch
      %20 = sbr.rel (0) target = $region13
    $region12: #{transformer_classifier_forward.1} parent=1 // pred_region
      _
    $region13: #{transformer_classifier_forward.1} parent=1 // pred_fallthru
      _
    // Predicated region
    $region14: #{transformer_classifier_forward.1} parent=1 // pred_check
      _
    $region15: #{transformer_classifier_forward.1} parent=1 // pred_check_branch
      %22 = sbr.rel (0) target = $region17
    $region16: #{transformer_classifier_forward.1} parent=1 // pred_region
      _
    $region17: #{transformer_classifier_forward.1} parent=1 // pred_fallthru
      _
    // Predicated region
    $region18: #{transformer_classifier_forward.1} parent=1 // pred_check
      _
    $region19: #{transformer_classifier_forward.1} parent=1 // pred_check_branch
      %24 = sbr.rel (0) target = $region21
    $region20: #{transformer_classifier_forward.1} parent=1 // pred_region
      _
    $region21: #{transformer_classifier_forward.1} parent=1 // pred_fallthru
      _
    // Predicated region
    $region22: #{transformer_classifier_forward.1} parent=1 // pred_check
      _
    $region23: #{transformer_classifier_forward.1} parent=1 // pred_check_branch
      %26 = sbr.rel (0) target = $region25
    $region24: #{transformer_classifier_forward.1} parent=1 // pred_region
      _
    $region25: #{transformer_classifier_forward.1} parent=1 // pred_fallthru
      _
    // Predicated region
    $region26: #{transformer_classifier_forward.1} parent=1 // pred_check
      _
    $region27: #{transformer_classifier_forward.1} parent=1 // pred_check_branch
      %28 = sbr.rel (0) target = $region29
    $region28: #{transformer_classifier_forward.1} parent=1 // pred_region
      _
    $region29: #{transformer_classifier_forward.1} parent=1 // pred_fallthru
      _
    // Predicated region
    $region30: #{transformer_classifier_forward.1} parent=1 // pred_check
      _
    $region31: #{transformer_classifier_forward.1} parent=1 // pred_check_branch
      %30 = sbr.rel (0) target = $region33
    $region32: #{transformer_classifier_forward.1} parent=1 // pred_region
      _
    $region33: #{transformer_classifier_forward.1} parent=1 // pred_fallthru
      _
    // Predicated region
    $region34: #{transformer_classifier_forward.1} parent=1 // pred_check
      _
    $region35: #{transformer_classifier_forward.1} parent=1 // pred_check_branch
      %32 = sbr.rel (0) target = $region37
    $region36: #{transformer_classifier_forward.1} parent=1 // pred_region
      _
    $region37: #{transformer_classifier_forward.1} parent=1 // pred_fallthru
      _
    %v33 = vld [vmem:[%s0] sm:$0xff]
    %v34 = vld [vmem:[%s0 + $0x8] sm:$0xff]
    %v35 = vmul.f32 %v33, 5.656854
    %v36 = vmul.f32 %v34, 5.656854
    %v37 = vld [vmem:[%s1] sm:$0xff]
    %v38 = vld [vmem:[%s1 + $0x8] sm:$0xff]
    %v39 = vadd.f32 %v35, %v37
    %v40 = vadd.f32 %v36, %v38
    %v41 = vld [vmem:[%s2] sm:$0xff]
    %v42 = vld [vmem:[%s2 + $0x8] sm:$0xff]
    %v43 = vld [vmem:[%s6] sm:$0xff]
    %v44 = vld [vmem:[%s6 + $0x8] sm:$0xff]
    %v45 = vld [vmem:[%s6 + $0x10] sm:$0xff]
    %v46 = vld [vmem:[%s6 + $0x18] sm:$0xff]
    %v47 = vld [vmem:[%s6 + $0x20] sm:$0xff]
    %v48 = vld [vmem:[%s6 + $0x28] sm:$0xff]
    %v49 = vld [vmem:[%s6 + $0x30] sm:$0xff]
    %v50 = vld [vmem:[%s6 + $0x38] sm:$0xff]
    %v51 = vld [vmem:[%s6 + $0x40] sm:$0x3f]
    %v52 = vld [vmem:[%s5] sm:$0xff]
    %v53 = vld [vmem:[%s5 + $0x8] sm:$0xff]
    %v54 = vld [vmem:[%s5 + $0x10] sm:$0xff]
    %v55 = vld [vmem:[%s5 + $0x18] sm:$0xff]
    %v56 = vld [vmem:[%s5 + $0x20] sm:$0x1]
    %v57 = vld [vmem:[%s3] sm:$0xff]
    %v58 = vld [vmem:[%s3 + $0x8] sm:$0xff]
    %v59 = vld [vmem:[%s3 + $0x10] sm:$0xff]
    %v60 = vld [vmem:[%s3 + $0x18] sm:$0xff]
    %v61 = vld [vmem:[%s3 + $0x20] sm:$0x1]
    %s62 = scalar_lea.vmem %s3, 80
    %v63 = vld [vmem:[%s62] sm:$0xff]
    %v64 = vld [vmem:[%s62 + $0x8] sm:$0xff]
    %v65 = vld [vmem:[%s62 + $0x10] sm:$0xff]
    %v66 = vld [vmem:[%s62 + $0x18] sm:$0xff]
    %v67 = vld [vmem:[%s62 + $0x20] sm:$0x1]
    %s68 = scalar_lea.vmem %s3, 160
    %v69 = vld [vmem:[%s68] sm:$0xff]
    %v70 = vld [vmem:[%s68 + $0x8] sm:$0xff]
    %v71 = vld [vmem:[%s68 + $0x10] sm:$0xff]
    %v72 = vld [vmem:[%s68 + $0x18] sm:$0xff]
    %v73 = vld [vmem:[%s68 + $0x20] sm:$0x1]
    %v74 = vlaneseq
    %v75 = vshrl.u32 %v74, 7
    %v76 = vsub.s32 0, %v75
    %v77 = vrot.slane %v61, %v76
    %vm78 = vcmask 261120
    %v80 = vsel %vm78, %v39, 0
    %v83 = vsel %vm78, %v40, 0
    %85 = vmatprep.subr.mxu0 0.0
    %86 = vmatpush1.msra.mxu0 %v57
    %87 = vmatprep.subr.mxu0 0.0
    %88 = vmatpush1.msra.mxu0 %v58
    %89 = vmatprep.subr.mxu0 0.0
    %90 = vmatpush1.msra.mxu0 %v59
    %91 = vmatprep.subr.mxu0 0.0
    %92 = vmatpush1.msra.mxu0 %v60
    %93 = vmatprep.subr.mxu0 0.0
    %94 = vmatpush1.msra.mxu0 0.0
    %95 = vmatprep.subr.mxu0 0.0
    %96 = vmatpush1.msra.mxu0 0.0
    %97 = vmatprep.subr.mxu0 0.0
    %98 = vmatpush1.msra.mxu0 0.0
    %99 = vmatprep.subr.mxu0 0.0
    %100 = vmatpush1.msra.mxu0 0.0
    %101 = vmatprep.subr.mxu0 0.0
    %102 = vmatpush1.msra.mxu0 0.0
    %103 = vmatprep.subr.mxu0 0.0
    %104 = vmatpush1.msra.mxu0 0.0
    %105 = vmatprep.subr.mxu0 0.0
    %106 = vmatpush1.msra.mxu0 0.0
    %107 = vmatprep.subr.mxu0 0.0
    %108 = vmatpush1.msra.mxu0 0.0
    %109 = vmatprep.subr.mxu0 0.0
    %110 = vmatpush1.msra.mxu0 0.0
    %111 = vmatprep.subr.mxu0 0.0
    %112 = vmatpush1.msra.mxu0 0.0
    %113 = vmatprep.subr.mxu0 0.0
    %114 = vmatpush1.msra.mxu0 0.0
    %115 = vmatprep.subr.mxu0 0.0
    %116 = vmatpush1.msra.mxu0 0.0
    %117 = vmatprep.subr.mxu0 0.0
    %118 = vmatpush1.msra.mxu0 0.0
    %119 = vmatprep.subr.mxu0 0.0
    %120 = vmatpush1.msra.mxu0 0.0
    %121 = vmatprep.subr.mxu0 0.0
    %122 = vmatpush1.msra.mxu0 0.0
    %123 = vmatprep.subr.mxu0 0.0
    %124 = vmatpush1.msra.mxu0 0.0
    %125 = vmatprep.subr.mxu0 0.0
    %126 = vmatpush1.msra.mxu0 0.0
    %127 = vmatprep.subr.mxu0 0.0
    %128 = vmatpush1.msra.mxu0 0.0
    %129 = vmatprep.subr.mxu0 0.0
    %130 = vmatpush1.msra.mxu0 0.0
    %131 = vmatprep.subr.mxu0 0.0
    %132 = vmatpush1.msra.mxu0 0.0
    %133 = vmatprep.subr.mxu0 0.0
    %134 = vmatpush1.msra.mxu0 0.0
    %135 = vmatprep.subr.mxu0 0.0
    %136 = vmatpush1.msra.mxu0 0.0
    %137 = vmatprep.subr.mxu0 0.0
    %138 = vmatpush1.msra.mxu0 0.0
    %139 = vmatprep.subr.mxu0 0.0
    %140 = vmatpush1.msra.mxu0 0.0
    %141 = vmatprep.subr.mxu0 0.0
    %142 = vmatpush1.msra.mxu0 0.0
    %143 = vmatprep.subr.mxu0 0.0
    %144 = vmatpush1.msra.mxu0 0.0
    %145 = vmatprep.subr.mxu0 0.0
    %146 = vmatpush1.msra.mxu0 0.0
    %147 = vmatprep.subr.mxu0 0.0
    %148 = vmatpush1.msra.mxu0 0.0
    %149 = vmatprep.mubr.f32.mxu0 0.0
    %150 = vmatmul.mubr.f32.gmra.mrb[0].mxu0 %v80
    %v151 = vpop.f32.mrb[0].mxu0
    %v152 = vadd.f32 %v77, %v151
    %v153 = vpop.f32.mrb[0].mxu0
    %154 = vmatprep.mubr.f32.mxu0 0.0
    %155 = vmatmul.mubr.f32.gmra.mrb[0].mxu0 %v83
    %v156 = vpop.f32.mrb[0].mxu0
    %v157 = vadd.f32 %v77, %v156
    %v158 = vpop.f32.mrb[0].mxu0
    %159 = vdwg.mxu0
    %v160 = vlaneseq
    %v161 = vshrl.u32 %v160, 7
    %v162 = vsub.s32 0, %v161
    %v163 = vrot.slane %v67, %v162
    %164 = vmatprep.subr.mxu0 0.0
    %165 = vmatpush1.msra.mxu0 %v63
    %166 = vmatprep.subr.mxu0 0.0
    %167 = vmatpush1.msra.mxu0 %v64
    %168 = vmatprep.subr.mxu0 0.0
    %169 = vmatpush1.msra.mxu0 %v65
    %170 = vmatprep.subr.mxu0 0.0
    %171 = vmatpush1.msra.mxu0 %v66
    %172 = vmatprep.subr.mxu0 0.0
    %173 = vmatpush1.msra.mxu0 0.0
    %174 = vmatprep.subr.mxu0 0.0
    %175 = vmatpush1.msra.mxu0 0.0
    %176 = vmatprep.subr.mxu0 0.0
    %177 = vmatpush1.msra.mxu0 0.0
    %178 = vmatprep.subr.mxu0 0.0
    %179 = vmatpush1.msra.mxu0 0.0
    %180 = vmatprep.subr.mxu0 0.0
    %181 = vmatpush1.msra.mxu0 0.0
    %182 = vmatprep.subr.mxu0 0.0
    %183 = vmatpush1.msra.mxu0 0.0
    %184 = vmatprep.subr.mxu0 0.0
    %185 = vmatpush1.msra.mxu0 0.0
    %186 = vmatprep.subr.mxu0 0.0
    %187 = vmatpush1.msra.mxu0 0.0
    %188 = vmatprep.subr.mxu0 0.0
    %189 = vmatpush1.msra.mxu0 0.0
    %190 = vmatprep.subr.mxu0 0.0
    %191 = vmatpush1.msra.mxu0 0.0
    %192 = vmatprep.subr.mxu0 0.0
    %193 = vmatpush1.msra.mxu0 0.0
    %194 = vmatprep.subr.mxu0 0.0
    %195 = vmatpush1.msra.mxu0 0.0
    %196 = vmatprep.subr.mxu0 0.0
    %197 = vmatpush1.msra.mxu0 0.0
    %198 = vmatprep.subr.mxu0 0.0
    %199 = vmatpush1.msra.mxu0 0.0
    %200 = vmatprep.subr.mxu0 0.0
    %201 = vmatpush1.msra.mxu0 0.0
    %202 = vmatprep.subr.mxu0 0.0
    %203 = vmatpush1.msra.mxu0 0.0
    %204 = vmatprep.subr.mxu0 0.0
    %205 = vmatpush1.msra.mxu0 0.0
    %206 = vmatprep.subr.mxu0 0.0
    %207 = vmatpush1.msra.mxu0 0.0
    %208 = vmatprep.subr.mxu0 0.0
    %209 = vmatpush1.msra.mxu0 0.0
    %210 = vmatprep.subr.mxu0 0.0
    %211 = vmatpush1.msra.mxu0 0.0
    %212 = vmatprep.subr.mxu0 0.0
    %213 = vmatpush1.msra.mxu0 0.0
    %214 = vmatprep.subr.mxu0 0.0
    %215 = vmatpush1.msra.mxu0 0.0
    %216 = vmatprep.subr.mxu0 0.0
    %217 = vmatpush1.msra.mxu0 0.0
    %218 = vmatprep.subr.mxu0 0.0
    %219 = vmatpush1.msra.mxu0 0.0
    %220 = vmatprep.subr.mxu0 0.0
    %221 = vmatpush1.msra.mxu0 0.0
    %222 = vmatprep.subr.mxu0 0.0
    %223 = vmatpush1.msra.mxu0 0.0
    %224 = vmatprep.subr.mxu0 0.0
    %225 = vmatpush1.msra.mxu0 0.0
    %226 = vmatprep.subr.mxu0 0.0
    %227 = vmatpush1.msra.mxu0 0.0
    %228 = vmatprep.mubr.f32.mxu0 0.0
    %229 = vmatmul.mubr.f32.gmra.mrb[0].mxu0 %v80
    %v230 = vpop.f32.mrb[0].mxu0
    %v231 = vadd.f32 %v163, %v230
    %v232 = vpop.f32.mrb[0].mxu0
    %233 = vmatprep.mubr.f32.mxu0 0.0
    %234 = vmatmul.mubr.f32.gmra.mrb[0].mxu0 %v83
    %v235 = vpop.f32.mrb[0].mxu0
    %v236 = vadd.f32 %v163, %v235
    %v237 = vpop.f32.mrb[0].mxu0
    %238 = vdwg.mxu0
    %v239 = vlaneseq
    %v240 = vshrl.u32 %v239, 7
    %v241 = vsub.s32 0, %v240
    %v242 = vrot.slane %v73, %v241
    %243 = vmatprep.subr.mxu0 0.0
    %244 = vmatpush1.msra.mxu0 %v69
    %245 = vmatprep.subr.mxu0 0.0
    %246 = vmatpush1.msra.mxu0 %v70
    %247 = vmatprep.subr.mxu0 0.0
    %248 = vmatpush1.msra.mxu0 %v71
    %249 = vmatprep.subr.mxu0 0.0
    %250 = vmatpush1.msra.mxu0 %v72
    %251 = vmatprep.subr.mxu0 0.0
    %252 = vmatpush1.msra.mxu0 0.0
    %253 = vmatprep.subr.mxu0 0.0
    %254 = vmatpush1.msra.mxu0 0.0
    %255 = vmatprep.subr.mxu0 0.0
    %256 = vmatpush1.msra.mxu0 0.0
    %257 = vmatprep.subr.mxu0 0.0
    %258 = vmatpush1.msra.mxu0 0.0
    %259 = vmatprep.subr.mxu0 0.0
    %260 = vmatpush1.msra.mxu0 0.0
    %261 = vmatprep.subr.mxu0 0.0
    %262 = vmatpush1.msra.mxu0 0.0
    %263 = vmatprep.subr.mxu0 0.0
    %264 = vmatpush1.msra.mxu0 0.0
    %265 = vmatprep.subr.mxu0 0.0
    %266 = vmatpush1.msra.mxu0 0.0
    %267 = vmatprep.subr.mxu0 0.0
    %268 = vmatpush1.msra.mxu0 0.0
    %269 = vmatprep.subr.mxu0 0.0
    %270 = vmatpush1.msra.mxu0 0.0
    %271 = vmatprep.subr.mxu0 0.0
    %272 = vmatpush1.msra.mxu0 0.0
    %273 = vmatprep.subr.mxu0 0.0
    %274 = vmatpush1.msra.mxu0 0.0
    %275 = vmatprep.subr.mxu0 0.0
    %276 = vmatpush1.msra.mxu0 0.0
    %277 = vmatprep.subr.mxu0 0.0
    %278 = vmatpush1.msra.mxu0 0.0
    %279 = vmatprep.subr.mxu0 0.0
    %280 = vmatpush1.msra.mxu0 0.0
    %281 = vmatprep.subr.mxu0 0.0
    %282 = vmatpush1.msra.mxu0 0.0
    %283 = vmatprep.subr.mxu0 0.0
    %284 = vmatpush1.msra.mxu0 0.0
    %285 = vmatprep.subr.mxu0 0.0
    %286 = vmatpush1.msra.mxu0 0.0
    %287 = vmatprep.subr.mxu0 0.0
    %288 = vmatpush1.msra.mxu0 0.0
    %289 = vmatprep.subr.mxu0 0.0
    %290 = vmatpush1.msra.mxu0 0.0
    %291 = vmatprep.subr.mxu0 0.0
    %292 = vmatpush1.msra.mxu0 0.0
    %293 = vmatprep.subr.mxu0 0.0
    %294 = vmatpush1.msra.mxu0 0.0
    %295 = vmatprep.subr.mxu0 0.0
    %296 = vmatpush1.msra.mxu0 0.0
    %297 = vmatprep.subr.mxu0 0.0
    %298 = vmatpush1.msra.mxu0 0.0
    %299 = vmatprep.subr.mxu0 0.0
    %300 = vmatpush1.msra.mxu0 0.0
    %301 = vmatprep.subr.mxu0 0.0
    %302 = vmatpush1.msra.mxu0 0.0
    %303 = vmatprep.subr.mxu0 0.0
    %304 = vmatpush1.msra.mxu0 0.0
    %305 = vmatprep.subr.mxu0 0.0
    %306 = vmatpush1.msra.mxu0 0.0
    %307 = vmatprep.mubr.f32.mxu0 0.0
    %308 = vmatmul.mubr.f32.gmra.mrb[0].mxu0 %v80
    %v309 = vpop.f32.mrb[0].mxu0
    %v310 = vadd.f32 %v242, %v309
    %v311 = vpop.f32.mrb[0].mxu0
    %312 = vmatprep.mubr.f32.mxu0 0.0
    %313 = vmatmul.mubr.f32.gmra.mrb[0].mxu0 %v83
    %v314 = vpop.f32.mrb[0].mxu0
    %v315 = vadd.f32 %v242, %v314
    %v316 = vpop.f32.mrb[0].mxu0
    %317 = vdwg.mxu0
    %vm318 = vcmask 130048
    %v320 = vsel %vm318, %v152, 0
    %v323 = vsel %vm318, %v157, 0
    %v326 = vsel %vm318, %v231, 0
    %v329 = vsel %vm318, %v236, 0
    %331 = vmatprep.subr.mxu0 0.0
    %332 = vmatpush1.xpose.msra.mxu0 %v326
    %333 = vmatprep.subr.mxu0 0.0
    %334 = vmatpush1.xpose.msra.mxu0 %v329
    %335 = vmatprep.subr.mxu0 0.0
    %336 = vmatpush1.xpose.msra.mxu0 0.0
    %337 = vmatprep.subr.mxu0 0.0
    %338 = vmatpush1.xpose.msra.mxu0 0.0
    %339 = vmatprep.subr.mxu0 0.0
    %340 = vmatpush1.xpose.msra.mxu0 0.0
    %341 = vmatprep.subr.mxu0 0.0
    %342 = vmatpush1.xpose.msra.mxu0 0.0
    %343 = vmatprep.subr.mxu0 0.0
    %344 = vmatpush1.xpose.msra.mxu0 0.0
    %345 = vmatprep.subr.mxu0 0.0
    %346 = vmatpush1.xpose.msra.mxu0 0.0
    %347 = vmatprep.subr.mxu0 0.0
    %348 = vmatpush1.xpose.msra.mxu0 0.0
    %349 = vmatprep.subr.mxu0 0.0
    %350 = vmatpush1.xpose.msra.mxu0 0.0
    %351 = vmatprep.subr.mxu0 0.0
    %352 = vmatpush1.xpose.msra.mxu0 0.0
    %353 = vmatprep.subr.mxu0 0.0
    %354 = vmatpush1.xpose.msra.mxu0 0.0
    %355 = vmatprep.subr.mxu0 0.0
    %356 = vmatpush1.xpose.msra.mxu0 0.0
    %357 = vmatprep.subr.mxu0 0.0
    %358 = vmatpush1.xpose.msra.mxu0 0.0
    %359 = vmatprep.subr.mxu0 0.0
    %360 = vmatpush1.xpose.msra.mxu0 0.0
    %361 = vmatprep.subr.mxu0 0.0
    %362 = vmatpush1.xpose.msra.mxu0 0.0
    %363 = vmatprep.subr.mxu0 0.0
    %364 = vmatpush1.xpose.msra.mxu0 0.0
    %365 = vmatprep.subr.mxu0 0.0
    %366 = vmatpush1.xpose.msra.mxu0 0.0
    %367 = vmatprep.subr.mxu0 0.0
    %368 = vmatpush1.xpose.msra.mxu0 0.0
    %369 = vmatprep.subr.mxu0 0.0
    %370 = vmatpush1.xpose.msra.mxu0 0.0
    %371 = vmatprep.subr.mxu0 0.0
    %372 = vmatpush1.xpose.msra.mxu0 0.0
    %373 = vmatprep.subr.mxu0 0.0
    %374 = vmatpush1.xpose.msra.mxu0 0.0
    %375 = vmatprep.subr.mxu0 0.0
    %376 = vmatpush1.xpose.msra.mxu0 0.0
    %377 = vmatprep.subr.mxu0 0.0
    %378 = vmatpush1.xpose.msra.mxu0 0.0
    %379 = vmatprep.subr.mxu0 0.0
    %380 = vmatpush1.xpose.msra.mxu0 0.0
    %381 = vmatprep.subr.mxu0 0.0
    %382 = vmatpush1.xpose.msra.mxu0 0.0
    %383 = vmatprep.subr.mxu0 0.0
    %384 = vmatpush1.xpose.msra.mxu0 0.0
    %385 = vmatprep.subr.mxu0 0.0
    %386 = vmatpush1.xpose.msra.mxu0 0.0
    %387 = vmatprep.subr.mxu0 0.0
    %388 = vmatpush1.xpose.msra.mxu0 0.0
    %389 = vmatprep.subr.mxu0 0.0
    %390 = vmatpush1.xpose.msra.mxu0 0.0
    %391 = vmatprep.subr.mxu0 0.0
    %392 = vmatpush1.xpose.msra.mxu0 0.0
    %393 = vmatprep.subr.mxu0 0.0
    %394 = vmatpush1.xpose.msra.mxu0 0.0
    %395 = vmatprep.mubr.f32.mxu0 0.0
    %396 = vmatmul.mubr.f32.gmra.mrb[0].mxu0 %v320
    %v397 = vpop.f32.mrb[0].mxu0
    %v398 = vadd.f32 0.0, %v397
    %v399 = vpop.f32.mrb[0].mxu0
    %400 = vmatprep.mubr.f32.mxu0 0.0
    %401 = vmatmul.mubr.f32.gmra.mrb[0].mxu0 %v323
    %v402 = vpop.f32.mrb[0].mxu0
    %v403 = vadd.f32 0.0, %v402
    %v404 = vpop.f32.mrb[0].mxu0
    %405 = vdwg.mxu0
    %v406 = vmul.f32 %v398, 0.25
    %v407 = vmul.f32 %v403, 0.25
    %v408 = vadd.f32 %v406, %v41
    %v409 = vadd.f32 %v407, %v42
    %v410 = vsel %vm318, %v408, -inf
    %411 = vmax.xlane.f32.xlu0 %v410
    %v412 = vpop.xlane.xlu0 %411
    %v413 = vsel %vm318, %v409, -inf
    %414 = vmax.xlane.f32.xlu0 %v413
    %v415 = vpop.xlane.xlu0 %414
    %v416 = vsub.f32 %v408, %v412
    %v417 = vsub.f32 %v409, %v415
    %v418 = vmul.f32 %v416, 1.442695
    %v419 = vpow.pop %v418
    %v420 = vmul.f32 %v417, 1.442695
    %v421 = vpow.pop %v420
    %v422 = vsel %vm318, %v419, 0.0
    %423 = vadd.xlane.f32.xlu0 %v422
    %v424 = vpop.xlane.xlu0 %423
    %v425 = vsel %vm318, %v421, 0.0
    %426 = vadd.xlane.f32.xlu0 %v425
    %v427 = vpop.xlane.xlu0 %426
    %v428 = vrcp.pop %v424
    %v429 = vrcp.pop %v427
    %v430 = vmul.f32 %v419, %v428
    %v431 = vmul.f32 %v421, %v429
    %v433 = vsel %vm318, %v430, 0
    %v436 = vsel %vm318, %v431, 0
    %438 = vmatprep.subr.mxu0 0.0
    %439 = vmatpush1.msra.mxu0 %v310
    %440 = vmatprep.subr.mxu0 0.0
    %441 = vmatpush1.msra.mxu0 %v315
    %442 = vmatprep.subr.mxu0 0.0
    %443 = vmatpush1.msra.mxu0 0.0
    %444 = vmatprep.subr.mxu0 0.0
    %445 = vmatpush1.msra.mxu0 0.0
    %446 = vmatprep.subr.mxu0 0.0
    %447 = vmatpush1.msra.mxu0 0.0
    %448 = vmatprep.subr.mxu0 0.0
    %449 = vmatpush1.msra.mxu0 0.0
    %450 = vmatprep.subr.mxu0 0.0
    %451 = vmatpush1.msra.mxu0 0.0
    %452 = vmatprep.subr.mxu0 0.0
    %453 = vmatpush1.msra.mxu0 0.0
    %454 = vmatprep.subr.mxu0 0.0
    %455 = vmatpush1.msra.mxu0 0.0
    %456 = vmatprep.subr.mxu0 0.0
    %457 = vmatpush1.msra.mxu0 0.0
    %458 = vmatprep.subr.mxu0 0.0
    %459 = vmatpush1.msra.mxu0 0.0
    %460 = vmatprep.subr.mxu0 0.0
    %461 = vmatpush1.msra.mxu0 0.0
    %462 = vmatprep.subr.mxu0 0.0
    %463 = vmatpush1.msra.mxu0 0.0
    %464 = vmatprep.subr.mxu0 0.0
    %465 = vmatpush1.msra.mxu0 0.0
    %466 = vmatprep.subr.mxu0 0.0
    %467 = vmatpush1.msra.mxu0 0.0
    %468 = vmatprep.subr.mxu0 0.0
    %469 = vmatpush1.msra.mxu0 0.0
    %470 = vmatprep.subr.mxu0 0.0
    %471 = vmatpush1.msra.mxu0 0.0
    %472 = vmatprep.subr.mxu0 0.0
    %473 = vmatpush1.msra.mxu0 0.0
    %474 = vmatprep.subr.mxu0 0.0
    %475 = vmatpush1.msra.mxu0 0.0
    %476 = vmatprep.subr.mxu0 0.0
    %477 = vmatpush1.msra.mxu0 0.0
    %478 = vmatprep.subr.mxu0 0.0
    %479 = vmatpush1.msra.mxu0 0.0
    %480 = vmatprep.subr.mxu0 0.0
    %481 = vmatpush1.msra.mxu0 0.0
    %482 = vmatprep.subr.mxu0 0.0
    %483 = vmatpush1.msra.mxu0 0.0
    %484 = vmatprep.subr.mxu0 0.0
    %485 = vmatpush1.msra.mxu0 0.0
    %486 = vmatprep.subr.mxu0 0.0
    %487 = vmatpush1.msra.mxu0 0.0
    %488 = vmatprep.subr.mxu0 0.0
    %489 = vmatpush1.msra.mxu0 0.0
    %490 = vmatprep.subr.mxu0 0.0
    %491 = vmatpush1.msra.mxu0 0.0
    %492 = vmatprep.subr.mxu0 0.0
    %493 = vmatpush1.msra.mxu0 0.0
    %494 = vmatprep.subr.mxu0 0.0
    %495 = vmatpush1.msra.mxu0 0.0
    %496 = vmatprep.subr.mxu0 0.0
    %497 = vmatpush1.msra.mxu0 0.0
    %498 = vmatprep.subr.mxu0 0.0
    %499 = vmatpush1.msra.mxu0 0.0
    %500 = vmatprep.subr.mxu0 0.0
    %501 = vmatpush1.msra.mxu0 0.0
    %502 = vmatprep.mubr.f32.mxu0 0.0
    %503 = vmatmul.mubr.f32.gmra.mrb[0].mxu0 %v433
    %v504 = vpop.f32.mrb[0].mxu0
    %v505 = vadd.f32 0.0, %v504
    %v506 = vpop.f32.mrb[0].mxu0
    %507 = vmatprep.mubr.f32.mxu0 0.0
    %508 = vmatmul.mubr.f32.gmra.mrb[0].mxu0 %v436
    %v509 = vpop.f32.mrb[0].mxu0
    %v510 = vadd.f32 0.0, %v509
    %v511 = vpop.f32.mrb[0].mxu0
    %512 = vdwg.mxu0
    %v513 = vld [vmem:[%s4] sm:$0xff]
    %v514 = vld [vmem:[%s4 + $0x8] sm:$0xff]
    %s515 = scalar_lea.vmem %s3, 40
    %v516 = vld [vmem:[%s515] sm:$0xff]
    %v517 = vld [vmem:[%s515 + $0x8] sm:$0xff]
    %v518 = vld [vmem:[%s515 + $0x10] sm:$0xff]
    %v519 = vld [vmem:[%s515 + $0x18] sm:$0xff]
    %v520 = vld [vmem:[%s515 + $0x20] sm:$0x1]
    %s521 = scalar_lea.vmem %s3, 120
    %v522 = vld [vmem:[%s521] sm:$0xff]
    %v523 = vld [vmem:[%s521 + $0x8] sm:$0xff]
    %v524 = vld [vmem:[%s521 + $0x10] sm:$0xff]
    %v525 = vld [vmem:[%s521 + $0x18] sm:$0xff]
    %v526 = vld [vmem:[%s521 + $0x20] sm:$0x1]
    %s527 = scalar_lea.vmem %s3, 200
    %v528 = vld [vmem:[%s527] sm:$0xff]
    %v529 = vld [vmem:[%s527 + $0x8] sm:$0xff]
    %v530 = vld [vmem:[%s527 + $0x10] sm:$0xff]
    %v531 = vld [vmem:[%s527 + $0x18] sm:$0xff]
    %v532 = vld [vmem:[%s527 + $0x20] sm:$0x1]
    %v533 = vlaneseq
    %v534 = vshrl.u32 %v533, 7
    %v535 = vsub.s32 0, %v534
    %v536 = vrot.slane %v520, %v535
    %537 = vmatprep.subr.mxu0 0.0
    %538 = vmatpush1.msra.mxu0 %v516
    %539 = vmatprep.subr.mxu0 0.0
    %540 = vmatpush1.msra.mxu0 %v517
    %541 = vmatprep.subr.mxu0 0.0
    %542 = vmatpush1.msra.mxu0 %v518
    %543 = vmatprep.subr.mxu0 0.0
    %544 = vmatpush1.msra.mxu0 %v519
    %545 = vmatprep.subr.mxu0 0.0
    %546 = vmatpush1.msra.mxu0 0.0
    %547 = vmatprep.subr.mxu0 0.0
    %548 = vmatpush1.msra.mxu0 0.0
    %549 = vmatprep.subr.mxu0 0.0
    %550 = vmatpush1.msra.mxu0 0.0
    %551 = vmatprep.subr.mxu0 0.0
    %552 = vmatpush1.msra.mxu0 0.0
    %553 = vmatprep.subr.mxu0 0.0
    %554 = vmatpush1.msra.mxu0 0.0
    %555 = vmatprep.subr.mxu0 0.0
    %556 = vmatpush1.msra.mxu0 0.0
    %557 = vmatprep.subr.mxu0 0.0
    %558 = vmatpush1.msra.mxu0 0.0
    %559 = vmatprep.subr.mxu0 0.0
    %560 = vmatpush1.msra.mxu0 0.0
    %561 = vmatprep.subr.mxu0 0.0
    %562 = vmatpush1.msra.mxu0 0.0
    %563 = vmatprep.subr.mxu0 0.0
    %564 = vmatpush1.msra.mxu0 0.0
    %565 = vmatprep.subr.mxu0 0.0
    %566 = vmatpush1.msra.mxu0 0.0
    %567 = vmatprep.subr.mxu0 0.0
    %568 = vmatpush1.msra.mxu0 0.0
    %569 = vmatprep.subr.mxu0 0.0
    %570 = vmatpush1.msra.mxu0 0.0
    %571 = vmatprep.subr.mxu0 0.0
    %572 = vmatpush1.msra.mxu0 0.0
    %573 = vmatprep.subr.mxu0 0.0
    %574 = vmatpush1.msra.mxu0 0.0
    %575 = vmatprep.subr.mxu0 0.0
    %576 = vmatpush1.msra.mxu0 0.0
    %577 = vmatprep.subr.mxu0 0.0
    %578 = vmatpush1.msra.mxu0 0.0
    %579 = vmatprep.subr.mxu0 0.0
    %580 = vmatpush1.msra.mxu0 0.0
    %581 = vmatprep.subr.mxu0 0.0
    %582 = vmatpush1.msra.mxu0 0.0
    %583 = vmatprep.subr.mxu0 0.0
    %584 = vmatpush1.msra.mxu0 0.0
    %585 = vmatprep.subr.mxu0 0.0
    %586 = vmatpush1.msra.mxu0 0.0
    %587 = vmatprep.subr.mxu0 0.0
    %588 = vmatpush1.msra.mxu0 0.0
    %589 = vmatprep.subr.mxu0 0.0
    %590 = vmatpush1.msra.mxu0 0.0
    %591 = vmatprep.subr.mxu0 0.0
    %592 = vmatpush1.msra.mxu0 0.0
    %593 = vmatprep.subr.mxu0 0.0
    %594 = vmatpush1.msra.mxu0 0.0
    %595 = vmatprep.subr.mxu0 0.0
    %596 = vmatpush1.msra.mxu0 0.0
    %597 = vmatprep.subr.mxu0 0.0
    %598 = vmatpush1.msra.mxu0 0.0
    %599 = vmatprep.subr.mxu0 0.0
    %600 = vmatpush1.msra.mxu0 0.0
    %601 = vmatprep.mubr.f32.mxu0 0.0
    %602 = vmatmul.mubr.f32.gmra.mrb[0].mxu0 %v80
    %v603 = vpop.f32.mrb[0].mxu0
    %v604 = vadd.f32 %v536, %v603
    %v605 = vpop.f32.mrb[0].mxu0
    %606 = vmatprep.mubr.f32.mxu0 0.0
    %607 = vmatmul.mubr.f32.gmra.mrb[0].mxu0 %v83
    %v608 = vpop.f32.mrb[0].mxu0
    %v609 = vadd.f32 %v536, %v608
    %v610 = vpop.f32.mrb[0].mxu0
    %611 = vdwg.mxu0
    %v612 = vlaneseq
    %v613 = vshrl.u32 %v612, 7
    %v614 = vsub.s32 0, %v613
    %v615 = vrot.slane %v526, %v614
    %616 = vmatprep.subr.mxu0 0.0
    %617 = vmatpush1.msra.mxu0 %v522
    %618 = vmatprep.subr.mxu0 0.0
    %619 = vmatpush1.msra.mxu0 %v523
    %620 = vmatprep.subr.mxu0 0.0
    %621 = vmatpush1.msra.mxu0 %v524
    %622 = vmatprep.subr.mxu0 0.0
    %623 = vmatpush1.msra.mxu0 %v525
    %624 = vmatprep.subr.mxu0 0.0
    %625 = vmatpush1.msra.mxu0 0.0
    %626 = vmatprep.subr.mxu0 0.0
    %627 = vmatpush1.msra.mxu0 0.0
    %628 = vmatprep.subr.mxu0 0.0
    %629 = vmatpush1.msra.mxu0 0.0
    %630 = vmatprep.subr.mxu0 0.0
    %631 = vmatpush1.msra.mxu0 0.0
    %632 = vmatprep.subr.mxu0 0.0
    %633 = vmatpush1.msra.mxu0 0.0
    %634 = vmatprep.subr.mxu0 0.0
    %635 = vmatpush1.msra.mxu0 0.0
    %636 = vmatprep.subr.mxu0 0.0
    %637 = vmatpush1.msra.mxu0 0.0
    %638 = vmatprep.subr.mxu0 0.0
    %639 = vmatpush1.msra.mxu0 0.0
    %640 = vmatprep.subr.mxu0 0.0
    %641 = vmatpush1.msra.mxu0 0.0
    %642 = vmatprep.subr.mxu0 0.0
    %643 = vmatpush1.msra.mxu0 0.0
    %644 = vmatprep.subr.mxu0 0.0
    %645 = vmatpush1.msra.mxu0 0.0
    %646 = vmatprep.subr.mxu0 0.0
    %647 = vmatpush1.msra.mxu0 0.0
    %648 = vmatprep.subr.mxu0 0.0
    %649 = vmatpush1.msra.mxu0 0.0
    %650 = vmatprep.subr.mxu0 0.0
    %651 = vmatpush1.msra.mxu0 0.0
    %652 = vmatprep.subr.mxu0 0.0
    %653 = vmatpush1.msra.mxu0 0.0
    %654 = vmatprep.subr.mxu0 0.0
    %655 = vmatpush1.msra.mxu0 0.0
    %656 = vmatprep.subr.mxu0 0.0
    %657 = vmatpush1.msra.mxu0 0.0
    %658 = vmatprep.subr.mxu0 0.0
    %659 = vmatpush1.msra.mxu0 0.0
    %660 = vmatprep.subr.mxu0 0.0
    %661 = vmatpush1.msra.mxu0 0.0
    %662 = vmatprep.subr.mxu0 0.0
    %663 = vmatpush1.msra.mxu0 0.0
    %664 = vmatprep.subr.mxu0 0.0
    %665 = vmatpush1.msra.mxu0 0.0
    %666 = vmatprep.subr.mxu0 0.0
    %667 = vmatpush1.msra.mxu0 0.0
    %668 = vmatprep.subr.mxu0 0.0
    %669 = vmatpush1.msra.mxu0 0.0
    %670 = vmatprep.subr.mxu0 0.0
    %671 = vmatpush1.msra.mxu0 0.0
    %672 = vmatprep.subr.mxu0 0.0
    %673 = vmatpush1.msra.mxu0 0.0
    %674 = vmatprep.subr.mxu0 0.0
    %675 = vmatpush1.msra.mxu0 0.0
    %676 = vmatprep.subr.mxu0 0.0
    %677 = vmatpush1.msra.mxu0 0.0
    %678 = vmatprep.subr.mxu0 0.0
    %679 = vmatpush1.msra.mxu0 0.0
    %680 = vmatprep.mubr.f32.mxu0 0.0
    %681 = vmatmul.mubr.f32.gmra.mrb[0].mxu0 %v80
    %v682 = vpop.f32.mrb[0].mxu0
    %v683 = vadd.f32 %v615, %v682
    %v684 = vpop.f32.mrb[0].mxu0
    %685 = vmatprep.mubr.f32.mxu0 0.0
    %686 = vmatmul.mubr.f32.gmra.mrb[0].mxu0 %v83
    %v687 = vpop.f32.mrb[0].mxu0
    %v688 = vadd.f32 %v615, %v687
    %v689 = vpop.f32.mrb[0].mxu0
    %690 = vdwg.mxu0
    %v691 = vlaneseq
    %v692 = vshrl.u32 %v691, 7
    %v693 = vsub.s32 0, %v692
    %v694 = vrot.slane %v532, %v693
    %695 = vmatprep.subr.mxu0 0.0
    %696 = vmatpush1.msra.mxu0 %v528
    %697 = vmatprep.subr.mxu0 0.0
    %698 = vmatpush1.msra.mxu0 %v529
    %699 = vmatprep.subr.mxu0 0.0
    %700 = vmatpush1.msra.mxu0 %v530
    %701 = vmatprep.subr.mxu0 0.0
    %702 = vmatpush1.msra.mxu0 %v531
    %703 = vmatprep.subr.mxu0 0.0
    %704 = vmatpush1.msra.mxu0 0.0
    %705 = vmatprep.subr.mxu0 0.0
    %706 = vmatpush1.msra.mxu0 0.0
    %707 = vmatprep.subr.mxu0 0.0
    %708 = vmatpush1.msra.mxu0 0.0
    %709 = vmatprep.subr.mxu0 0.0
    %710 = vmatpush1.msra.mxu0 0.0
    %711 = vmatprep.subr.mxu0 0.0
    %712 = vmatpush1.msra.mxu0 0.0
    %713 = vmatprep.subr.mxu0 0.0
    %714 = vmatpush1.msra.mxu0 0.0
    %715 = vmatprep.subr.mxu0 0.0
    %716 = vmatpush1.msra.mxu0 0.0
    %717 = vmatprep.subr.mxu0 0.0
    %718 = vmatpush1.msra.mxu0 0.0
    %719 = vmatprep.subr.mxu0 0.0
    %720 = vmatpush1.msra.mxu0 0.0
    %721 = vmatprep.subr.mxu0 0.0
    %722 = vmatpush1.msra.mxu0 0.0
    %723 = vmatprep.subr.mxu0 0.0
    %724 = vmatpush1.msra.mxu0 0.0
    %725 = vmatprep.subr.mxu0 0.0
    %726 = vmatpush1.msra.mxu0 0.0
    %727 = vmatprep.subr.mxu0 0.0
    %728 = vmatpush1.msra.mxu0 0.0
    %729 = vmatprep.subr.mxu0 0.0
    %730 = vmatpush1.msra.mxu0 0.0
    %731 = vmatprep.subr.mxu0 0.0
    %732 = vmatpush1.msra.mxu0 0.0
    %733 = vmatprep.subr.mxu0 0.0
    %734 = vmatpush1.msra.mxu0 0.0
    %735 = vmatprep.subr.mxu0 0.0
    %736 = vmatpush1.msra.mxu0 0.0
    %737 = vmatprep.subr.mxu0 0.0
    %738 = vmatpush1.msra.mxu0 0.0
    %739 = vmatprep.subr.mxu0 0.0
    %740 = vmatpush1.msra.mxu0 0.0
    %741 = vmatprep.subr.mxu0 0.0
    %742 = vmatpush1.msra.mxu0 0.0
    %743 = vmatprep.subr.mxu0 0.0
    %744 = vmatpush1.msra.mxu0 0.0
    %745 = vmatprep.subr.mxu0 0.0
    %746 = vmatpush1.msra.mxu0 0.0
    %747 = vmatprep.subr.mxu0 0.0
    %748 = vmatpush1.msra.mxu0 0.0
    %749 = vmatprep.subr.mxu0 0.0
    %750 = vmatpush1.msra.mxu0 0.0
    %751 = vmatprep.subr.mxu0 0.0
    %752 = vmatpush1.msra.mxu0 0.0
    %753 = vmatprep.subr.mxu0 0.0
    %754 = vmatpush1.msra.mxu0 0.0
    %755 = vmatprep.subr.mxu0 0.0
    %756 = vmatpush1.msra.mxu0 0.0
    %757 = vmatprep.subr.mxu0 0.0
    %758 = vmatpush1.msra.mxu0 0.0
    %759 = vmatprep.mubr.f32.mxu0 0.0
    %760 = vmatmul.mubr.f32.gmra.mrb[0].mxu0 %v80
    %v761 = vpop.f32.mrb[0].mxu0
    %v762 = vadd.f32 %v694, %v761
    %v763 = vpop.f32.mrb[0].mxu0
    %764 = vmatprep.mubr.f32.mxu0 0.0
    %765 = vmatmul.mubr.f32.gmra.mrb[0].mxu0 %v83
    %v766 = vpop.f32.mrb[0].mxu0
    %v767 = vadd.f32 %v694, %v766
    %v768 = vpop.f32.mrb[0].mxu0
    %769 = vdwg.mxu0
    %v771 = vsel %vm318, %v604, 0
    %v774 = vsel %vm318, %v609, 0
    %v777 = vsel %vm318, %v683, 0
    %v780 = vsel %vm318, %v688, 0
    %782 = vmatprep.subr.mxu0 0.0
    %783 = vmatpush1.xpose.msra.mxu0 %v777
    %784 = vmatprep.subr.mxu0 0.0
    %785 = vmatpush1.xpose.msra.mxu0 %v780
    %786 = vmatprep.subr.mxu0 0.0
    %787 = vmatpush1.xpose.msra.mxu0 0.0
    %788 = vmatprep.subr.mxu0 0.0
    %789 = vmatpush1.xpose.msra.mxu0 0.0
    %790 = vmatprep.subr.mxu0 0.0
    %791 = vmatpush1.xpose.msra.mxu0 0.0
    %792 = vmatprep.subr.mxu0 0.0
    %793 = vmatpush1.xpose.msra.mxu0 0.0
    %794 = vmatprep.subr.mxu0 0.0
    %795 = vmatpush1.xpose.msra.mxu0 0.0
    %796 = vmatprep.subr.mxu0 0.0
    %797 = vmatpush1.xpose.msra.mxu0 0.0
    %798 = vmatprep.subr.mxu0 0.0
    %799 = vmatpush1.xpose.msra.mxu0 0.0
    %800 = vmatprep.subr.mxu0 0.0
    %801 = vmatpush1.xpose.msra.mxu0 0.0
    %802 = vmatprep.subr.mxu0 0.0
    %803 = vmatpush1.xpose.msra.mxu0 0.0
    %804 = vmatprep.subr.mxu0 0.0
    %805 = vmatpush1.xpose.msra.mxu0 0.0
    %806 = vmatprep.subr.mxu0 0.0
    %807 = vmatpush1.xpose.msra.mxu0 0.0
    %808 = vmatprep.subr.mxu0 0.0
    %809 = vmatpush1.xpose.msra.mxu0 0.0
    %810 = vmatprep.subr.mxu0 0.0
    %811 = vmatpush1.xpose.msra.mxu0 0.0
    %812 = vmatprep.subr.mxu0 0.0
    %813 = vmatpush1.xpose.msra.mxu0 0.0
    %814 = vmatprep.subr.mxu0 0.0
    %815 = vmatpush1.xpose.msra.mxu0 0.0
    %816 = vmatprep.subr.mxu0 0.0
    %817 = vmatpush1.xpose.msra.mxu0 0.0
    %818 = vmatprep.subr.mxu0 0.0
    %819 = vmatpush1.xpose.msra.mxu0 0.0
    %820 = vmatprep.subr.mxu0 0.0
    %821 = vmatpush1.xpose.msra.mxu0 0.0
    %822 = vmatprep.subr.mxu0 0.0
    %823 = vmatpush1.xpose.msra.mxu0 0.0
    %824 = vmatprep.subr.mxu0 0.0
    %825 = vmatpush1.xpose.msra.mxu0 0.0
    %826 = vmatprep.subr.mxu0 0.0
    %827 = vmatpush1.xpose.msra.mxu0 0.0
    %828 = vmatprep.subr.mxu0 0.0
    %829 = vmatpush1.xpose.msra.mxu0 0.0
    %830 = vmatprep.subr.mxu0 0.0
    %831 = vmatpush1.xpose.msra.mxu0 0.0
    %832 = vmatprep.subr.mxu0 0.0
    %833 = vmatpush1.xpose.msra.mxu0 0.0
    %834 = vmatprep.subr.mxu0 0.0
    %835 = vmatpush1.xpose.msra.mxu0 0.0
    %836 = vmatprep.subr.mxu0 0.0
    %837 = vmatpush1.xpose.msra.mxu0 0.0
    %838 = vmatprep.subr.mxu0 0.0
    %839 = vmatpush1.xpose.msra.mxu0 0.0
    %840 = vmatprep.subr.mxu0 0.0
    %841 = vmatpush1.xpose.msra.mxu0 0.0
    %842 = vmatprep.subr.mxu0 0.0
    %843 = vmatpush1.xpose.msra.mxu0 0.0
    %844 = vmatprep.subr.mxu0 0.0
    %845 = vmatpush1.xpose.msra.mxu0 0.0
    %846 = vmatprep.mubr.f32.mxu0 0.0
    %847 = vmatmul.mubr.f32.gmra.mrb[0].mxu0 %v771
    %v848 = vpop.f32.mrb[0].mxu0
    %v849 = vadd.f32 0.0, %v848
    %v850 = vpop.f32.mrb[0].mxu0
    %851 = vmatprep.mubr.f32.mxu0 0.0
    %852 = vmatmul.mubr.f32.gmra.mrb[0].mxu0 %v774
    %v853 = vpop.f32.mrb[0].mxu0
    %v854 = vadd.f32 0.0, %v853
    %v855 = vpop.f32.mrb[0].mxu0
    %856 = vdwg.mxu0
    %v857 = vmul.f32 %v849, 0.25
    %v858 = vmul.f32 %v854, 0.25
    %v859 = vadd.f32 %v857, %v41
    %v860 = vadd.f32 %v858, %v42
    %v861 = vsel %vm318, %v859, -inf
    %862 = vmax.xlane.f32.xlu0 %v861
    %v863 = vpop.xlane.xlu0 %862
    %v864 = vsel %vm318, %v860, -inf
    %865 = vmax.xlane.f32.xlu0 %v864
    %v866 = vpop.xlane.xlu0 %865
    %v867 = vsub.f32 %v859, %v863
    %v868 = vsub.f32 %v860, %v866
    %v869 = vmul.f32 %v867, 1.442695
    %v870 = vpow.pop %v869
    %v871 = vmul.f32 %v868, 1.442695
    %v872 = vpow.pop %v871
    %v873 = vsel %vm318, %v870, 0.0
    %874 = vadd.xlane.f32.xlu0 %v873
    %v875 = vpop.xlane.xlu0 %874
    %v876 = vsel %vm318, %v872, 0.0
    %877 = vadd.xlane.f32.xlu0 %v876
    %v878 = vpop.xlane.xlu0 %877
    %v879 = vrcp.pop %v875
    %v880 = vrcp.pop %v878
    %v881 = vmul.f32 %v870, %v879
    %v882 = vmul.f32 %v872, %v880
    %v884 = vsel %vm318, %v881, 0
    %v887 = vsel %vm318, %v882, 0
    %889 = vmatprep.subr.mxu0 0.0
    %890 = vmatpush1.msra.mxu0 %v762
    %891 = vmatprep.subr.mxu0 0.0
    %892 = vmatpush1.msra.mxu0 %v767
    %893 = vmatprep.subr.mxu0 0.0
    %894 = vmatpush1.msra.mxu0 0.0
    %895 = vmatprep.subr.mxu0 0.0
    %896 = vmatpush1.msra.mxu0 0.0
    %897 = vmatprep.subr.mxu0 0.0
    %898 = vmatpush1.msra.mxu0 0.0
    %899 = vmatprep.subr.mxu0 0.0
    %900 = vmatpush1.msra.mxu0 0.0
    %901 = vmatprep.subr.mxu0 0.0
    %902 = vmatpush1.msra.mxu0 0.0
    %903 = vmatprep.subr.mxu0 0.0
    %904 = vmatpush1.msra.mxu0 0.0
    %905 = vmatprep.subr.mxu0 0.0
    %906 = vmatpush1.msra.mxu0 0.0
    %907 = vmatprep.subr.mxu0 0.0
    %908 = vmatpush1.msra.mxu0 0.0
    %909 = vmatprep.subr.mxu0 0.0
    %910 = vmatpush1.msra.mxu0 0.0
    %911 = vmatprep.subr.mxu0 0.0
    %912 = vmatpush1.msra.mxu0 0.0
    %913 = vmatprep.subr.mxu0 0.0
    %914 = vmatpush1.msra.mxu0 0.0
    %915 = vmatprep.subr.mxu0 0.0
    %916 = vmatpush1.msra.mxu0 0.0
    %917 = vmatprep.subr.mxu0 0.0
    %918 = vmatpush1.msra.mxu0 0.0
    %919 = vmatprep.subr.mxu0 0.0
    %920 = vmatpush1.msra.mxu0 0.0
    %921 = vmatprep.subr.mxu0 0.0
    %922 = vmatpush1.msra.mxu0 0.0
    %923 = vmatprep.subr.mxu0 0.0
    %924 = vmatpush1.msra.mxu0 0.0
    %925 = vmatprep.subr.mxu0 0.0
    %926 = vmatpush1.msra.mxu0 0.0
    %927 = vmatprep.subr.mxu0 0.0
    %928 = vmatpush1.msra.mxu0 0.0
    %929 = vmatprep.subr.mxu0 0.0
    %930 = vmatpush1.msra.mxu0 0.0
    %931 = vmatprep.subr.mxu0 0.0
    %932 = vmatpush1.msra.mxu0 0.0
    %933 = vmatprep.subr.mxu0 0.0
    %934 = vmatpush1.msra.mxu0 0.0
    %935 = vmatprep.subr.mxu0 0.0
    %936 = vmatpush1.msra.mxu0 0.0
    %937 = vmatprep.subr.mxu0 0.0
    %938 = vmatpush1.msra.mxu0 0.0
    %939 = vmatprep.subr.mxu0 0.0
    %940 = vmatpush1.msra.mxu0 0.0
    %941 = vmatprep.subr.mxu0 0.0
    %942 = vmatpush1.msra.mxu0 0.0
    %943 = vmatprep.subr.mxu0 0.0
    %944 = vmatpush1.msra.mxu0 0.0
    %945 = vmatprep.subr.mxu0 0.0
    %946 = vmatpush1.msra.mxu0 0.0
    %947 = vmatprep.subr.mxu0 0.0
    %948 = vmatpush1.msra.mxu0 0.0
    %949 = vmatprep.subr.mxu0 0.0
    %950 = vmatpush1.msra.mxu0 0.0
    %951 = vmatprep.subr.mxu0 0.0
    %952 = vmatpush1.msra.mxu0 0.0
    %953 = vmatprep.mubr.f32.mxu0 0.0
    %954 = vmatmul.mubr.f32.gmra.mrb[0].mxu0 %v884
    %v955 = vpop.f32.mrb[0].mxu0
    %v956 = vadd.f32 0.0, %v955
    %v957 = vpop.f32.mrb[0].mxu0
    %958 = vmatprep.mubr.f32.mxu0 0.0
    %959 = vmatmul.mubr.f32.gmra.mrb[0].mxu0 %v887
    %v960 = vpop.f32.mrb[0].mxu0
    %v961 = vadd.f32 0.0, %v960
    %v962 = vpop.f32.mrb[0].mxu0
    %963 = vdwg.mxu0
    %s964 = scalar_lea.vmem %s4, 16
    %v965 = vld [vmem:[%s964] sm:$0xff]
    %v966 = vld [vmem:[%s964 + $0x8] sm:$0xff]
    %v968 = vsel %vm318, %v956, 0
    %v971 = vsel %vm318, %v961, 0
    %973 = vmatprep.subr.mxu0 0.0
    %974 = vmatpush1.msra.mxu0 %v965
    %975 = vmatprep.subr.mxu0 0.0
    %976 = vmatpush1.msra.mxu0 %v966
    %977 = vmatprep.subr.mxu0 0.0
    %978 = vmatpush1.msra.mxu0 0.0
    %979 = vmatprep.subr.mxu0 0.0
    %980 = vmatpush1.msra.mxu0 0.0
    %981 = vmatprep.subr.mxu0 0.0
    %982 = vmatpush1.msra.mxu0 0.0
    %983 = vmatprep.subr.mxu0 0.0
    %984 = vmatpush1.msra.mxu0 0.0
    %985 = vmatprep.subr.mxu0 0.0
    %986 = vmatpush1.msra.mxu0 0.0
    %987 = vmatprep.subr.mxu0 0.0
    %988 = vmatpush1.msra.mxu0 0.0
    %989 = vmatprep.subr.mxu0 0.0
    %990 = vmatpush1.msra.mxu0 0.0
    %991 = vmatprep.subr.mxu0 0.0
    %992 = vmatpush1.msra.mxu0 0.0
    %993 = vmatprep.subr.mxu0 0.0
    %994 = vmatpush1.msra.mxu0 0.0
    %995 = vmatprep.subr.mxu0 0.0
    %996 = vmatpush1.msra.mxu0 0.0
    %997 = vmatprep.subr.mxu0 0.0
    %998 = vmatpush1.msra.mxu0 0.0
    %999 = vmatprep.subr.mxu0 0.0
    %1000 = vmatpush1.msra.mxu0 0.0
    %1001 = vmatprep.subr.mxu0 0.0
    %1002 = vmatpush1.msra.mxu0 0.0
    %1003 = vmatprep.subr.mxu0 0.0
    %1004 = vmatpush1.msra.mxu0 0.0
    %1005 = vmatprep.subr.mxu0 0.0
    %1006 = vmatpush1.msra.mxu0 0.0
    %1007 = vmatprep.subr.mxu0 0.0
    %1008 = vmatpush1.msra.mxu0 0.0
    %1009 = vmatprep.subr.mxu0 0.0
    %1010 = vmatpush1.msra.mxu0 0.0
    %1011 = vmatprep.subr.mxu0 0.0
    %1012 = vmatpush1.msra.mxu0 0.0
    %1013 = vmatprep.subr.mxu0 0.0
    %1014 = vmatpush1.msra.mxu0 0.0
    %1015 = vmatprep.subr.mxu0 0.0
    %1016 = vmatpush1.msra.mxu0 0.0
    %1017 = vmatprep.subr.mxu0 0.0
    %1018 = vmatpush1.msra.mxu0 0.0
    %1019 = vmatprep.subr.mxu0 0.0
    %1020 = vmatpush1.msra.mxu0 0.0
    %1021 = vmatprep.subr.mxu0 0.0
    %1022 = vmatpush1.msra.mxu0 0.0
    %1023 = vmatprep.subr.mxu0 0.0
    %1024 = vmatpush1.msra.mxu0 0.0
    %1025 = vmatprep.subr.mxu0 0.0
    %1026 = vmatpush1.msra.mxu0 0.0
    %1027 = vmatprep.subr.mxu0 0.0
    %1028 = vmatpush1.msra.mxu0 0.0
    %1029 = vmatprep.subr.mxu0 0.0
    %1030 = vmatpush1.msra.mxu0 0.0
    %1031 = vmatprep.subr.mxu0 0.0
    %1032 = vmatpush1.msra.mxu0 0.0
    %1033 = vmatprep.subr.mxu0 0.0
    %1034 = vmatpush1.msra.mxu0 0.0
    %1035 = vmatprep.subr.mxu0 0.0
    %1036 = vmatpush1.msra.mxu0 0.0
    %1037 = vmatprep.mubr.f32.mxu0 0.0
    %1038 = vmatmul.mubr.f32.gmra.mrb[0].mxu0 %v968
    %v1039 = vpop.f32.mrb[0].mxu0
    %v1040 = vadd.f32 0.0, %v1039
    %v1041 = vpop.f32.mrb[0].mxu0
    %1042 = vmatprep.mubr.f32.mxu0 0.0
    %1043 = vmatmul.mubr.f32.gmra.mrb[0].mxu0 %v971
    %v1044 = vpop.f32.mrb[0].mxu0
    %v1045 = vadd.f32 0.0, %v1044
    %v1046 = vpop.f32.mrb[0].mxu0
    %1047 = vdwg.mxu0
    %v1049 = vsel %vm318, %v505, 0
    %v1052 = vsel %vm318, %v510, 0
    %1054 = vmatprep.subr.mxu0 0.0
    %1055 = vmatpush1.msra.mxu0 %v513
    %1056 = vmatprep.subr.mxu0 0.0
    %1057 = vmatpush1.msra.mxu0 %v514
    %1058 = vmatprep.subr.mxu0 0.0
    %1059 = vmatpush1.msra.mxu0 0.0
    %1060 = vmatprep.subr.mxu0 0.0
    %1061 = vmatpush1.msra.mxu0 0.0
    %1062 = vmatprep.subr.mxu0 0.0
    %1063 = vmatpush1.msra.mxu0 0.0
    %1064 = vmatprep.subr.mxu0 0.0
    %1065 = vmatpush1.msra.mxu0 0.0
    %1066 = vmatprep.subr.mxu0 0.0
    %1067 = vmatpush1.msra.mxu0 0.0
    %1068 = vmatprep.subr.mxu0 0.0
    %1069 = vmatpush1.msra.mxu0 0.0
    %1070 = vmatprep.subr.mxu0 0.0
    %1071 = vmatpush1.msra.mxu0 0.0
    %1072 = vmatprep.subr.mxu0 0.0
    %1073 = vmatpush1.msra.mxu0 0.0
    %1074 = vmatprep.subr.mxu0 0.0
    %1075 = vmatpush1.msra.mxu0 0.0
    %1076 = vmatprep.subr.mxu0 0.0
    %1077 = vmatpush1.msra.mxu0 0.0
    %1078 = vmatprep.subr.mxu0 0.0
    %1079 = vmatpush1.msra.mxu0 0.0
    %1080 = vmatprep.subr.mxu0 0.0
    %1081 = vmatpush1.msra.mxu0 0.0
    %1082 = vmatprep.subr.mxu0 0.0
    %1083 = vmatpush1.msra.mxu0 0.0
    %1084 = vmatprep.subr.mxu0 0.0
    %1085 = vmatpush1.msra.mxu0 0.0
    %1086 = vmatprep.subr.mxu0 0.0
    %1087 = vmatpush1.msra.mxu0 0.0
    %1088 = vmatprep.subr.mxu0 0.0
    %1089 = vmatpush1.msra.mxu0 0.0
    %1090 = vmatprep.subr.mxu0 0.0
    %1091 = vmatpush1.msra.mxu0 0.0
    %1092 = vmatprep.subr.mxu0 0.0
    %1093 = vmatpush1.msra.mxu0 0.0
    %1094 = vmatprep.subr.mxu0 0.0
    %1095 = vmatpush1.msra.mxu0 0.0
    %1096 = vmatprep.subr.mxu0 0.0
    %1097 = vmatpush1.msra.mxu0 0.0
    %1098 = vmatprep.subr.mxu0 0.0
    %1099 = vmatpush1.msra.mxu0 0.0
    %1100 = vmatprep.subr.mxu0 0.0
    %1101 = vmatpush1.msra.mxu0 0.0
    %1102 = vmatprep.subr.mxu0 0.0
    %1103 = vmatpush1.msra.mxu0 0.0
    %1104 = vmatprep.subr.mxu0 0.0
    %1105 = vmatpush1.msra.mxu0 0.0
    %1106 = vmatprep.subr.mxu0 0.0
    %1107 = vmatpush1.msra.mxu0 0.0
    %1108 = vmatprep.subr.mxu0 0.0
    %1109 = vmatpush1.msra.mxu0 0.0
    %1110 = vmatprep.subr.mxu0 0.0
    %1111 = vmatpush1.msra.mxu0 0.0
    %1112 = vmatprep.subr.mxu0 0.0
    %1113 = vmatpush1.msra.mxu0 0.0
    %1114 = vmatprep.subr.mxu0 0.0
    %1115 = vmatpush1.msra.mxu0 0.0
    %1116 = vmatprep.subr.mxu0 0.0
    %1117 = vmatpush1.msra.mxu0 0.0
    %1118 = vmatprep.mubr.f32.mxu0 0.0
    %1119 = vmatmul.mubr.f32.gmra.mrb[0].mxu0 %v1049
    %v1120 = vpop.f32.mrb[0].mxu0
    %v1121 = vadd.f32 %v1040, %v1120
    %v1122 = vpop.f32.mrb[0].mxu0
    %1123 = vmatprep.mubr.f32.mxu0 0.0
    %1124 = vmatmul.mubr.f32.gmra.mrb[0].mxu0 %v1052
    %v1125 = vpop.f32.mrb[0].mxu0
    %v1126 = vadd.f32 %v1045, %v1125
    %v1127 = vpop.f32.mrb[0].mxu0
    %1128 = vdwg.mxu0
    %v1129 = vlaneseq
    %v1130 = vshrl.u32 %v1129, 7
    %v1131 = vsub.s32 0, %v1130
    %v1132 = vrot.slane %v51, %v1131
    %v1133 = vadd.f32 %v1121, %v1132
    %v1134 = vadd.f32 %v1126, %v1132
    %v1135 = vadd.f32 %v39, %v1133
    %v1136 = vadd.f32 %v40, %v1134
    %v1137 = vsel %vm78, %v1135, 0.0
    %1138 = vadd.xlane.f32.xlu0 %v1137
    %v1139 = vpop.xlane.xlu0 %1138
    %v1140 = vsel %vm78, %v1136, 0.0
    %1141 = vadd.xlane.f32.xlu0 %v1140
    %v1142 = vpop.xlane.xlu0 %1141
    %v1143 = vrcp.pop 32.0
    %v1144 = vmul.f32 %v1139, %v1143
    %v1145 = vmul.f32 %v1142, %v1143
    %v1146 = vsub.f32 %v1135, %v1144
    %v1147 = vsub.f32 %v1136, %v1145
    %v1148 = vmul.f32 %v1146, %v1146
    %v1149 = vmul.f32 %v1147, %v1147
    %v1150 = vsel %vm78, %v1148, 0.0
    %1151 = vadd.xlane.f32.xlu0 %v1150
    %v1152 = vpop.xlane.xlu0 %1151
    %v1153 = vsel %vm78, %v1149, 0.0
    %1154 = vadd.xlane.f32.xlu0 %v1153
    %v1155 = vpop.xlane.xlu0 %1154
    %v1156 = vmul.f32 %v1152, %v1143
    %v1157 = vmul.f32 %v1155, %v1143
    %v1158 = vadd.f32 %v1156, 1e-05
    %v1159 = vadd.f32 %v1157, 1e-05
    %v1160 = vrsqrt.pop %v1158
    %v1161 = vrsqrt.pop %v1159
    %v1162 = vmul.f32 %v1146, %v1160
    %v1163 = vmul.f32 %v1147, %v1161
    %v1164 = vlaneseq
    %v1165 = vshrl.u32 %v1164, 7
    %v1166 = vsub.s32 2, %v1165
    %v1167 = vrot.slane %v51, %v1166
    %v1168 = vmul.f32 %v1162, %v1167
    %v1169 = vmul.f32 %v1163, %v1167
    %v1170 = vlaneseq
    %v1171 = vshrl.u32 %v1170, 7
    %v1172 = vsub.s32 3, %v1171
    %v1173 = vrot.slane %v51, %v1172
    %v1174 = vadd.f32 %v1168, %v1173
    %v1175 = vadd.f32 %v1169, %v1173
    %v1176 = vlaneseq
    %v1177 = vshrl.u32 %v1176, 7
    %v1178 = vsub.s32 0, %v1177
    %v1179 = vrot.slane %v56, %v1178
    %v1181 = vsel %vm78, %v1174, 0
    %v1184 = vsel %vm78, %v1175, 0
    %1186 = vmatprep.subr.mxu0 0.0
    %1187 = vmatpush1.msra.mxu0 %v52
    %1188 = vmatprep.subr.mxu0 0.0
    %1189 = vmatpush1.msra.mxu0 %v53
    %1190 = vmatprep.subr.mxu0 0.0
    %1191 = vmatpush1.msra.mxu0 %v54
    %1192 = vmatprep.subr.mxu0 0.0
    %1193 = vmatpush1.msra.mxu0 %v55
    %1194 = vmatprep.subr.mxu0 0.0
    %1195 = vmatpush1.msra.mxu0 0.0
    %1196 = vmatprep.subr.mxu0 0.0
    %1197 = vmatpush1.msra.mxu0 0.0
    %1198 = vmatprep.subr.mxu0 0.0
    %1199 = vmatpush1.msra.mxu0 0.0
    %1200 = vmatprep.subr.mxu0 0.0
    %1201 = vmatpush1.msra.mxu0 0.0
    %1202 = vmatprep.subr.mxu0 0.0
    %1203 = vmatpush1.msra.mxu0 0.0
    %1204 = vmatprep.subr.mxu0 0.0
    %1205 = vmatpush1.msra.mxu0 0.0
    %1206 = vmatprep.subr.mxu0 0.0
    %1207 = vmatpush1.msra.mxu0 0.0
    %1208 = vmatprep.subr.mxu0 0.0
    %1209 = vmatpush1.msra.mxu0 0.0
    %1210 = vmatprep.subr.mxu0 0.0
    %1211 = vmatpush1.msra.mxu0 0.0
    %1212 = vmatprep.subr.mxu0 0.0
    %1213 = vmatpush1.msra.mxu0 0.0
    %1214 = vmatprep.subr.mxu0 0.0
    %1215 = vmatpush1.msra.mxu0 0.0
    %1216 = vmatprep.subr.mxu0 0.0
    %1217 = vmatpush1.msra.mxu0 0.0
    %1218 = vmatprep.subr.mxu0 0.0
    %1219 = vmatpush1.msra.mxu0 0.0
    %1220 = vmatprep.subr.mxu0 0.0
    %1221 = vmatpush1.msra.mxu0 0.0
    %1222 = vmatprep.subr.mxu0 0.0
    %1223 = vmatpush1.msra.mxu0 0.0
    %1224 = vmatprep.subr.mxu0 0.0
    %1225 = vmatpush1.msra.mxu0 0.0
    %1226 = vmatprep.subr.mxu0 0.0
    %1227 = vmatpush1.msra.mxu0 0.0
    %1228 = vmatprep.subr.mxu0 0.0
    %1229 = vmatpush1.msra.mxu0 0.0
    %1230 = vmatprep.subr.mxu0 0.0
    %1231 = vmatpush1.msra.mxu0 0.0
    %1232 = vmatprep.subr.mxu0 0.0
    %1233 = vmatpush1.msra.mxu0 0.0
    %1234 = vmatprep.subr.mxu0 0.0
    %1235 = vmatpush1.msra.mxu0 0.0
    %1236 = vmatprep.subr.mxu0 0.0
    %1237 = vmatpush1.msra.mxu0 0.0
    %1238 = vmatprep.subr.mxu0 0.0
    %1239 = vmatpush1.msra.mxu0 0.0
    %1240 = vmatprep.subr.mxu0 0.0
    %1241 = vmatpush1.msra.mxu0 0.0
    %1242 = vmatprep.subr.mxu0 0.0
    %1243 = vmatpush1.msra.mxu0 0.0
    %1244 = vmatprep.subr.mxu0 0.0
    %1245 = vmatpush1.msra.mxu0 0.0
    %1246 = vmatprep.subr.mxu0 0.0
    %1247 = vmatpush1.msra.mxu0 0.0
    %1248 = vmatprep.subr.mxu0 0.0
    %1249 = vmatpush1.msra.mxu0 0.0
    %1250 = vmatprep.mubr.f32.mxu0 0.0
    %1251 = vmatmul.mubr.f32.gmra.mrb[0].mxu0 %v1181
    %v1252 = vpop.f32.mrb[0].mxu0
    %v1253 = vadd.f32 %v1179, %v1252
    %v1254 = vpop.f32.mrb[0].mxu0
    %1255 = vmatprep.mubr.f32.mxu0 0.0
    %1256 = vmatmul.mubr.f32.gmra.mrb[0].mxu0 %v1184
    %v1257 = vpop.f32.mrb[0].mxu0
    %v1258 = vadd.f32 %v1179, %v1257
    %v1259 = vpop.f32.mrb[0].mxu0
    %1260 = vdwg.mxu0
    %v1261 = vmax.f32 %v1253, 0.0
    %v1262 = vmax.f32 %v1258, 0.0
    %v1263 = vlaneseq
    %v1264 = vshrl.u32 %v1263, 7
    %v1265 = vsub.s32 1, %v1264
    %v1266 = vrot.slane %v51, %v1265
    %vm1267 = vcmask 523264
    %v1269 = vsel %vm1267, %v1261, 0
    %v1272 = vsel %vm1267, %v1262, 0
    %1274 = vmatprep.subr.mxu0 0.0
    %1275 = vmatpush1.msra.mxu0 %v43
    %1276 = vmatprep.subr.mxu0 0.0
    %1277 = vmatpush1.msra.mxu0 %v44
    %1278 = vmatprep.subr.mxu0 0.0
    %1279 = vmatpush1.msra.mxu0 %v45
    %1280 = vmatprep.subr.mxu0 0.0
    %1281 = vmatpush1.msra.mxu0 %v46
    %1282 = vmatprep.subr.mxu0 0.0
    %1283 = vmatpush1.msra.mxu0 %v47
    %1284 = vmatprep.subr.mxu0 0.0
    %1285 = vmatpush1.msra.mxu0 %v48
    %1286 = vmatprep.subr.mxu0 0.0
    %1287 = vmatpush1.msra.mxu0 %v49
    %1288 = vmatprep.subr.mxu0 0.0
    %1289 = vmatpush1.msra.mxu0 %v50
    %1290 = vmatprep.subr.mxu0 0.0
    %1291 = vmatpush1.msra.mxu0 0.0
    %1292 = vmatprep.subr.mxu0 0.0
    %1293 = vmatpush1.msra.mxu0 0.0
    %1294 = vmatprep.subr.mxu0 0.0
    %1295 = vmatpush1.msra.mxu0 0.0
    %1296 = vmatprep.subr.mxu0 0.0
    %1297 = vmatpush1.msra.mxu0 0.0
    %1298 = vmatprep.subr.mxu0 0.0
    %1299 = vmatpush1.msra.mxu0 0.0
    %1300 = vmatprep.subr.mxu0 0.0
    %1301 = vmatpush1.msra.mxu0 0.0
    %1302 = vmatprep.subr.mxu0 0.0
    %1303 = vmatpush1.msra.mxu0 0.0
    %1304 = vmatprep.subr.mxu0 0.0
    %1305 = vmatpush1.msra.mxu0 0.0
    %1306 = vmatprep.subr.mxu0 0.0
    %1307 = vmatpush1.msra.mxu0 0.0
    %1308 = vmatprep.subr.mxu0 0.0
    %1309 = vmatpush1.msra.mxu0 0.0
    %1310 = vmatprep.subr.mxu0 0.0
    %1311 = vmatpush1.msra.mxu0 0.0
    %1312 = vmatprep.subr.mxu0 0.0
    %1313 = vmatpush1.msra.mxu0 0.0
    %1314 = vmatprep.subr.mxu0 0.0
    %1315 = vmatpush1.msra.mxu0 0.0
    %1316 = vmatprep.subr.mxu0 0.0
    %1317 = vmatpush1.msra.mxu0 0.0
    %1318 = vmatprep.subr.mxu0 0.0
    %1319 = vmatpush1.msra.mxu0 0.0
    %1320 = vmatprep.subr.mxu0 0.0
    %1321 = vmatpush1.msra.mxu0 0.0
    %1322 = vmatprep.subr.mxu0 0.0
    %1323 = vmatpush1.msra.mxu0 0.0
    %1324 = vmatprep.subr.mxu0 0.0
    %1325 = vmatpush1.msra.mxu0 0.0
    %1326 = vmatprep.subr.mxu0 0.0
    %1327 = vmatpush1.msra.mxu0 0.0
    %1328 = vmatprep.subr.mxu0 0.0
    %1329 = vmatpush1.msra.mxu0 0.0
    %1330 = vmatprep.subr.mxu0 0.0
    %1331 = vmatpush1.msra.mxu0 0.0
    %1332 = vmatprep.subr.mxu0 0.0
    %1333 = vmatpush1.msra.mxu0 0.0
    %1334 = vmatprep.subr.mxu0 0.0
    %1335 = vmatpush1.msra.mxu0 0.0
    %1336 = vmatprep.subr.mxu0 0.0
    %1337 = vmatpush1.msra.mxu0 0.0
    %1338 = vmatprep.mubr.f32.mxu0 0.0
    %1339 = vmatmul.mubr.f32.gmra.mrb[0].mxu0 %v1269
    %v1340 = vpop.f32.mrb[0].mxu0
    %v1341 = vadd.f32 %v1266, %v1340
    %v1342 = vpop.f32.mrb[0].mxu0
    %1343 = vmatprep.mubr.f32.mxu0 0.0
    %1344 = vmatmul.mubr.f32.gmra.mrb[0].mxu0 %v1272
    %v1345 = vpop.f32.mrb[0].mxu0
    %v1346 = vadd.f32 %v1266, %v1345
    %v1347 = vpop.f32.mrb[0].mxu0
    %1348 = vdwg.mxu0
    %v1349 = vadd.f32 %v1174, %v1341
    %v1350 = vadd.f32 %v1175, %v1346
    %v1351 = vsel %vm78, %v1349, 0.0
    %1352 = vadd.xlane.f32.xlu0 %v1351
    %v1353 = vpop.xlane.xlu0 %1352
    %v1354 = vsel %vm78, %v1350, 0.0
    %1355 = vadd.xlane.f32.xlu0 %v1354
    %v1356 = vpop.xlane.xlu0 %1355
    %v1357 = vmul.f32 %v1353, %v1143
    %v1358 = vmul.f32 %v1356, %v1143
    %v1359 = vsub.f32 %v1349, %v1357
    %v1360 = vsub.f32 %v1350, %v1358
    %v1361 = vmul.f32 %v1359, %v1359
    %v1362 = vmul.f32 %v1360, %v1360
    %v1363 = vsel %vm78, %v1361, 0.0
    %1364 = vadd.xlane.f32.xlu0 %v1363
    %v1365 = vpop.xlane.xlu0 %1364
    %v1366 = vsel %vm78, %v1362, 0.0
    %1367 = vadd.xlane.f32.xlu0 %v1366
    %v1368 = vpop.xlane.xlu0 %1367
    %v1369 = vmul.f32 %v1365, %v1143
    %v1370 = vmul.f32 %v1368, %v1143
    %v1371 = vadd.f32 %v1369, 1e-05
    %v1372 = vadd.f32 %v1370, 1e-05
    %v1373 = vrsqrt.pop %v1371
    %v1374 = vrsqrt.pop %v1372
    %v1375 = vmul.f32 %v1359, %v1373
    %v1376 = vmul.f32 %v1360, %v1374
    %v1377 = vlaneseq
    %v1378 = vshrl.u32 %v1377, 7
    %v1379 = vsub.s32 4, %v1378
    %v1380 = vrot.slane %v51, %v1379
    %v1381 = vmul.f32 %v1375, %v1380
    %v1382 = vmul.f32 %v1376, %v1380
    %v1383 = vlaneseq
    %v1384 = vshrl.u32 %v1383, 7
    %v1385 = vsub.s32 5, %v1384
    %v1386 = vrot.slane %v51, %v1385
    %v1387 = vadd.f32 %v1381, %v1386
    %v1388 = vadd.f32 %v1382, %v1386
    %s1389 = scalar_lea.vmem %s6, 72
    %v1390 = vld [vmem:[%s1389] sm:$0xff]
    %v1391 = vld [vmem:[%s1389 + $0x8] sm:$0xff]
    %v1392 = vld [vmem:[%s1389 + $0x10] sm:$0xff]
    %v1393 = vld [vmem:[%s1389 + $0x18] sm:$0xff]
    %v1394 = vld [vmem:[%s1389 + $0x20] sm:$0xff]
    %v1395 = vld [vmem:[%s1389 + $0x28] sm:$0xff]
    %v1396 = vld [vmem:[%s1389 + $0x30] sm:$0xff]
    %v1397 = vld [vmem:[%s1389 + $0x38] sm:$0xff]
    %v1398 = vld [vmem:[%s1389 + $0x40] sm:$0x3f]
    %s1399 = scalar_lea.vmem %s5, 40
    %v1400 = vld [vmem:[%s1399] sm:$0xff]
    %v1401 = vld [vmem:[%s1399 + $0x8] sm:$0xff]
    %v1402 = vld [vmem:[%s1399 + $0x10] sm:$0xff]
    %v1403 = vld [vmem:[%s1399 + $0x18] sm:$0xff]
    %v1404 = vld [vmem:[%s1399 + $0x20] sm:$0x1]
    %s1405 = scalar_lea.vmem %s3, 240
    %v1406 = vld [vmem:[%s1405] sm:$0xff]
    %v1407 = vld [vmem:[%s1405 + $0x8] sm:$0xff]
    %v1408 = vld [vmem:[%s1405 + $0x10] sm:$0xff]
    %v1409 = vld [vmem:[%s1405 + $0x18] sm:$0xff]
    %v1410 = vld [vmem:[%s1405 + $0x20] sm:$0x1]
    %s1411 = scalar_lea.vmem %s3, 320
    %v1412 = vld [vmem:[%s1411] sm:$0xff]
    %v1413 = vld [vmem:[%s1411 + $0x8] sm:$0xff]
    %v1414 = vld [vmem:[%s1411 + $0x10] sm:$0xff]
    %v1415 = vld [vmem:[%s1411 + $0x18] sm:$0xff]
    %v1416 = vld [vmem:[%s1411 + $0x20] sm:$0x1]
    %s1417 = scalar_lea.vmem %s3, 400
    %v1418 = vld [vmem:[%s1417] sm:$0xff]
    %v1419 = vld [vmem:[%s1417 + $0x8] sm:$0xff]
    %v1420 = vld [vmem:[%s1417 + $0x10] sm:$0xff]
    %v1421 = vld [vmem:[%s1417 + $0x18] sm:$0xff]
    %v1422 = vld [vmem:[%s1417 + $0x20] sm:$0x1]
    %v1423 = vlaneseq
    %v1424 = vshrl.u32 %v1423, 7
    %v1425 = vsub.s32 0, %v1424
    %v1426 = vrot.slane %v1410, %v1425
    %v1428 = vsel %vm78, %v1387, 0
    %v1431 = vsel %vm78, %v1388, 0
    %1433 = vmatprep.subr.mxu0 0.0
    %1434 = vmatpush1.msra.mxu0 %v1406
    %1435 = vmatprep.subr.mxu0 0.0
    %1436 = vmatpush1.msra.mxu0 %v1407
    %1437 = vmatprep.subr.mxu0 0.0
    %1438 = vmatpush1.msra.mxu0 %v1408
    %1439 = vmatprep.subr.mxu0 0.0
    %1440 = vmatpush1.msra.mxu0 %v1409
    %1441 = vmatprep.subr.mxu0 0.0
    %1442 = vmatpush1.msra.mxu0 0.0
    %1443 = vmatprep.subr.mxu0 0.0
    %1444 = vmatpush1.msra.mxu0 0.0
    %1445 = vmatprep.subr.mxu0 0.0
    %1446 = vmatpush1.msra.mxu0 0.0
    %1447 = vmatprep.subr.mxu0 0.0
    %1448 = vmatpush1.msra.mxu0 0.0
    %1449 = vmatprep.subr.mxu0 0.0
    %1450 = vmatpush1.msra.mxu0 0.0
    %1451 = vmatprep.subr.mxu0 0.0
    %1452 = vmatpush1.msra.mxu0 0.0
    %1453 = vmatprep.subr.mxu0 0.0
    %1454 = vmatpush1.msra.mxu0 0.0
    %1455 = vmatprep.subr.mxu0 0.0
    %1456 = vmatpush1.msra.mxu0 0.0
    %1457 = vmatprep.subr.mxu0 0.0
    %1458 = vmatpush1.msra.mxu0 0.0
    %1459 = vmatprep.subr.mxu0 0.0
    %1460 = vmatpush1.msra.mxu0 0.0
    %1461 = vmatprep.subr.mxu0 0.0
    %1462 = vmatpush1.msra.mxu0 0.0
    %1463 = vmatprep.subr.mxu0 0.0
    %1464 = vmatpush1.msra.mxu0 0.0
    %1465 = vmatprep.subr.mxu0 0.0
    %1466 = vmatpush1.msra.mxu0 0.0
    %1467 = vmatprep.subr.mxu0 0.0
    %1468 = vmatpush1.msra.mxu0 0.0
    %1469 = vmatprep.subr.mxu0 0.0
    %1470 = vmatpush1.msra.mxu0 0.0
    %1471 = vmatprep.subr.mxu0 0.0
    %1472 = vmatpush1.msra.mxu0 0.0
    %1473 = vmatprep.subr.mxu0 0.0
    %1474 = vmatpush1.msra.mxu0 0.0
    %1475 = vmatprep.subr.mxu0 0.0
    %1476 = vmatpush1.msra.mxu0 0.0
    %1477 = vmatprep.subr.mxu0 0.0
    %1478 = vmatpush1.msra.mxu0 0.0
    %1479 = vmatprep.subr.mxu0 0.0
    %1480 = vmatpush1.msra.mxu0 0.0
    %1481 = vmatprep.subr.mxu0 0.0
    %1482 = vmatpush1.msra.mxu0 0.0
    %1483 = vmatprep.subr.mxu0 0.0
    %1484 = vmatpush1.msra.mxu0 0.0
    %1485 = vmatprep.subr.mxu0 0.0
    %1486 = vmatpush1.msra.mxu0 0.0
    %1487 = vmatprep.subr.mxu0 0.0
    %1488 = vmatpush1.msra.mxu0 0.0
    %1489 = vmatprep.subr.mxu0 0.0
    %1490 = vmatpush1.msra.mxu0 0.0
    %1491 = vmatprep.subr.mxu0 0.0
    %1492 = vmatpush1.msra.mxu0 0.0
    %1493 = vmatprep.subr.mxu0 0.0
    %1494 = vmatpush1.msra.mxu0 0.0
    %1495 = vmatprep.subr.mxu0 0.0
    %1496 = vmatpush1.msra.mxu0 0.0
    %1497 = vmatprep.mubr.f32.mxu0 0.0
    %1498 = vmatmul.mubr.f32.gmra.mrb[0].mxu0 %v1428
    %v1499 = vpop.f32.mrb[0].mxu0
    %v1500 = vadd.f32 %v1426, %v1499
    %v1501 = vpop.f32.mrb[0].mxu0
    %1502 = vmatprep.mubr.f32.mxu0 0.0
    %1503 = vmatmul.mubr.f32.gmra.mrb[0].mxu0 %v1431
    %v1504 = vpop.f32.mrb[0].mxu0
    %v1505 = vadd.f32 %v1426, %v1504
    %v1506 = vpop.f32.mrb[0].mxu0
    %1507 = vdwg.mxu0
    %v1508 = vlaneseq
    %v1509 = vshrl.u32 %v1508, 7
    %v1510 = vsub.s32 0, %v1509
    %v1511 = vrot.slane %v1416, %v1510
    %1512 = vmatprep.subr.mxu0 0.0
    %1513 = vmatpush1.msra.mxu0 %v1412
    %1514 = vmatprep.subr.mxu0 0.0
    %1515 = vmatpush1.msra.mxu0 %v1413
    %1516 = vmatprep.subr.mxu0 0.0
    %1517 = vmatpush1.msra.mxu0 %v1414
    %1518 = vmatprep.subr.mxu0 0.0
    %1519 = vmatpush1.msra.mxu0 %v1415
    %1520 = vmatprep.subr.mxu0 0.0
    %1521 = vmatpush1.msra.mxu0 0.0
    %1522 = vmatprep.subr.mxu0 0.0
    %1523 = vmatpush1.msra.mxu0 0.0
    %1524 = vmatprep.subr.mxu0 0.0
    %1525 = vmatpush1.msra.mxu0 0.0
    %1526 = vmatprep.subr.mxu0 0.0
    %1527 = vmatpush1.msra.mxu0 0.0
    %1528 = vmatprep.subr.mxu0 0.0
    %1529 = vmatpush1.msra.mxu0 0.0
    %1530 = vmatprep.subr.mxu0 0.0
    %1531 = vmatpush1.msra.mxu0 0.0
    %1532 = vmatprep.subr.mxu0 0.0
    %1533 = vmatpush1.msra.mxu0 0.0
    %1534 = vmatprep.subr.mxu0 0.0
    %1535 = vmatpush1.msra.mxu0 0.0
    %1536 = vmatprep.subr.mxu0 0.0
    %1537 = vmatpush1.msra.mxu0 0.0
    %1538 = vmatprep.subr.mxu0 0.0
    %1539 = vmatpush1.msra.mxu0 0.0
    %1540 = vmatprep.subr.mxu0 0.0
    %1541 = vmatpush1.msra.mxu0 0.0
    %1542 = vmatprep.subr.mxu0 0.0
    %1543 = vmatpush1.msra.mxu0 0.0
    %1544 = vmatprep.subr.mxu0 0.0
    %1545 = vmatpush1.msra.mxu0 0.0
    %1546 = vmatprep.subr.mxu0 0.0
    %1547 = vmatpush1.msra.mxu0 0.0
    %1548 = vmatprep.subr.mxu0 0.0
    %1549 = vmatpush1.msra.mxu0 0.0
    %1550 = vmatprep.subr.mxu0 0.0
    %1551 = vmatpush1.msra.mxu0 0.0
    %1552 = vmatprep.subr.mxu0 0.0
    %1553 = vmatpush1.msra.mxu0 0.0
    %1554 = vmatprep.subr.mxu0 0.0
    %1555 = vmatpush1.msra.mxu0 0.0
    %1556 = vmatprep.subr.mxu0 0.0
    %1557 = vmatpush1.msra.mxu0 0.0
    %1558 = vmatprep.subr.mxu0 0.0
    %1559 = vmatpush1.msra.mxu0 0.0
    %1560 = vmatprep.subr.mxu0 0.0
    %1561 = vmatpush1.msra.mxu0 0.0
    %1562 = vmatprep.subr.mxu0 0.0
    %1563 = vmatpush1.msra.mxu0 0.0
    %1564 = vmatprep.subr.mxu0 0.0
    %1565 = vmatpush1.msra.mxu0 0.0
    %1566 = vmatprep.subr.mxu0 0.0
    %1567 = vmatpush1.msra.mxu0 0.0
    %1568 = vmatprep.subr.mxu0 0.0
    %1569 = vmatpush1.msra.mxu0 0.0
    %1570 = vmatprep.subr.mxu0 0.0
    %1571 = vmatpush1.msra.mxu0 0.0
    %1572 = vmatprep.subr.mxu0 0.0
    %1573 = vmatpush1.msra.mxu0 0.0
    %1574 = vmatprep.subr.mxu0 0.0
    %1575 = vmatpush1.msra.mxu0 0.0
    %1576 = vmatprep.mubr.f32.mxu0 0.0
    %1577 = vmatmul.mubr.f32.gmra.mrb[0].mxu0 %v1428
    %v1578 = vpop.f32.mrb[0].mxu0
    %v1579 = vadd.f32 %v1511, %v1578
    %v1580 = vpop.f32.mrb[0].mxu0
    %1581 = vmatprep.mubr.f32.mxu0 0.0
    %1582 = vmatmul.mubr.f32.gmra.mrb[0].mxu0 %v1431
    %v1583 = vpop.f32.mrb[0].mxu0
    %v1584 = vadd.f32 %v1511, %v1583
    %v1585 = vpop.f32.mrb[0].mxu0
    %1586 = vdwg.mxu0
    %v1587 = vlaneseq
    %v1588 = vshrl.u32 %v1587, 7
    %v1589 = vsub.s32 0, %v1588
    %v1590 = vrot.slane %v1422, %v1589
    %1591 = vmatprep.subr.mxu0 0.0
    %1592 = vmatpush1.msra.mxu0 %v1418
    %1593 = vmatprep.subr.mxu0 0.0
    %1594 = vmatpush1.msra.mxu0 %v1419
    %1595 = vmatprep.subr.mxu0 0.0
    %1596 = vmatpush1.msra.mxu0 %v1420
    %1597 = vmatprep.subr.mxu0 0.0
    %1598 = vmatpush1.msra.mxu0 %v1421
    %1599 = vmatprep.subr.mxu0 0.0
    %1600 = vmatpush1.msra.mxu0 0.0
    %1601 = vmatprep.subr.mxu0 0.0
    %1602 = vmatpush1.msra.mxu0 0.0
    %1603 = vmatprep.subr.mxu0 0.0
    %1604 = vmatpush1.msra.mxu0 0.0
    %1605 = vmatprep.subr.mxu0 0.0
    %1606 = vmatpush1.msra.mxu0 0.0
    %1607 = vmatprep.subr.mxu0 0.0
    %1608 = vmatpush1.msra.mxu0 0.0
    %1609 = vmatprep.subr.mxu0 0.0
    %1610 = vmatpush1.msra.mxu0 0.0
    %1611 = vmatprep.subr.mxu0 0.0
    %1612 = vmatpush1.msra.mxu0 0.0
    %1613 = vmatprep.subr.mxu0 0.0
    %1614 = vmatpush1.msra.mxu0 0.0
    %1615 = vmatprep.subr.mxu0 0.0
    %1616 = vmatpush1.msra.mxu0 0.0
    %1617 = vmatprep.subr.mxu0 0.0
    %1618 = vmatpush1.msra.mxu0 0.0
    %1619 = vmatprep.subr.mxu0 0.0
    %1620 = vmatpush1.msra.mxu0 0.0
    %1621 = vmatprep.subr.mxu0 0.0
    %1622 = vmatpush1.msra.mxu0 0.0
    %1623 = vmatprep.subr.mxu0 0.0
    %1624 = vmatpush1.msra.mxu0 0.0
    %1625 = vmatprep.subr.mxu0 0.0
    %1626 = vmatpush1.msra.mxu0 0.0
    %1627 = vmatprep.subr.mxu0 0.0
    %1628 = vmatpush1.msra.mxu0 0.0
    %1629 = vmatprep.subr.mxu0 0.0
    %1630 = vmatpush1.msra.mxu0 0.0
    %1631 = vmatprep.subr.mxu0 0.0
    %1632 = vmatpush1.msra.mxu0 0.0
    %1633 = vmatprep.subr.mxu0 0.0
    %1634 = vmatpush1.msra.mxu0 0.0
    %1635 = vmatprep.subr.mxu0 0.0
    %1636 = vmatpush1.msra.mxu0 0.0
    %1637 = vmatprep.subr.mxu0 0.0
    %1638 = vmatpush1.msra.mxu0 0.0
    %1639 = vmatprep.subr.mxu0 0.0
    %1640 = vmatpush1.msra.mxu0 0.0
    %1641 = vmatprep.subr.mxu0 0.0
    %1642 = vmatpush1.msra.mxu0 0.0
    %1643 = vmatprep.subr.mxu0 0.0
    %1644 = vmatpush1.msra.mxu0 0.0
    %1645 = vmatprep.subr.mxu0 0.0
    %1646 = vmatpush1.msra.mxu0 0.0
    %1647 = vmatprep.subr.mxu0 0.0
    %1648 = vmatpush1.msra.mxu0 0.0
    %1649 = vmatprep.subr.mxu0 0.0
    %1650 = vmatpush1.msra.mxu0 0.0
    %1651 = vmatprep.subr.mxu0 0.0
    %1652 = vmatpush1.msra.mxu0 0.0
    %1653 = vmatprep.subr.mxu0 0.0
    %1654 = vmatpush1.msra.mxu0 0.0
    %1655 = vmatprep.mubr.f32.mxu0 0.0
    %1656 = vmatmul.mubr.f32.gmra.mrb[0].mxu0 %v1428
    %v1657 = vpop.f32.mrb[0].mxu0
    %v1658 = vadd.f32 %v1590, %v1657
    %v1659 = vpop.f32.mrb[0].mxu0
    %1660 = vmatprep.mubr.f32.mxu0 0.0
    %1661 = vmatmul.mubr.f32.gmra.mrb[0].mxu0 %v1431
    %v1662 = vpop.f32.mrb[0].mxu0
    %v1663 = vadd.f32 %v1590, %v1662
    %v1664 = vpop.f32.mrb[0].mxu0
    %1665 = vdwg.mxu0
    %v1667 = vsel %vm318, %v1500, 0
    %v1670 = vsel %vm318, %v1505, 0
    %v1673 = vsel %vm318, %v1579, 0
    %v1676 = vsel %vm318, %v1584, 0
    %1678 = vmatprep.subr.mxu0 0.0
    %1679 = vmatpush1.xpose.msra.mxu0 %v1673
    %1680 = vmatprep.subr.mxu0 0.0
    %1681 = vmatpush1.xpose.msra.mxu0 %v1676
    %1682 = vmatprep.subr.mxu0 0.0
    %1683 = vmatpush1.xpose.msra.mxu0 0.0
    %1684 = vmatprep.subr.mxu0 0.0
    %1685 = vmatpush1.xpose.msra.mxu0 0.0
    %1686 = vmatprep.subr.mxu0 0.0
    %1687 = vmatpush1.xpose.msra.mxu0 0.0
    %1688 = vmatprep.subr.mxu0 0.0
    %1689 = vmatpush1.xpose.msra.mxu0 0.0
    %1690 = vmatprep.subr.mxu0 0.0
    %1691 = vmatpush1.xpose.msra.mxu0 0.0
    %1692 = vmatprep.subr.mxu0 0.0
    %1693 = vmatpush1.xpose.msra.mxu0 0.0
    %1694 = vmatprep.subr.mxu0 0.0
    %1695 = vmatpush1.xpose.msra.mxu0 0.0
    %1696 = vmatprep.subr.mxu0 0.0
    %1697 = vmatpush1.xpose.msra.mxu0 0.0
    %1698 = vmatprep.subr.mxu0 0.0
    %1699 = vmatpush1.xpose.msra.mxu0 0.0
    %1700 = vmatprep.subr.mxu0 0.0
    %1701 = vmatpush1.xpose.msra.mxu0 0.0
    %1702 = vmatprep.subr.mxu0 0.0
    %1703 = vmatpush1.xpose.msra.mxu0 0.0
    %1704 = vmatprep.subr.mxu0 0.0
    %1705 = vmatpush1.xpose.msra.mxu0 0.0
    %1706 = vmatprep.subr.mxu0 0.0
    %1707 = vmatpush1.xpose.msra.mxu0 0.0
    %1708 = vmatprep.subr.mxu0 0.0
    %1709 = vmatpush1.xpose.msra.mxu0 0.0
    %1710 = vmatprep.subr.mxu0 0.0
    %1711 = vmatpush1.xpose.msra.mxu0 0.0
    %1712 = vmatprep.subr.mxu0 0.0
    %1713 = vmatpush1.xpose.msra.mxu0 0.0
    %1714 = vmatprep.subr.mxu0 0.0
    %1715 = vmatpush1.xpose.msra.mxu0 0.0
    %1716 = vmatprep.subr.mxu0 0.0
    %1717 = vmatpush1.xpose.msra.mxu0 0.0
    %1718 = vmatprep.subr.mxu0 0.0
    %1719 = vmatpush1.xpose.msra.mxu0 0.0
    %1720 = vmatprep.subr.mxu0 0.0
    %1721 = vmatpush1.xpose.msra.mxu0 0.0
    %1722 = vmatprep.subr.mxu0 0.0
    %1723 = vmatpush1.xpose.msra.mxu0 0.0
    %1724 = vmatprep.subr.mxu0 0.0
    %1725 = vmatpush1.xpose.msra.mxu0 0.0
    %1726 = vmatprep.subr.mxu0 0.0
    %1727 = vmatpush1.xpose.msra.mxu0 0.0
    %1728 = vmatprep.subr.mxu0 0.0
    %1729 = vmatpush1.xpose.msra.mxu0 0.0
    %1730 = vmatprep.subr.mxu0 0.0
    %1731 = vmatpush1.xpose.msra.mxu0 0.0
    %1732 = vmatprep.subr.mxu0 0.0
    %1733 = vmatpush1.xpose.msra.mxu0 0.0
    %1734 = vmatprep.subr.mxu0 0.0
    %1735 = vmatpush1.xpose.msra.mxu0 0.0
    %1736 = vmatprep.subr.mxu0 0.0
    %1737 = vmatpush1.xpose.msra.mxu0 0.0
    %1738 = vmatprep.subr.mxu0 0.0
    %1739 = vmatpush1.xpose.msra.mxu0 0.0
    %1740 = vmatprep.subr.mxu0 0.0
    %1741 = vmatpush1.xpose.msra.mxu0 0.0
    %1742 = vmatprep.mubr.f32.mxu0 0.0
    %1743 = vmatmul.mubr.f32.gmra.mrb[0].mxu0 %v1667
    %v1744 = vpop.f32.mrb[0].mxu0
    %v1745 = vadd.f32 0.0, %v1744
    %v1746 = vpop.f32.mrb[0].mxu0
    %1747 = vmatprep.mubr.f32.mxu0 0.0
    %1748 = vmatmul.mubr.f32.gmra.mrb[0].mxu0 %v1670
    %v1749 = vpop.f32.mrb[0].mxu0
    %v1750 = vadd.f32 0.0, %v1749
    %v1751 = vpop.f32.mrb[0].mxu0
    %1752 = vdwg.mxu0
    %v1753 = vmul.f32 %v1745, 0.25
    %v1754 = vmul.f32 %v1750, 0.25
    %v1755 = vadd.f32 %v1753, %v41
    %v1756 = vadd.f32 %v1754, %v42
    %v1757 = vsel %vm318, %v1755, -inf
    %1758 = vmax.xlane.f32.xlu0 %v1757
    %v1759 = vpop.xlane.xlu0 %1758
    %v1760 = vsel %vm318, %v1756, -inf
    %1761 = vmax.xlane.f32.xlu0 %v1760
    %v1762 = vpop.xlane.xlu0 %1761
    %v1763 = vsub.f32 %v1755, %v1759
    %v1764 = vsub.f32 %v1756, %v1762
    %v1765 = vmul.f32 %v1763, 1.442695
    %v1766 = vpow.pop %v1765
    %v1767 = vmul.f32 %v1764, 1.442695
    %v1768 = vpow.pop %v1767
    %v1769 = vsel %vm318, %v1766, 0.0
    %1770 = vadd.xlane.f32.xlu0 %v1769
    %v1771 = vpop.xlane.xlu0 %1770
    %v1772 = vsel %vm318, %v1768, 0.0
    %1773 = vadd.xlane.f32.xlu0 %v1772
    %v1774 = vpop.xlane.xlu0 %1773
    %v1775 = vrcp.pop %v1771
    %v1776 = vrcp.pop %v1774
    %v1777 = vmul.f32 %v1766, %v1775
    %v1778 = vmul.f32 %v1768, %v1776
    %v1780 = vsel %vm318, %v1777, 0
    %v1783 = vsel %vm318, %v1778, 0
    %1785 = vmatprep.subr.mxu0 0.0
    %1786 = vmatpush1.msra.mxu0 %v1658
    %1787 = vmatprep.subr.mxu0 0.0
    %1788 = vmatpush1.msra.mxu0 %v1663
    %1789 = vmatprep.subr.mxu0 0.0
    %1790 = vmatpush1.msra.mxu0 0.0
    %1791 = vmatprep.subr.mxu0 0.0
    %1792 = vmatpush1.msra.mxu0 0.0
    %1793 = vmatprep.subr.mxu0 0.0
    %1794 = vmatpush1.msra.mxu0 0.0
    %1795 = vmatprep.subr.mxu0 0.0
    %1796 = vmatpush1.msra.mxu0 0.0
    %1797 = vmatprep.subr.mxu0 0.0
    %1798 = vmatpush1.msra.mxu0 0.0
    %1799 = vmatprep.subr.mxu0 0.0
    %1800 = vmatpush1.msra.mxu0 0.0
    %1801 = vmatprep.subr.mxu0 0.0
    %1802 = vmatpush1.msra.mxu0 0.0
    %1803 = vmatprep.subr.mxu0 0.0
    %1804 = vmatpush1.msra.mxu0 0.0
    %1805 = vmatprep.subr.mxu0 0.0
    %1806 = vmatpush1.msra.mxu0 0.0
    %1807 = vmatprep.subr.mxu0 0.0
    %1808 = vmatpush1.msra.mxu0 0.0
    %1809 = vmatprep.subr.mxu0 0.0
    %1810 = vmatpush1.msra.mxu0 0.0
    %1811 = vmatprep.subr.mxu0 0.0
    %1812 = vmatpush1.msra.mxu0 0.0
    %1813 = vmatprep.subr.mxu0 0.0
    %1814 = vmatpush1.msra.mxu0 0.0
    %1815 = vmatprep.subr.mxu0 0.0
    %1816 = vmatpush1.msra.mxu0 0.0
    %1817 = vmatprep.subr.mxu0 0.0
    %1818 = vmatpush1.msra.mxu0 0.0
    %1819 = vmatprep.subr.mxu0 0.0
    %1820 = vmatpush1.msra.mxu0 0.0
    %1821 = vmatprep.subr.mxu0 0.0
    %1822 = vmatpush1.msra.mxu0 0.0
    %1823 = vmatprep.subr.mxu0 0.0
    %1824 = vmatpush1.msra.mxu0 0.0
    %1825 = vmatprep.subr.mxu0 0.0
    %1826 = vmatpush1.msra.mxu0 0.0
    %1827 = vmatprep.subr.mxu0 0.0
    %1828 = vmatpush1.msra.mxu0 0.0
    %1829 = vmatprep.subr.mxu0 0.0
    %1830 = vmatpush1.msra.mxu0 0.0
    %1831 = vmatprep.subr.mxu0 0.0
    %1832 = vmatpush1.msra.mxu0 0.0
    %1833 = vmatprep.subr.mxu0 0.0
    %1834 = vmatpush1.msra.mxu0 0.0
    %1835 = vmatprep.subr.mxu0 0.0
    %1836 = vmatpush1.msra.mxu0 0.0
    %1837 = vmatprep.subr.mxu0 0.0
    %1838 = vmatpush1.msra.mxu0 0.0
    %1839 = vmatprep.subr.mxu0 0.0
    %1840 = vmatpush1.msra.mxu0 0.0
    %1841 = vmatprep.subr.mxu0 0.0
    %1842 = vmatpush1.msra.mxu0 0.0
    %1843 = vmatprep.subr.mxu0 0.0
    %1844 = vmatpush1.msra.mxu0 0.0
    %1845 = vmatprep.subr.mxu0 0.0
    %1846 = vmatpush1.msra.mxu0 0.0
    %1847 = vmatprep.subr.mxu0 0.0
    %1848 = vmatpush1.msra.mxu0 0.0
    %1849 = vmatprep.mubr.f32.mxu0 0.0
    %1850 = vmatmul.mubr.f32.gmra.mrb[0].mxu0 %v1780
    %v1851 = vpop.f32.mrb[0].mxu0
    %v1852 = vadd.f32 0.0, %v1851
    %v1853 = vpop.f32.mrb[0].mxu0
    %1854 = vmatprep.mubr.f32.mxu0 0.0
    %1855 = vmatmul.mubr.f32.gmra.mrb[0].mxu0 %v1783
    %v1856 = vpop.f32.mrb[0].mxu0
    %v1857 = vadd.f32 0.0, %v1856
    %v1858 = vpop.f32.mrb[0].mxu0
    %1859 = vdwg.mxu0
    %s1860 = scalar_lea.vmem %s4, 32
    %v1861 = vld [vmem:[%s1860] sm:$0xff]
    %v1862 = vld [vmem:[%s1860 + $0x8] sm:$0xff]
    %s1863 = scalar_lea.vmem %s3, 280
    %v1864 = vld [vmem:[%s1863] sm:$0xff]
    %v1865 = vld [vmem:[%s1863 + $0x8] sm:$0xff]
    %v1866 = vld [vmem:[%s1863 + $0x10] sm:$0xff]
    %v1867 = vld [vmem:[%s1863 + $0x18] sm:$0xff]
    %v1868 = vld [vmem:[%s1863 + $0x20] sm:$0x1]
    %s1869 = scalar_lea.vmem %s3, 360
    %v1870 = vld [vmem:[%s1869] sm:$0xff]
    %v1871 = vld [vmem:[%s1869 + $0x8] sm:$0xff]
    %v1872 = vld [vmem:[%s1869 + $0x10] sm:$0xff]
    %v1873 = vld [vmem:[%s1869 + $0x18] sm:$0xff]
    %v1874 = vld [vmem:[%s1869 + $0x20] sm:$0x1]
    %s1875 = scalar_lea.vmem %s3, 440
    %v1876 = vld [vmem:[%s1875] sm:$0xff]
    %v1877 = vld [vmem:[%s1875 + $0x8] sm:$0xff]
    %v1878 = vld [vmem:[%s1875 + $0x10] sm:$0xff]
    %v1879 = vld [vmem:[%s1875 + $0x18] sm:$0xff]
    %v1880 = vld [vmem:[%s1875 + $0x20] sm:$0x1]
    %v1881 = vlaneseq
    %v1882 = vshrl.u32 %v1881, 7
    %v1883 = vsub.s32 0, %v1882
    %v1884 = vrot.slane %v1868, %v1883
    %1885 = vmatprep.subr.mxu0 0.0
    %1886 = vmatpush1.msra.mxu0 %v1864
    %1887 = vmatprep.subr.mxu0 0.0
    %1888 = vmatpush1.msra.mxu0 %v1865
    %1889 = vmatprep.subr.mxu0 0.0
    %1890 = vmatpush1.msra.mxu0 %v1866
    %1891 = vmatprep.subr.mxu0 0.0
    %1892 = vmatpush1.msra.mxu0 %v1867
    %1893 = vmatprep.subr.mxu0 0.0
    %1894 = vmatpush1.msra.mxu0 0.0
    %1895 = vmatprep.subr.mxu0 0.0
    %1896 = vmatpush1.msra.mxu0 0.0
    %1897 = vmatprep.subr.mxu0 0.0
    %1898 = vmatpush1.msra.mxu0 0.0
    %1899 = vmatprep.subr.mxu0 0.0
    %1900 = vmatpush1.msra.mxu0 0.0
    %1901 = vmatprep.subr.mxu0 0.0
    %1902 = vmatpush1.msra.mxu0 0.0
    %1903 = vmatprep.subr.mxu0 0.0
    %1904 = vmatpush1.msra.mxu0 0.0
    %1905 = vmatprep.subr.mxu0 0.0
    %1906 = vmatpush1.msra.mxu0 0.0
    %1907 = vmatprep.subr.mxu0 0.0
    %1908 = vmatpush1.msra.mxu0 0.0
    %1909 = vmatprep.subr.mxu0 0.0
    %1910 = vmatpush1.msra.mxu0 0.0
    %1911 = vmatprep.subr.mxu0 0.0
    %1912 = vmatpush1.msra.mxu0 0.0
    %1913 = vmatprep.subr.mxu0 0.0
    %1914 = vmatpush1.msra.mxu0 0.0
    %1915 = vmatprep.subr.mxu0 0.0
    %1916 = vmatpush1.msra.mxu0 0.0
    %1917 = vmatprep.subr.mxu0 0.0
    %1918 = vmatpush1.msra.mxu0 0.0
    %1919 = vmatprep.subr.mxu0 0.0
    %1920 = vmatpush1.msra.mxu0 0.0
    %1921 = vmatprep.subr.mxu0 0.0
    %1922 = vmatpush1.msra.mxu0 0.0
    %1923 = vmatprep.subr.mxu0 0.0
    %1924 = vmatpush1.msra.mxu0 0.0
    %1925 = vmatprep.subr.mxu0 0.0
    %1926 = vmatpush1.msra.mxu0 0.0
    %1927 = vmatprep.subr.mxu0 0.0
    %1928 = vmatpush1.msra.mxu0 0.0
    %1929 = vmatprep.subr.mxu0 0.0
    %1930 = vmatpush1.msra.mxu0 0.0
    %1931 = vmatprep.subr.mxu0 0.0
    %1932 = vmatpush1.msra.mxu0 0.0
    %1933 = vmatprep.subr.mxu0 0.0
    %1934 = vmatpush1.msra.mxu0 0.0
    %1935 = vmatprep.subr.mxu0 0.0
    %1936 = vmatpush1.msra.mxu0 0.0
    %1937 = vmatprep.subr.mxu0 0.0
    %1938 = vmatpush1.msra.mxu0 0.0
    %1939 = vmatprep.subr.mxu0 0.0
    %1940 = vmatpush1.msra.mxu0 0.0
    %1941 = vmatprep.subr.mxu0 0.0
    %1942 = vmatpush1.msra.mxu0 0.0
    %1943 = vmatprep.subr.mxu0 0.0
    %1944 = vmatpush1.msra.mxu0 0.0
    %1945 = vmatprep.subr.mxu0 0.0
    %1946 = vmatpush1.msra.mxu0 0.0
    %1947 = vmatprep.subr.mxu0 0.0
    %1948 = vmatpush1.msra.mxu0 0.0
    %1949 = vmatprep.mubr.f32.mxu0 0.0
    %1950 = vmatmul.mubr.f32.gmra.mrb[0].mxu0 %v1428
    %v1951 = vpop.f32.mrb[0].mxu0
    %v1952 = vadd.f32 %v1884, %v1951
    %v1953 = vpop.f32.mrb[0].mxu0
    %1954 = vmatprep.mubr.f32.mxu0 0.0
    %1955 = vmatmul.mubr.f32.gmra.mrb[0].mxu0 %v1431
    %v1956 = vpop.f32.mrb[0].mxu0
    %v1957 = vadd.f32 %v1884, %v1956
    %v1958 = vpop.f32.mrb[0].mxu0
    %1959 = vdwg.mxu0
    %v1960 = vlaneseq
    %v1961 = vshrl.u32 %v1960, 7
    %v1962 = vsub.s32 0, %v1961
    %v1963 = vrot.slane %v1874, %v1962
    %1964 = vmatprep.subr.mxu0 0.0
    %1965 = vmatpush1.msra.mxu0 %v1870
    %1966 = vmatprep.subr.mxu0 0.0
    %1967 = vmatpush1.msra.mxu0 %v1871
    %1968 = vmatprep.subr.mxu0 0.0
    %1969 = vmatpush1.msra.mxu0 %v1872
    %1970 = vmatprep.subr.mxu0 0.0
    %1971 = vmatpush1.msra.mxu0 %v1873
    %1972 = vmatprep.subr.mxu0 0.0
    %1973 = vmatpush1.msra.mxu0 0.0
    %1974 = vmatprep.subr.mxu0 0.0
    %1975 = vmatpush1.msra.mxu0 0.0
    %1976 = vmatprep.subr.mxu0 0.0
    %1977 = vmatpush1.msra.mxu0 0.0
    %1978 = vmatprep.subr.mxu0 0.0
    %1979 = vmatpush1.msra.mxu0 0.0
    %1980 = vmatprep.subr.mxu0 0.0
    %1981 = vmatpush1.msra.mxu0 0.0
    %1982 = vmatprep.subr.mxu0 0.0
    %1983 = vmatpush1.msra.mxu0 0.0
    %1984 = vmatprep.subr.mxu0 0.0
    %1985 = vmatpush1.msra.mxu0 0.0
    %1986 = vmatprep.subr.mxu0 0.0
    %1987 = vmatpush1.msra.mxu0 0.0
    %1988 = vmatprep.subr.mxu0 0.0
    %1989 = vmatpush1.msra.mxu0 0.0
    %1990 = vmatprep.subr.mxu0 0.0
    %1991 = vmatpush1.msra.mxu0 0.0
    %1992 = vmatprep.subr.mxu0 0.0
    %1993 = vmatpush1.msra.mxu0 0.0
    %1994 = vmatprep.subr.mxu0 0.0
    %1995 = vmatpush1.msra.mxu0 0.0
    %1996 = vmatprep.subr.mxu0 0.0
    %1997 = vmatpush1.msra.mxu0 0.0
    %1998 = vmatprep.subr.mxu0 0.0
    %1999 = vmatpush1.msra.mxu0 0.0
    %2000 = vmatprep.subr.mxu0 0.0
    %2001 = vmatpush1.msra.mxu0 0.0
    %2002 = vmatprep.subr.mxu0 0.0
    %2003 = vmatpush1.msra.mxu0 0.0
    %2004 = vmatprep.subr.mxu0 0.0
    %2005 = vmatpush1.msra.mxu0 0.0
    %2006 = vmatprep.subr.mxu0 0.0
    %2007 = vmatpush1.msra.mxu0 0.0
    %2008 = vmatprep.subr.mxu0 0.0
    %2009 = vmatpush1.msra.mxu0 0.0
    %2010 = vmatprep.subr.mxu0 0.0
    %2011 = vmatpush1.msra.mxu0 0.0
    %2012 = vmatprep.subr.mxu0 0.0
    %2013 = vmatpush1.msra.mxu0 0.0
    %2014 = vmatprep.subr.mxu0 0.0
    %2015 = vmatpush1.msra.mxu0 0.0
    %2016 = vmatprep.subr.mxu0 0.0
    %2017 = vmatpush1.msra.mxu0 0.0
    %2018 = vmatprep.subr.mxu0 0.0
    %2019 = vmatpush1.msra.mxu0 0.0
    %2020 = vmatprep.subr.mxu0 0.0
    %2021 = vmatpush1.msra.mxu0 0.0
    %2022 = vmatprep.subr.mxu0 0.0
    %2023 = vmatpush1.msra.mxu0 0.0
    %2024 = vmatprep.subr.mxu0 0.0
    %2025 = vmatpush1.msra.mxu0 0.0
    %2026 = vmatprep.subr.mxu0 0.0
    %2027 = vmatpush1.msra.mxu0 0.0
    %2028 = vmatprep.mubr.f32.mxu0 0.0
    %2029 = vmatmul.mubr.f32.gmra.mrb[0].mxu0 %v1428
    %v2030 = vpop.f32.mrb[0].mxu0
    %v2031 = vadd.f32 %v1963, %v2030
    %v2032 = vpop.f32.mrb[0].mxu0
    %2033 = vmatprep.mubr.f32.mxu0 0.0
    %2034 = vmatmul.mubr.f32.gmra.mrb[0].mxu0 %v1431
    %v2035 = vpop.f32.mrb[0].mxu0
    %v2036 = vadd.f32 %v1963, %v2035
    %v2037 = vpop.f32.mrb[0].mxu0
    %2038 = vdwg.mxu0
    %v2039 = vlaneseq
    %v2040 = vshrl.u32 %v2039, 7
    %v2041 = vsub.s32 0, %v2040
    %v2042 = vrot.slane %v1880, %v2041
    %2043 = vmatprep.subr.mxu0 0.0
    %2044 = vmatpush1.msra.mxu0 %v1876
    %2045 = vmatprep.subr.mxu0 0.0
    %2046 = vmatpush1.msra.mxu0 %v1877
    %2047 = vmatprep.subr.mxu0 0.0
    %2048 = vmatpush1.msra.mxu0 %v1878
    %2049 = vmatprep.subr.mxu0 0.0
    %2050 = vmatpush1.msra.mxu0 %v1879
    %2051 = vmatprep.subr.mxu0 0.0
    %2052 = vmatpush1.msra.mxu0 0.0
    %2053 = vmatprep.subr.mxu0 0.0
    %2054 = vmatpush1.msra.mxu0 0.0
    %2055 = vmatprep.subr.mxu0 0.0
    %2056 = vmatpush1.msra.mxu0 0.0
    %2057 = vmatprep.subr.mxu0 0.0
    %2058 = vmatpush1.msra.mxu0 0.0
    %2059 = vmatprep.subr.mxu0 0.0
    %2060 = vmatpush1.msra.mxu0 0.0
    %2061 = vmatprep.subr.mxu0 0.0
    %2062 = vmatpush1.msra.mxu0 0.0
    %2063 = vmatprep.subr.mxu0 0.0
    %2064 = vmatpush1.msra.mxu0 0.0
    %2065 = vmatprep.subr.mxu0 0.0
    %2066 = vmatpush1.msra.mxu0 0.0
    %2067 = vmatprep.subr.mxu0 0.0
    %2068 = vmatpush1.msra.mxu0 0.0
    %2069 = vmatprep.subr.mxu0 0.0
    %2070 = vmatpush1.msra.mxu0 0.0
    %2071 = vmatprep.subr.mxu0 0.0
    %2072 = vmatpush1.msra.mxu0 0.0
    %2073 = vmatprep.subr.mxu0 0.0
    %2074 = vmatpush1.msra.mxu0 0.0
    %2075 = vmatprep.subr.mxu0 0.0
    %2076 = vmatpush1.msra.mxu0 0.0
    %2077 = vmatprep.subr.mxu0 0.0
    %2078 = vmatpush1.msra.mxu0 0.0
    %2079 = vmatprep.subr.mxu0 0.0
    %2080 = vmatpush1.msra.mxu0 0.0
    %2081 = vmatprep.subr.mxu0 0.0
    %2082 = vmatpush1.msra.mxu0 0.0
    %2083 = vmatprep.subr.mxu0 0.0
    %2084 = vmatpush1.msra.mxu0 0.0
    %2085 = vmatprep.subr.mxu0 0.0
    %2086 = vmatpush1.msra.mxu0 0.0
    %2087 = vmatprep.subr.mxu0 0.0
    %2088 = vmatpush1.msra.mxu0 0.0
    %2089 = vmatprep.subr.mxu0 0.0
    %2090 = vmatpush1.msra.mxu0 0.0
    %2091 = vmatprep.subr.mxu0 0.0
    %2092 = vmatpush1.msra.mxu0 0.0
    %2093 = vmatprep.subr.mxu0 0.0
    %2094 = vmatpush1.msra.mxu0 0.0
    %2095 = vmatprep.subr.mxu0 0.0
    %2096 = vmatpush1.msra.mxu0 0.0
    %2097 = vmatprep.subr.mxu0 0.0
    %2098 = vmatpush1.msra.mxu0 0.0
    %2099 = vmatprep.subr.mxu0 0.0
    %2100 = vmatpush1.msra.mxu0 0.0
    %2101 = vmatprep.subr.mxu0 0.0
    %2102 = vmatpush1.msra.mxu0 0.0
    %2103 = vmatprep.subr.mxu0 0.0
    %2104 = vmatpush1.msra.mxu0 0.0
    %2105 = vmatprep.subr.mxu0 0.0
    %2106 = vmatpush1.msra.mxu0 0.0
    %2107 = vmatprep.mubr.f32.mxu0 0.0
    %2108 = vmatmul.mubr.f32.gmra.mrb[0].mxu0 %v1428
    %v2109 = vpop.f32.mrb[0].mxu0
    %v2110 = vadd.f32 %v2042, %v2109
    %v2111 = vpop.f32.mrb[0].mxu0
    %2112 = vmatprep.mubr.f32.mxu0 0.0
    %2113 = vmatmul.mubr.f32.gmra.mrb[0].mxu0 %v1431
    %v2114 = vpop.f32.mrb[0].mxu0
    %v2115 = vadd.f32 %v2042, %v2114
    %v2116 = vpop.f32.mrb[0].mxu0
    %2117 = vdwg.mxu0
    %v2119 = vsel %vm318, %v1952, 0
    %v2122 = vsel %vm318, %v1957, 0
    %v2125 = vsel %vm318, %v2031, 0
    %v2128 = vsel %vm318, %v2036, 0
    %2130 = vmatprep.subr.mxu0 0.0
    %2131 = vmatpush1.xpose.msra.mxu0 %v2125
    %2132 = vmatprep.subr.mxu0 0.0
    %2133 = vmatpush1.xpose.msra.mxu0 %v2128
    %2134 = vmatprep.subr.mxu0 0.0
    %2135 = vmatpush1.xpose.msra.mxu0 0.0
    %2136 = vmatprep.subr.mxu0 0.0
    %2137 = vmatpush1.xpose.msra.mxu0 0.0
    %2138 = vmatprep.subr.mxu0 0.0
    %2139 = vmatpush1.xpose.msra.mxu0 0.0
    %2140 = vmatprep.subr.mxu0 0.0
    %2141 = vmatpush1.xpose.msra.mxu0 0.0
    %2142 = vmatprep.subr.mxu0 0.0
    %2143 = vmatpush1.xpose.msra.mxu0 0.0
    %2144 = vmatprep.subr.mxu0 0.0
    %2145 = vmatpush1.xpose.msra.mxu0 0.0
    %2146 = vmatprep.subr.mxu0 0.0
    %2147 = vmatpush1.xpose.msra.mxu0 0.0
    %2148 = vmatprep.subr.mxu0 0.0
    %2149 = vmatpush1.xpose.msra.mxu0 0.0
    %2150 = vmatprep.subr.mxu0 0.0
    %2151 = vmatpush1.xpose.msra.mxu0 0.0
    %2152 = vmatprep.subr.mxu0 0.0
    %2153 = vmatpush1.xpose.msra.mxu0 0.0
    %2154 = vmatprep.subr.mxu0 0.0
    %2155 = vmatpush1.xpose.msra.mxu0 0.0
    %2156 = vmatprep.subr.mxu0 0.0
    %2157 = vmatpush1.xpose.msra.mxu0 0.0
    %2158 = vmatprep.subr.mxu0 0.0
    %2159 = vmatpush1.xpose.msra.mxu0 0.0
    %2160 = vmatprep.subr.mxu0 0.0
    %2161 = vmatpush1.xpose.msra.mxu0 0.0
    %2162 = vmatprep.subr.mxu0 0.0
    %2163 = vmatpush1.xpose.msra.mxu0 0.0
    %2164 = vmatprep.subr.mxu0 0.0
    %2165 = vmatpush1.xpose.msra.mxu0 0.0
    %2166 = vmatprep.subr.mxu0 0.0
    %2167 = vmatpush1.xpose.msra.mxu0 0.0
    %2168 = vmatprep.subr.mxu0 0.0
    %2169 = vmatpush1.xpose.msra.mxu0 0.0
    %2170 = vmatprep.subr.mxu0 0.0
    %2171 = vmatpush1.xpose.msra.mxu0 0.0
    %2172 = vmatprep.subr.mxu0 0.0
    %2173 = vmatpush1.xpose.msra.mxu0 0.0
    %2174 = vmatprep.subr.mxu0 0.0
    %2175 = vmatpush1.xpose.msra.mxu0 0.0
    %2176 = vmatprep.subr.mxu0 0.0
    %2177 = vmatpush1.xpose.msra.mxu0 0.0
    %2178 = vmatprep.subr.mxu0 0.0
    %2179 = vmatpush1.xpose.msra.mxu0 0.0
    %2180 = vmatprep.subr.mxu0 0.0
    %2181 = vmatpush1.xpose.msra.mxu0 0.0
    %2182 = vmatprep.subr.mxu0 0.0
    %2183 = vmatpush1.xpose.msra.mxu0 0.0
    %2184 = vmatprep.subr.mxu0 0.0
    %2185 = vmatpush1.xpose.msra.mxu0 0.0
    %2186 = vmatprep.subr.mxu0 0.0
    %2187 = vmatpush1.xpose.msra.mxu0 0.0
    %2188 = vmatprep.subr.mxu0 0.0
    %2189 = vmatpush1.xpose.msra.mxu0 0.0
    %2190 = vmatprep.subr.mxu0 0.0
    %2191 = vmatpush1.xpose.msra.mxu0 0.0
    %2192 = vmatprep.subr.mxu0 0.0
    %2193 = vmatpush1.xpose.msra.mxu0 0.0
    %2194 = vmatprep.mubr.f32.mxu0 0.0
    %2195 = vmatmul.mubr.f32.gmra.mrb[0].mxu0 %v2119
    %v2196 = vpop.f32.mrb[0].mxu0
    %v2197 = vadd.f32 0.0, %v2196
    %v2198 = vpop.f32.mrb[0].mxu0
    %2199 = vmatprep.mubr.f32.mxu0 0.0
    %2200 = vmatmul.mubr.f32.gmra.mrb[0].mxu0 %v2122
    %v2201 = vpop.f32.mrb[0].mxu0
    %v2202 = vadd.f32 0.0, %v2201
    %v2203 = vpop.f32.mrb[0].mxu0
    %2204 = vdwg.mxu0
    %v2205 = vmul.f32 %v2197, 0.25
    %v2206 = vmul.f32 %v2202, 0.25
    %v2207 = vadd.f32 %v2205, %v41
    %v2208 = vadd.f32 %v2206, %v42
    %v2209 = vsel %vm318, %v2207, -inf
    %2210 = vmax.xlane.f32.xlu0 %v2209
    %v2211 = vpop.xlane.xlu0 %2210
    %v2212 = vsel %vm318, %v2208, -inf
    %2213 = vmax.xlane.f32.xlu0 %v2212
    %v2214 = vpop.xlane.xlu0 %2213
    %v2215 = vsub.f32 %v2207, %v2211
    %v2216 = vsub.f32 %v2208, %v2214
    %v2217 = vmul.f32 %v2215, 1.442695
    %v2218 = vpow.pop %v2217
    %v2219 = vmul.f32 %v2216, 1.442695
    %v2220 = vpow.pop %v2219
    %v2221 = vsel %vm318, %v2218, 0.0
    %2222 = vadd.xlane.f32.xlu0 %v2221
    %v2223 = vpop.xlane.xlu0 %2222
    %v2224 = vsel %vm318, %v2220, 0.0
    %2225 = vadd.xlane.f32.xlu0 %v2224
    %v2226 = vpop.xlane.xlu0 %2225
    %v2227 = vrcp.pop %v2223
    %v2228 = vrcp.pop %v2226
    %v2229 = vmul.f32 %v2218, %v2227
    %v2230 = vmul.f32 %v2220, %v2228
    %v2232 = vsel %vm318, %v2229, 0
    %v2235 = vsel %vm318, %v2230, 0
    %2237 = vmatprep.subr.mxu0 0.0
    %2238 = vmatpush1.msra.mxu0 %v2110
    %2239 = vmatprep.subr.mxu0 0.0
    %2240 = vmatpush1.msra.mxu0 %v2115
    %2241 = vmatprep.subr.mxu0 0.0
    %2242 = vmatpush1.msra.mxu0 0.0
    %2243 = vmatprep.subr.mxu0 0.0
    %2244 = vmatpush1.msra.mxu0 0.0
    %2245 = vmatprep.subr.mxu0 0.0
    %2246 = vmatpush1.msra.mxu0 0.0
    %2247 = vmatprep.subr.mxu0 0.0
    %2248 = vmatpush1.msra.mxu0 0.0
    %2249 = vmatprep.subr.mxu0 0.0
    %2250 = vmatpush1.msra.mxu0 0.0
    %2251 = vmatprep.subr.mxu0 0.0
    %2252 = vmatpush1.msra.mxu0 0.0
    %2253 = vmatprep.subr.mxu0 0.0
    %2254 = vmatpush1.msra.mxu0 0.0
    %2255 = vmatprep.subr.mxu0 0.0
    %2256 = vmatpush1.msra.mxu0 0.0
    %2257 = vmatprep.subr.mxu0 0.0
    %2258 = vmatpush1.msra.mxu0 0.0
    %2259 = vmatprep.subr.mxu0 0.0
    %2260 = vmatpush1.msra.mxu0 0.0
    %2261 = vmatprep.subr.mxu0 0.0
    %2262 = vmatpush1.msra.mxu0 0.0
    %2263 = vmatprep.subr.mxu0 0.0
    %2264 = vmatpush1.msra.mxu0 0.0
    %2265 = vmatprep.subr.mxu0 0.0
    %2266 = vmatpush1.msra.mxu0 0.0
    %2267 = vmatprep.subr.mxu0 0.0
    %2268 = vmatpush1.msra.mxu0 0.0
    %2269 = vmatprep.subr.mxu0 0.0
    %2270 = vmatpush1.msra.mxu0 0.0
    %2271 = vmatprep.subr.mxu0 0.0
    %2272 = vmatpush1.msra.mxu0 0.0
    %2273 = vmatprep.subr.mxu0 0.0
    %2274 = vmatpush1.msra.mxu0 0.0
    %2275 = vmatprep.subr.mxu0 0.0
    %2276 = vmatpush1.msra.mxu0 0.0
    %2277 = vmatprep.subr.mxu0 0.0
    %2278 = vmatpush1.msra.mxu0 0.0
    %2279 = vmatprep.subr.mxu0 0.0
    %2280 = vmatpush1.msra.mxu0 0.0
    %2281 = vmatprep.subr.mxu0 0.0
    %2282 = vmatpush1.msra.mxu0 0.0
    %2283 = vmatprep.subr.mxu0 0.0
    %2284 = vmatpush1.msra.mxu0 0.0
    %2285 = vmatprep.subr.mxu0 0.0
    %2286 = vmatpush1.msra.mxu0 0.0
    %2287 = vmatprep.subr.mxu0 0.0
    %2288 = vmatpush1.msra.mxu0 0.0
    %2289 = vmatprep.subr.mxu0 0.0
    %2290 = vmatpush1.msra.mxu0 0.0
    %2291 = vmatprep.subr.mxu0 0.0
    %2292 = vmatpush1.msra.mxu0 0.0
    %2293 = vmatprep.subr.mxu0 0.0
    %2294 = vmatpush1.msra.mxu0 0.0
    %2295 = vmatprep.subr.mxu0 0.0
    %2296 = vmatpush1.msra.mxu0 0.0
    %2297 = vmatprep.subr.mxu0 0.0
    %2298 = vmatpush1.msra.mxu0 0.0
    %2299 = vmatprep.subr.mxu0 0.0
    %2300 = vmatpush1.msra.mxu0 0.0
    %2301 = vmatprep.mubr.f32.mxu0 0.0
    %2302 = vmatmul.mubr.f32.gmra.mrb[0].mxu0 %v2232
    %v2303 = vpop.f32.mrb[0].mxu0
    %v2304 = vadd.f32 0.0, %v2303
    %v2305 = vpop.f32.mrb[0].mxu0
    %2306 = vmatprep.mubr.f32.mxu0 0.0
    %2307 = vmatmul.mubr.f32.gmra.mrb[0].mxu0 %v2235
    %v2308 = vpop.f32.mrb[0].mxu0
    %v2309 = vadd.f32 0.0, %v2308
    %v2310 = vpop.f32.mrb[0].mxu0
    %2311 = vdwg.mxu0
    %s2312 = scalar_lea.vmem %s4, 48
    %v2313 = vld [vmem:[%s2312] sm:$0xff]
    %v2314 = vld [vmem:[%s2312 + $0x8] sm:$0xff]
    %v2316 = vsel %vm318, %v2304, 0
    %v2319 = vsel %vm318, %v2309, 0
    %2321 = vmatprep.subr.mxu0 0.0
    %2322 = vmatpush1.msra.mxu0 %v2313
    %2323 = vmatprep.subr.mxu0 0.0
    %2324 = vmatpush1.msra.mxu0 %v2314
    %2325 = vmatprep.subr.mxu0 0.0
    %2326 = vmatpush1.msra.mxu0 0.0
    %2327 = vmatprep.subr.mxu0 0.0
    %2328 = vmatpush1.msra.mxu0 0.0
    %2329 = vmatprep.subr.mxu0 0.0
    %2330 = vmatpush1.msra.mxu0 0.0
    %2331 = vmatprep.subr.mxu0 0.0
    %2332 = vmatpush1.msra.mxu0 0.0
    %2333 = vmatprep.subr.mxu0 0.0
    %2334 = vmatpush1.msra.mxu0 0.0
    %2335 = vmatprep.subr.mxu0 0.0
    %2336 = vmatpush1.msra.mxu0 0.0
    %2337 = vmatprep.subr.mxu0 0.0
    %2338 = vmatpush1.msra.mxu0 0.0
    %2339 = vmatprep.subr.mxu0 0.0
    %2340 = vmatpush1.msra.mxu0 0.0
    %2341 = vmatprep.subr.mxu0 0.0
    %2342 = vmatpush1.msra.mxu0 0.0
    %2343 = vmatprep.subr.mxu0 0.0
    %2344 = vmatpush1.msra.mxu0 0.0
    %2345 = vmatprep.subr.mxu0 0.0
    %2346 = vmatpush1.msra.mxu0 0.0
    %2347 = vmatprep.subr.mxu0 0.0
    %2348 = vmatpush1.msra.mxu0 0.0
    %2349 = vmatprep.subr.mxu0 0.0
    %2350 = vmatpush1.msra.mxu0 0.0
    %2351 = vmatprep.subr.mxu0 0.0
    %2352 = vmatpush1.msra.mxu0 0.0
    %2353 = vmatprep.subr.mxu0 0.0
    %2354 = vmatpush1.msra.mxu0 0.0
    %2355 = vmatprep.subr.mxu0 0.0
    %2356 = vmatpush1.msra.mxu0 0.0
    %2357 = vmatprep.subr.mxu0 0.0
    %2358 = vmatpush1.msra.mxu0 0.0
    %2359 = vmatprep.subr.mxu0 0.0
    %2360 = vmatpush1.msra.mxu0 0.0
    %2361 = vmatprep.subr.mxu0 0.0
    %2362 = vmatpush1.msra.mxu0 0.0
    %2363 = vmatprep.subr.mxu0 0.0
    %2364 = vmatpush1.msra.mxu0 0.0
    %2365 = vmatprep.subr.mxu0 0.0
    %2366 = vmatpush1.msra.mxu0 0.0
    %2367 = vmatprep.subr.mxu0 0.0
    %2368 = vmatpush1.msra.mxu0 0.0
    %2369 = vmatprep.subr.mxu0 0.0
    %2370 = vmatpush1.msra.mxu0 0.0
    %2371 = vmatprep.subr.mxu0 0.0
    %2372 = vmatpush1.msra.mxu0 0.0
    %2373 = vmatprep.subr.mxu0 0.0
    %2374 = vmatpush1.msra.mxu0 0.0
    %2375 = vmatprep.subr.mxu0 0.0
    %2376 = vmatpush1.msra.mxu0 0.0
    %2377 = vmatprep.subr.mxu0 0.0
    %2378 = vmatpush1.msra.mxu0 0.0
    %2379 = vmatprep.subr.mxu0 0.0
    %2380 = vmatpush1.msra.mxu0 0.0
    %2381 = vmatprep.subr.mxu0 0.0
    %2382 = vmatpush1.msra.mxu0 0.0
    %2383 = vmatprep.subr.mxu0 0.0
    %2384 = vmatpush1.msra.mxu0 0.0
    %2385 = vmatprep.mubr.f32.mxu0 0.0
    %2386 = vmatmul.mubr.f32.gmra.mrb[0].mxu0 %v2316
    %v2387 = vpop.f32.mrb[0].mxu0
    %v2388 = vadd.f32 0.0, %v2387
    %v2389 = vpop.f32.mrb[0].mxu0
    %2390 = vmatprep.mubr.f32.mxu0 0.0
    %2391 = vmatmul.mubr.f32.gmra.mrb[0].mxu0 %v2319
    %v2392 = vpop.f32.mrb[0].mxu0
    %v2393 = vadd.f32 0.0, %v2392
    %v2394 = vpop.f32.mrb[0].mxu0
    %2395 = vdwg.mxu0
    %v2397 = vsel %vm318, %v1852, 0
    %v2400 = vsel %vm318, %v1857, 0
    %2402 = vmatprep.subr.mxu0 0.0
    %2403 = vmatpush1.msra.mxu0 %v1861
    %2404 = vmatprep.subr.mxu0 0.0
    %2405 = vmatpush1.msra.mxu0 %v1862
    %2406 = vmatprep.subr.mxu0 0.0
    %2407 = vmatpush1.msra.mxu0 0.0
    %2408 = vmatprep.subr.mxu0 0.0
    %2409 = vmatpush1.msra.mxu0 0.0
    %2410 = vmatprep.subr.mxu0 0.0
    %2411 = vmatpush1.msra.mxu0 0.0
    %2412 = vmatprep.subr.mxu0 0.0
    %2413 = vmatpush1.msra.mxu0 0.0
    %2414 = vmatprep.subr.mxu0 0.0
    %2415 = vmatpush1.msra.mxu0 0.0
    %2416 = vmatprep.subr.mxu0 0.0
    %2417 = vmatpush1.msra.mxu0 0.0
    %2418 = vmatprep.subr.mxu0 0.0
    %2419 = vmatpush1.msra.mxu0 0.0
    %2420 = vmatprep.subr.mxu0 0.0
    %2421 = vmatpush1.msra.mxu0 0.0
    %2422 = vmatprep.subr.mxu0 0.0
    %2423 = vmatpush1.msra.mxu0 0.0
    %2424 = vmatprep.subr.mxu0 0.0
    %2425 = vmatpush1.msra.mxu0 0.0
    %2426 = vmatprep.subr.mxu0 0.0
    %2427 = vmatpush1.msra.mxu0 0.0
    %2428 = vmatprep.subr.mxu0 0.0
    %2429 = vmatpush1.msra.mxu0 0.0
    %2430 = vmatprep.subr.mxu0 0.0
    %2431 = vmatpush1.msra.mxu0 0.0
    %2432 = vmatprep.subr.mxu0 0.0
    %2433 = vmatpush1.msra.mxu0 0.0
    %2434 = vmatprep.subr.mxu0 0.0
    %2435 = vmatpush1.msra.mxu0 0.0
    %2436 = vmatprep.subr.mxu0 0.0
    %2437 = vmatpush1.msra.mxu0 0.0
    %2438 = vmatprep.subr.mxu0 0.0
    %2439 = vmatpush1.msra.mxu0 0.0
    %2440 = vmatprep.subr.mxu0 0.0
    %2441 = vmatpush1.msra.mxu0 0.0
    %2442 = vmatprep.subr.mxu0 0.0
    %2443 = vmatpush1.msra.mxu0 0.0
    %2444 = vmatprep.subr.mxu0 0.0
    %2445 = vmatpush1.msra.mxu0 0.0
    %2446 = vmatprep.subr.mxu0 0.0
    %2447 = vmatpush1.msra.mxu0 0.0
    %2448 = vmatprep.subr.mxu0 0.0
    %2449 = vmatpush1.msra.mxu0 0.0
    %2450 = vmatprep.subr.mxu0 0.0
    %2451 = vmatpush1.msra.mxu0 0.0
    %2452 = vmatprep.subr.mxu0 0.0
    %2453 = vmatpush1.msra.mxu0 0.0
    %2454 = vmatprep.subr.mxu0 0.0
    %2455 = vmatpush1.msra.mxu0 0.0
    %2456 = vmatprep.subr.mxu0 0.0
    %2457 = vmatpush1.msra.mxu0 0.0
    %2458 = vmatprep.subr.mxu0 0.0
    %2459 = vmatpush1.msra.mxu0 0.0
    %2460 = vmatprep.subr.mxu0 0.0
    %2461 = vmatpush1.msra.mxu0 0.0
    %2462 = vmatprep.subr.mxu0 0.0
    %2463 = vmatpush1.msra.mxu0 0.0
    %2464 = vmatprep.subr.mxu0 0.0
    %2465 = vmatpush1.msra.mxu0 0.0
    %2466 = vmatprep.mubr.f32.mxu0 0.0
    %2467 = vmatmul.mubr.f32.gmra.mrb[0].mxu0 %v2397
    %v2468 = vpop.f32.mrb[0].mxu0
    %v2469 = vadd.f32 %v2388, %v2468
    %v2470 = vpop.f32.mrb[0].mxu0
    %2471 = vmatprep.mubr.f32.mxu0 0.0
    %2472 = vmatmul.mubr.f32.gmra.mrb[0].mxu0 %v2400
    %v2473 = vpop.f32.mrb[0].mxu0
    %v2474 = vadd.f32 %v2393, %v2473
    %v2475 = vpop.f32.mrb[0].mxu0
    %2476 = vdwg.mxu0
    %v2477 = vlaneseq
    %v2478 = vshrl.u32 %v2477, 7
    %v2479 = vsub.s32 0, %v2478
    %v2480 = vrot.slane %v1398, %v2479
    %v2481 = vadd.f32 %v2469, %v2480
    %v2482 = vadd.f32 %v2474, %v2480
    %v2483 = vadd.f32 %v1387, %v2481
    %v2484 = vadd.f32 %v1388, %v2482
    %v2485 = vsel %vm78, %v2483, 0.0
    %2486 = vadd.xlane.f32.xlu0 %v2485
    %v2487 = vpop.xlane.xlu0 %2486
    %v2488 = vsel %vm78, %v2484, 0.0
    %2489 = vadd.xlane.f32.xlu0 %v2488
    %v2490 = vpop.xlane.xlu0 %2489
    %v2491 = vmul.f32 %v2487, %v1143
    %v2492 = vmul.f32 %v2490, %v1143
    %v2493 = vsub.f32 %v2483, %v2491
    %v2494 = vsub.f32 %v2484, %v2492
    %v2495 = vmul.f32 %v2493, %v2493
    %v2496 = vmul.f32 %v2494, %v2494
    %v2497 = vsel %vm78, %v2495, 0.0
    %2498 = vadd.xlane.f32.xlu0 %v2497
    %v2499 = vpop.xlane.xlu0 %2498
    %v2500 = vsel %vm78, %v2496, 0.0
    %2501 = vadd.xlane.f32.xlu0 %v2500
    %v2502 = vpop.xlane.xlu0 %2501
    %v2503 = vmul.f32 %v2499, %v1143
    %v2504 = vmul.f32 %v2502, %v1143
    %v2505 = vadd.f32 %v2503, 1e-05
    %v2506 = vadd.f32 %v2504, 1e-05
    %v2507 = vrsqrt.pop %v2505
    %v2508 = vrsqrt.pop %v2506
    %v2509 = vmul.f32 %v2493, %v2507
    %v2510 = vmul.f32 %v2494, %v2508
    %v2511 = vlaneseq
    %v2512 = vshrl.u32 %v2511, 7
    %v2513 = vsub.s32 2, %v2512
    %v2514 = vrot.slane %v1398, %v2513
    %v2515 = vmul.f32 %v2509, %v2514
    %v2516 = vmul.f32 %v2510, %v2514
    %v2517 = vlaneseq
    %v2518 = vshrl.u32 %v2517, 7
    %v2519 = vsub.s32 3, %v2518
    %v2520 = vrot.slane %v1398, %v2519
    %v2521 = vadd.f32 %v2515, %v2520
    %v2522 = vadd.f32 %v2516, %v2520
    %v2523 = vlaneseq
    %v2524 = vshrl.u32 %v2523, 7
    %v2525 = vsub.s32 0, %v2524
    %v2526 = vrot.slane %v1404, %v2525
    %v2528 = vsel %vm78, %v2521, 0
    %v2531 = vsel %vm78, %v2522, 0
    %2533 = vmatprep.subr.mxu0 0.0
    %2534 = vmatpush1.msra.mxu0 %v1400
    %2535 = vmatprep.subr.mxu0 0.0
    %2536 = vmatpush1.msra.mxu0 %v1401
    %2537 = vmatprep.subr.mxu0 0.0
    %2538 = vmatpush1.msra.mxu0 %v1402
    %2539 = vmatprep.subr.mxu0 0.0
    %2540 = vmatpush1.msra.mxu0 %v1403
    %2541 = vmatprep.subr.mxu0 0.0
    %2542 = vmatpush1.msra.mxu0 0.0
    %2543 = vmatprep.subr.mxu0 0.0
    %2544 = vmatpush1.msra.mxu0 0.0
    %2545 = vmatprep.subr.mxu0 0.0
    %2546 = vmatpush1.msra.mxu0 0.0
    %2547 = vmatprep.subr.mxu0 0.0
    %2548 = vmatpush1.msra.mxu0 0.0
    %2549 = vmatprep.subr.mxu0 0.0
    %2550 = vmatpush1.msra.mxu0 0.0
    %2551 = vmatprep.subr.mxu0 0.0
    %2552 = vmatpush1.msra.mxu0 0.0
    %2553 = vmatprep.subr.mxu0 0.0
    %2554 = vmatpush1.msra.mxu0 0.0
    %2555 = vmatprep.subr.mxu0 0.0
    %2556 = vmatpush1.msra.mxu0 0.0
    %2557 = vmatprep.subr.mxu0 0.0
    %2558 = vmatpush1.msra.mxu0 0.0
    %2559 = vmatprep.subr.mxu0 0.0
    %2560 = vmatpush1.msra.mxu0 0.0
    %2561 = vmatprep.subr.mxu0 0.0
    %2562 = vmatpush1.msra.mxu0 0.0
    %2563 = vmatprep.subr.mxu0 0.0
    %2564 = vmatpush1.msra.mxu0 0.0
    %2565 = vmatprep.subr.mxu0 0.0
    %2566 = vmatpush1.msra.mxu0 0.0
    %2567 = vmatprep.subr.mxu0 0.0
    %2568 = vmatpush1.msra.mxu0 0.0
    %2569 = vmatprep.subr.mxu0 0.0
    %2570 = vmatpush1.msra.mxu0 0.0
    %2571 = vmatprep.subr.mxu0 0.0
    %2572 = vmatpush1.msra.mxu0 0.0
    %2573 = vmatprep.subr.mxu0 0.0
    %2574 = vmatpush1.msra.mxu0 0.0
    %2575 = vmatprep.subr.mxu0 0.0
    %2576 = vmatpush1.msra.mxu0 0.0
    %2577 = vmatprep.subr.mxu0 0.0
    %2578 = vmatpush1.msra.mxu0 0.0
    %2579 = vmatprep.subr.mxu0 0.0
    %2580 = vmatpush1.msra.mxu0 0.0
    %2581 = vmatprep.subr.mxu0 0.0
    %2582 = vmatpush1.msra.mxu0 0.0
    %2583 = vmatprep.subr.mxu0 0.0
    %2584 = vmatpush1.msra.mxu0 0.0
    %2585 = vmatprep.subr.mxu0 0.0
    %2586 = vmatpush1.msra.mxu0 0.0
    %2587 = vmatprep.subr.mxu0 0.0
    %2588 = vmatpush1.msra.mxu0 0.0
    %2589 = vmatprep.subr.mxu0 0.0
    %2590 = vmatpush1.msra.mxu0 0.0
    %2591 = vmatprep.subr.mxu0 0.0
    %2592 = vmatpush1.msra.mxu0 0.0
    %2593 = vmatprep.subr.mxu0 0.0
    %2594 = vmatpush1.msra.mxu0 0.0
    %2595 = vmatprep.subr.mxu0 0.0
    %2596 = vmatpush1.msra.mxu0 0.0
    %2597 = vmatprep.mubr.f32.mxu0 0.0
    %2598 = vmatmul.mubr.f32.gmra.mrb[0].mxu0 %v2528
    %v2599 = vpop.f32.mrb[0].mxu0
    %v2600 = vadd.f32 %v2526, %v2599
    %v2601 = vpop.f32.mrb[0].mxu0
    %2602 = vmatprep.mubr.f32.mxu0 0.0
    %2603 = vmatmul.mubr.f32.gmra.mrb[0].mxu0 %v2531
    %v2604 = vpop.f32.mrb[0].mxu0
    %v2605 = vadd.f32 %v2526, %v2604
    %v2606 = vpop.f32.mrb[0].mxu0
    %2607 = vdwg.mxu0
    %v2608 = vmax.f32 %v2600, 0.0
    %v2609 = vmax.f32 %v2605, 0.0
    %v2610 = vlaneseq
    %v2611 = vshrl.u32 %v2610, 7
    %v2612 = vsub.s32 1, %v2611
    %v2613 = vrot.slane %v1398, %v2612
    %v2615 = vsel %vm1267, %v2608, 0
    %v2618 = vsel %vm1267, %v2609, 0
    %2620 = vmatprep.subr.mxu0 0.0
    %2621 = vmatpush1.msra.mxu0 %v1390
    %2622 = vmatprep.subr.mxu0 0.0
    %2623 = vmatpush1.msra.mxu0 %v1391
    %2624 = vmatprep.subr.mxu0 0.0
    %2625 = vmatpush1.msra.mxu0 %v1392
    %2626 = vmatprep.subr.mxu0 0.0
    %2627 = vmatpush1.msra.mxu0 %v1393
    %2628 = vmatprep.subr.mxu0 0.0
    %2629 = vmatpush1.msra.mxu0 %v1394
    %2630 = vmatprep.subr.mxu0 0.0
    %2631 = vmatpush1.msra.mxu0 %v1395
    %2632 = vmatprep.subr.mxu0 0.0
    %2633 = vmatpush1.msra.mxu0 %v1396
    %2634 = vmatprep.subr.mxu0 0.0
    %2635 = vmatpush1.msra.mxu0 %v1397
    %2636 = vmatprep.subr.mxu0 0.0
    %2637 = vmatpush1.msra.mxu0 0.0
    %2638 = vmatprep.subr.mxu0 0.0
    %2639 = vmatpush1.msra.mxu0 0.0
    %2640 = vmatprep.subr.mxu0 0.0
    %2641 = vmatpush1.msra.mxu0 0.0
    %2642 = vmatprep.subr.mxu0 0.0
    %2643 = vmatpush1.msra.mxu0 0.0
    %2644 = vmatprep.subr.mxu0 0.0
    %2645 = vmatpush1.msra.mxu0 0.0
    %2646 = vmatprep.subr.mxu0 0.0
    %2647 = vmatpush1.msra.mxu0 0.0
    %2648 = vmatprep.subr.mxu0 0.0
    %2649 = vmatpush1.msra.mxu0 0.0
    %2650 = vmatprep.subr.mxu0 0.0
    %2651 = vmatpush1.msra.mxu0 0.0
    %2652 = vmatprep.subr.mxu0 0.0
    %2653 = vmatpush1.msra.mxu0 0.0
    %2654 = vmatprep.subr.mxu0 0.0
    %2655 = vmatpush1.msra.mxu0 0.0
    %2656 = vmatprep.subr.mxu0 0.0
    %2657 = vmatpush1.msra.mxu0 0.0
    %2658 = vmatprep.subr.mxu0 0.0
    %2659 = vmatpush1.msra.mxu0 0.0
    %2660 = vmatprep.subr.mxu0 0.0
    %2661 = vmatpush1.msra.mxu0 0.0
    %2662 = vmatprep.subr.mxu0 0.0
    %2663 = vmatpush1.msra.mxu0 0.0
    %2664 = vmatprep.subr.mxu0 0.0
    %2665 = vmatpush1.msra.mxu0 0.0
    %2666 = vmatprep.subr.mxu0 0.0
    %2667 = vmatpush1.msra.mxu0 0.0
    %2668 = vmatprep.subr.mxu0 0.0
    %2669 = vmatpush1.msra.mxu0 0.0
    %2670 = vmatprep.subr.mxu0 0.0
    %2671 = vmatpush1.msra.mxu0 0.0
    %2672 = vmatprep.subr.mxu0 0.0
    %2673 = vmatpush1.msra.mxu0 0.0
    %2674 = vmatprep.subr.mxu0 0.0
    %2675 = vmatpush1.msra.mxu0 0.0
    %2676 = vmatprep.subr.mxu0 0.0
    %2677 = vmatpush1.msra.mxu0 0.0
    %2678 = vmatprep.subr.mxu0 0.0
    %2679 = vmatpush1.msra.mxu0 0.0
    %2680 = vmatprep.subr.mxu0 0.0
    %2681 = vmatpush1.msra.mxu0 0.0
    %2682 = vmatprep.subr.mxu0 0.0
    %2683 = vmatpush1.msra.mxu0 0.0
    %2684 = vmatprep.mubr.f32.mxu0 0.0
    %2685 = vmatmul.mubr.f32.gmra.mrb[0].mxu0 %v2615
    %v2686 = vpop.f32.mrb[0].mxu0
    %v2687 = vadd.f32 %v2613, %v2686
    %v2688 = vpop.f32.mrb[0].mxu0
    %2689 = vmatprep.mubr.f32.mxu0 0.0
    %2690 = vmatmul.mubr.f32.gmra.mrb[0].mxu0 %v2618
    %v2691 = vpop.f32.mrb[0].mxu0
    %v2692 = vadd.f32 %v2613, %v2691
    %v2693 = vpop.f32.mrb[0].mxu0
    %2694 = vdwg.mxu0
    %v2695 = vadd.f32 %v2521, %v2687
    %v2696 = vadd.f32 %v2522, %v2692
    %v2697 = vsel %vm78, %v2695, 0.0
    %2698 = vadd.xlane.f32.xlu0 %v2697
    %v2699 = vpop.xlane.xlu0 %2698
    %v2700 = vsel %vm78, %v2696, 0.0
    %2701 = vadd.xlane.f32.xlu0 %v2700
    %v2702 = vpop.xlane.xlu0 %2701
    %v2703 = vmul.f32 %v2699, %v1143
    %v2704 = vmul.f32 %v2702, %v1143
    %v2705 = vsub.f32 %v2695, %v2703
    %v2706 = vsub.f32 %v2696, %v2704
    %v2707 = vmul.f32 %v2705, %v2705
    %v2708 = vmul.f32 %v2706, %v2706
    %v2709 = vsel %vm78, %v2707, 0.0
    %2710 = vadd.xlane.f32.xlu0 %v2709
    %v2711 = vpop.xlane.xlu0 %2710
    %v2712 = vsel %vm78, %v2708, 0.0
    %2713 = vadd.xlane.f32.xlu0 %v2712
    %v2714 = vpop.xlane.xlu0 %2713
    %v2715 = vmul.f32 %v2711, %v1143
    %v2716 = vmul.f32 %v2714, %v1143
    %v2717 = vadd.f32 %v2715, 1e-05
    %v2718 = vadd.f32 %v2716, 1e-05
    %v2719 = vrsqrt.pop %v2717
    %v2720 = vrsqrt.pop %v2718
    %v2721 = vmul.f32 %v2705, %v2719
    %v2722 = vmul.f32 %v2706, %v2720
    %v2723 = vlaneseq
    %v2724 = vshrl.u32 %v2723, 7
    %v2725 = vsub.s32 4, %v2724
    %v2726 = vrot.slane %v1398, %v2725
    %v2727 = vmul.f32 %v2721, %v2726
    %v2728 = vmul.f32 %v2722, %v2726
    %v2729 = vlaneseq
    %v2730 = vshrl.u32 %v2729, 7
    %v2731 = vsub.s32 5, %v2730
    %v2732 = vrot.slane %v1398, %v2731
    %v2733 = vadd.f32 %v2727, %v2732
    %v2734 = vadd.f32 %v2728, %v2732
    %v2735 = vld [vmem:[%s7] sm:$0xff]
    %v2736 = vld [vmem:[%s7 + $0x8] sm:$0xff]
    %v2737 = vld [vmem:[%s7 + $0x10] sm:$0xff]
    %v2738 = vld [vmem:[%s7 + $0x18] sm:$0xff]
    %v2739 = vld [vmem:[%s7 + $0x20] sm:$0x7]
    %v2740 = vld [vmem:[%s8] sm:$0xff]
    %v2741 = vld [vmem:[%s8 + $0x8] sm:$0xff]
    %v2742 = vld [vmem:[%s8 + $0x10] sm:$0xff]
    %v2743 = vld [vmem:[%s8 + $0x18] sm:$0xff]
    %v2744 = vld [vmem:[%s8 + $0x20] sm:$0x1]
    %v2746 = vrot.slane %v2734, 7
    %vm2748 = vcmask 1040384
    %v2749 = vsel %vm2748, %v2733, %v2746
    %vm2750 = vcmask 254976
    %v2751 = vsel %vm2750, %v2749, 0.0
    %2752 = vadd.xlane.f32.xlu0 %v2751
    %v2753 = vpop.xlane.xlu0 %2752
    %v2754 = vmul.f32 %v2753, %v1143
    %v2755 = vsub.f32 %v2749, %v2754
    %v2756 = vmul.f32 %v2755, %v2755
    %v2757 = vsel %vm2750, %v2756, 0.0
    %2758 = vadd.xlane.f32.xlu0 %v2757
    %v2759 = vpop.xlane.xlu0 %2758
    %v2760 = vmul.f32 %v2759, %v1143
    %v2761 = vadd.f32 %v2760, 1e-05
    %v2762 = vrsqrt.pop %v2761
    %v2763 = vmul.f32 %v2755, %v2762
    %v2764 = vlaneseq
    %v2765 = vshrl.u32 %v2764, 7
    %v2766 = vsub.s32 0, %v2765
    %v2767 = vrot.slane %v2739, %v2766
    %v2768 = vmul.f32 %v2763, %v2767
    %v2769 = vlaneseq
    %v2770 = vshrl.u32 %v2769, 7
    %v2771 = vsub.s32 1, %v2770
    %v2772 = vrot.slane %v2739, %v2771
    %v2773 = vadd.f32 %v2768, %v2772
    %v2774 = vlaneseq
    %v2775 = vshrl.u32 %v2774, 7
    %v2776 = vsub.s32 2, %v2775
    %v2777 = vrot.slane %v2739, %v2776
    %v2779 = vsel %vm78, %v2773, 0
    %2781 = vmatprep.subr.mxu0 0.0
    %2782 = vmatpush1.msra.mxu0 %v2735
    %2783 = vmatprep.subr.mxu0 0.0
    %2784 = vmatpush1.msra.mxu0 %v2736
    %2785 = vmatprep.subr.mxu0 0.0
    %2786 = vmatpush1.msra.mxu0 %v2737
    %2787 = vmatprep.subr.mxu0 0.0
    %2788 = vmatpush1.msra.mxu0 %v2738
    %2789 = vmatprep.subr.mxu0 0.0
    %2790 = vmatpush1.msra.mxu0 0.0
    %2791 = vmatprep.subr.mxu0 0.0
    %2792 = vmatpush1.msra.mxu0 0.0
    %2793 = vmatprep.subr.mxu0 0.0
    %2794 = vmatpush1.msra.mxu0 0.0
    %2795 = vmatprep.subr.mxu0 0.0
    %2796 = vmatpush1.msra.mxu0 0.0
    %2797 = vmatprep.subr.mxu0 0.0
    %2798 = vmatpush1.msra.mxu0 0.0
    %2799 = vmatprep.subr.mxu0 0.0
    %2800 = vmatpush1.msra.mxu0 0.0
    %2801 = vmatprep.subr.mxu0 0.0
    %2802 = vmatpush1.msra.mxu0 0.0
    %2803 = vmatprep.subr.mxu0 0.0
    %2804 = vmatpush1.msra.mxu0 0.0
    %2805 = vmatprep.subr.mxu0 0.0
    %2806 = vmatpush1.msra.mxu0 0.0
    %2807 = vmatprep.subr.mxu0 0.0
    %2808 = vmatpush1.msra.mxu0 0.0
    %2809 = vmatprep.subr.mxu0 0.0
    %2810 = vmatpush1.msra.mxu0 0.0
    %2811 = vmatprep.subr.mxu0 0.0
    %2812 = vmatpush1.msra.mxu0 0.0
    %2813 = vmatprep.subr.mxu0 0.0
    %2814 = vmatpush1.msra.mxu0 0.0
    %2815 = vmatprep.subr.mxu0 0.0
    %2816 = vmatpush1.msra.mxu0 0.0
    %2817 = vmatprep.subr.mxu0 0.0
    %2818 = vmatpush1.msra.mxu0 0.0
    %2819 = vmatprep.subr.mxu0 0.0
    %2820 = vmatpush1.msra.mxu0 0.0
    %2821 = vmatprep.subr.mxu0 0.0
    %2822 = vmatpush1.msra.mxu0 0.0
    %2823 = vmatprep.subr.mxu0 0.0
    %2824 = vmatpush1.msra.mxu0 0.0
    %2825 = vmatprep.subr.mxu0 0.0
    %2826 = vmatpush1.msra.mxu0 0.0
    %2827 = vmatprep.subr.mxu0 0.0
    %2828 = vmatpush1.msra.mxu0 0.0
    %2829 = vmatprep.subr.mxu0 0.0
    %2830 = vmatpush1.msra.mxu0 0.0
    %2831 = vmatprep.subr.mxu0 0.0
    %2832 = vmatpush1.msra.mxu0 0.0
    %2833 = vmatprep.subr.mxu0 0.0
    %2834 = vmatpush1.msra.mxu0 0.0
    %2835 = vmatprep.subr.mxu0 0.0
    %2836 = vmatpush1.msra.mxu0 0.0
    %2837 = vmatprep.subr.mxu0 0.0
    %2838 = vmatpush1.msra.mxu0 0.0
    %2839 = vmatprep.subr.mxu0 0.0
    %2840 = vmatpush1.msra.mxu0 0.0
    %2841 = vmatprep.subr.mxu0 0.0
    %2842 = vmatpush1.msra.mxu0 0.0
    %2843 = vmatprep.subr.mxu0 0.0
    %2844 = vmatpush1.msra.mxu0 0.0
    %2845 = vmatprep.mubr.f32.mxu0 0.0
    %2846 = vmatmul.mubr.f32.gmra.mrb[0].mxu0 %v2779
    %v2847 = vpop.f32.mrb[0].mxu0
    %v2848 = vadd.f32 %v2777, %v2847
    %v2849 = vpop.f32.mrb[0].mxu0
    %2850 = vdwg.mxu0
    %v2851 = vmax.f32 %v2848, 0.0
    %v2852 = vlaneseq
    %v2853 = vshrl.u32 %v2852, 7
    %v2854 = vsub.s32 0, %v2853
    %v2855 = vrot.slane %v2744, %v2854
    %v2857 = vsel %vm78, %v2851, 0
    %2859 = vmatprep.subr.mxu0 0.0
    %2860 = vmatpush1.msra.mxu0 %v2740
    %2861 = vmatprep.subr.mxu0 0.0
    %2862 = vmatpush1.msra.mxu0 %v2741
    %2863 = vmatprep.subr.mxu0 0.0
    %2864 = vmatpush1.msra.mxu0 %v2742
    %2865 = vmatprep.subr.mxu0 0.0
    %2866 = vmatpush1.msra.mxu0 %v2743
    %2867 = vmatprep.subr.mxu0 0.0
    %2868 = vmatpush1.msra.mxu0 0.0
    %2869 = vmatprep.subr.mxu0 0.0
    %2870 = vmatpush1.msra.mxu0 0.0
    %2871 = vmatprep.subr.mxu0 0.0
    %2872 = vmatpush1.msra.mxu0 0.0
    %2873 = vmatprep.subr.mxu0 0.0
    %2874 = vmatpush1.msra.mxu0 0.0
    %2875 = vmatprep.subr.mxu0 0.0
    %2876 = vmatpush1.msra.mxu0 0.0
    %2877 = vmatprep.subr.mxu0 0.0
    %2878 = vmatpush1.msra.mxu0 0.0
    %2879 = vmatprep.subr.mxu0 0.0
    %2880 = vmatpush1.msra.mxu0 0.0
    %2881 = vmatprep.subr.mxu0 0.0
    %2882 = vmatpush1.msra.mxu0 0.0
    %2883 = vmatprep.subr.mxu0 0.0
    %2884 = vmatpush1.msra.mxu0 0.0
    %2885 = vmatprep.subr.mxu0 0.0
    %2886 = vmatpush1.msra.mxu0 0.0
    %2887 = vmatprep.subr.mxu0 0.0
    %2888 = vmatpush1.msra.mxu0 0.0
    %2889 = vmatprep.subr.mxu0 0.0
    %2890 = vmatpush1.msra.mxu0 0.0
    %2891 = vmatprep.subr.mxu0 0.0
    %2892 = vmatpush1.msra.mxu0 0.0
    %2893 = vmatprep.subr.mxu0 0.0
    %2894 = vmatpush1.msra.mxu0 0.0
    %2895 = vmatprep.subr.mxu0 0.0
    %2896 = vmatpush1.msra.mxu0 0.0
    %2897 = vmatprep.subr.mxu0 0.0
    %2898 = vmatpush1.msra.mxu0 0.0
    %2899 = vmatprep.subr.mxu0 0.0
    %2900 = vmatpush1.msra.mxu0 0.0
    %2901 = vmatprep.subr.mxu0 0.0
    %2902 = vmatpush1.msra.mxu0 0.0
    %2903 = vmatprep.subr.mxu0 0.0
    %2904 = vmatpush1.msra.mxu0 0.0
    %2905 = vmatprep.subr.mxu0 0.0
    %2906 = vmatpush1.msra.mxu0 0.0
    %2907 = vmatprep.subr.mxu0 0.0
    %2908 = vmatpush1.msra.mxu0 0.0
    %2909 = vmatprep.subr.mxu0 0.0
    %2910 = vmatpush1.msra.mxu0 0.0
    %2911 = vmatprep.subr.mxu0 0.0
    %2912 = vmatpush1.msra.mxu0 0.0
    %2913 = vmatprep.subr.mxu0 0.0
    %2914 = vmatpush1.msra.mxu0 0.0
    %2915 = vmatprep.subr.mxu0 0.0
    %2916 = vmatpush1.msra.mxu0 0.0
    %2917 = vmatprep.subr.mxu0 0.0
    %2918 = vmatpush1.msra.mxu0 0.0
    %2919 = vmatprep.subr.mxu0 0.0
    %2920 = vmatpush1.msra.mxu0 0.0
    %2921 = vmatprep.subr.mxu0 0.0
    %2922 = vmatpush1.msra.mxu0 0.0
    %2923 = vmatprep.mubr.f32.mxu0 0.0
    %2924 = vmatmul.mubr.f32.gmra.mrb[0].mxu0 %v2857
    %v2925 = vpop.f32.mrb[0].mxu0
    %v2926 = vadd.f32 %v2855, %v2925
    %v2927 = vpop.f32.mrb[0].mxu0
    %2928 = vdwg.mxu0
    %2929 = vst [vmem:[#allocation2] sm:$0x3] %v2926
    // Predicated region
    $region38: #{transformer_classifier_forward.1} parent=1 // pred_check
      _
    $region39: #{transformer_classifier_forward.1} parent=1 // pred_check_branch
      %2931 = sbr.rel (0) target = $region41
    $region40: #{transformer_classifier_forward.1} parent=1 // pred_region
      %s2933 = ssub.s32 32, 32
      %2934 = vsyncadd [#allocation3], %s2933
      %s2936 = sshll.u32 [#allocation2], 4
      %s2937 = int_to_ptr.vmem [resolvable:$true] %s2936
      %2939 = dma.vmem_to_hbm [thread:$0]  %s2937, 32, %s9, [#allocation3]
    $region41: #{transformer_classifier_forward.1} parent=1 // pred_fallthru
      _
    // Predicated region
    $region42: #{transformer_classifier_forward.1} parent=1 // pred_check
      _
    $region43: #{transformer_classifier_forward.1} parent=1 // pred_check_branch
      %2941 = sbr.rel (0) target = $region45
    $region44: #{transformer_classifier_forward.1} parent=1 // pred_region
      %2942 = dma.done [#allocation3], 32
    $region45: #{transformer_classifier_forward.1} parent=1 // pred_fallthru
      _
    %2943 = vsyncpa [#allocation3], 1

</llo_original>
